<compile_context>
chip_gen: v7x
topology: tpu7x:2x2x1
jax: 0.10.0
libtpu: 0.0.40
codegen_flags: <defaults>
</compile_context>

<pallas_src>
import math
import numpy as np
import jax
import jax.numpy as jnp
from jax import lax
from jax.experimental import pallas as pl
from jax.experimental.pallas import tpu as pltpu

D_MODEL = 51
SEQ_LEN = 10
EMBED_DIM = 51
NUM_HEADS = 3
HEAD_DIM = EMBED_DIM // NUM_HEADS   # 17
FLAT = SEQ_LEN * EMBED_DIM          # 510
EPS = 1e-5
BATCH = 2


# ----------------------------------------------------------------------------
# Fused forward kernel: whole batch, whole model, one invocation.
# ----------------------------------------------------------------------------
def _transformer_kernel(xs_ref, pe_ref, bias_ref, hmask_ref, avg_ref,
                        wq_ref, wk_ref, wv_ref, bq_ref, bk_ref, bv_ref,
                        wo_ref, bo_ref, w1_ref, b1_ref,
                        wf_ref, bf_ref, w2_ref, b2_ref,
                        out_ref, ns_ref, flat_ref):
    f32 = jnp.float32
    n_rows = xs_ref.shape[0]            # B * S (static)
    bsz = n_rows // SEQ_LEN

    xs = xs_ref[...]                                        # (B*S, E) original input
    # PositionalEncoder: x * sqrt(d_model) + pe
    px = xs * f32(math.sqrt(D_MODEL)) + pe_ref[...]

    # Q/K/V projections for the whole stacked batch: 3 matmuls of (B*S,51)@(51,51)
    q_all = jnp.dot(px, wq_ref[...], preferred_element_type=f32) + bq_ref[...]
    k_all = jnp.dot(px, wk_ref[...], preferred_element_type=f32) + bk_ref[...]
    v_all = jnp.dot(px, wv_ref[...], preferred_element_type=f32) + bv_ref[...]

    scale = f32(1.0 / math.sqrt(HEAD_DIM))
    bias = bias_ref[...]                                     # (B*S, B*S): 0 same-batch, -1e30 cross-batch
    attn_cat = jnp.zeros((n_rows, EMBED_DIM), f32)           # concatenated per-head outputs

    for h in range(NUM_HEADS):                               # static, tiny loop
        hm = hmask_ref[h]                                    # (1, E) 0/1 mask of this head's columns
        qh = q_all * hm * scale                              # zero non-head columns -> q_h . k_h
        s = lax.dot_general(qh, k_all, (((1,), (1,)), ((), ())),
                            preferred_element_type=f32)      # (B*S, B*S)
        s = s + bias                                         # block-diagonal batch mask
        s = s - jnp.max(s, axis=-1, keepdims=True)
        p = jnp.exp(s)
        p = p * pl.reciprocal(jnp.sum(p, axis=-1, keepdims=True), approx=True)
        # (p @ V) has head-h columns equal to attn_h @ v_h; keep only those.
        attn_cat = attn_cat + jnp.dot(p, v_all, preferred_element_type=f32) * hm

    # MHA output projection + bias
    attn_out = jnp.dot(attn_cat, wo_ref[...], preferred_element_type=f32) + bo_ref[...]

    # norm1 = LayerNorm((S, E)): per-sample stats over all S*E elements.
    # avg_ref is the (B*S, B*S) block matrix with 1/(S*E) in same-batch blocks,
    # so one tiny matmul both reduces per sample and broadcasts back to rows.
    y = xs + attn_out                                        # residual uses the ORIGINAL x
    rowsum = jnp.sum(y, axis=-1, keepdims=True)              # (B*S, 1)
    mu = jnp.dot(avg_ref[...], rowsum, preferred_element_type=f32)
    c = y - mu
    sqsum = jnp.sum(c * c, axis=-1, keepdims=True)
    var = jnp.dot(avg_ref[...], sqsum, preferred_element_type=f32)
    normed = c * lax.rsqrt(var + f32(EPS)) * w1_ref[...] + b1_ref[...]   # (B*S, E)

    # torch.flatten(start_dim=1): scatter each (1, E) row into its lane slot of (B, S*E)
    ns_ref[...] = normed
    for b in range(bsz):
        for s_i in range(SEQ_LEN):
            r = b * SEQ_LEN + s_i
            flat_ref[b:b + 1, s_i * EMBED_DIM:(s_i + 1) * EMBED_DIM] = ns_ref[r:r + 1, :]

    # Linear(510, 510) + residual + LayerNorm(510), all lane-dense (B, 510).
    flat = flat_ref[...]
    lin = jnp.dot(flat, wf_ref[...], preferred_element_type=f32) + bf_ref[...]
    added = lin + flat
    mu2 = jnp.mean(added, axis=-1, keepdims=True)
    var2 = jnp.mean((added - mu2) ** 2, axis=-1, keepdims=True)
    out_ref[...] = (added - mu2) * lax.rsqrt(var2 + f32(EPS)) * w2_ref[...] + b2_ref[...]


# ----------------------------------------------------------------------------
# Parameter / constant setup (deterministic, synthetic weights).
# ----------------------------------------------------------------------------
def make_pe():
    # Matches the PositionalEncoder loop exactly (odd d_model: last column stays 0).
    pe = np.zeros((SEQ_LEN, D_MODEL), dtype=np.float32)
    for pos in range(SEQ_LEN):
        for i in range(0, D_MODEL - 1, 2):
            pe[pos, i] = math.sin(pos / 10000 ** (2 * i / D_MODEL))
            pe[pos, i + 1] = math.cos(pos / 10000 ** (2 * (i + 1) / D_MODEL))
    return jnp.asarray(pe)                                   # (S, E)


def init_params(key, batch=BATCH):
    ks = jax.random.split(key, 6)

    def rnd(k, shape, s):
        return jax.random.normal(k, shape, jnp.float32) * jnp.float32(s)

    in_proj_w = rnd(ks[0], (3 * EMBED_DIM, EMBED_DIM), 0.1)   # MHA in_proj_weight
    in_proj_b = rnd(ks[1], (3 * EMBED_DIM,), 0.1)             # MHA in_proj_bias
    out_proj_w = rnd(ks[2], (EMBED_DIM, EMBED_DIM), 0.1)      # MHA out_proj.weight
    out_proj_b = rnd(ks[3], (EMBED_DIM,), 0.1)                # MHA out_proj.bias
    fwd_w = rnd(ks[4], (FLAT, FLAT), 0.05)                    # Linear(510,510) weight
    fwd_b = rnd(ks[5], (FLAT,), 0.1)                          # Linear bias

    wq, wk, wv = (in_proj_w[:EMBED_DIM],
                  in_proj_w[EMBED_DIM:2 * EMBED_DIM],
                  in_proj_w[2 * EMBED_DIM:])
    bq, bk, bv = (in_proj_b[:EMBED_DIM],
                  in_proj_b[EMBED_DIM:2 * EMBED_DIM],
                  in_proj_b[2 * EMBED_DIM:])

    # host-side constants driving the stacked-batch attention / norm1
    rows = np.arange(batch * SEQ_LEN) // SEQ_LEN
    same = rows[:, None] == rows[None, :]
    attn_bias = np.where(same, 0.0, -1e30).astype(np.float32)          # (B*S, B*S)
    avg_mat = (same.astype(np.float32) / float(SEQ_LEN * EMBED_DIM))   # (B*S, B*S)
    lane = np.arange(EMBED_DIM)
    hmask = np.stack([((lane >= h * HEAD_DIM) & (lane < (h + 1) * HEAD_DIM))
                      .astype(np.float32)[None, :] for h in range(NUM_HEADS)])  # (H, 1, E)

    norm1_w = jnp.ones((SEQ_LEN, EMBED_DIM), jnp.float32)     # LayerNorm defaults
    norm1_b = jnp.zeros((SEQ_LEN, EMBED_DIM), jnp.float32)

    return dict(
        pe_s=jnp.tile(make_pe(), (batch, 1)),                 # (B*S, E)
        attn_bias=jnp.asarray(attn_bias),
        hmask=jnp.asarray(hmask),
        avg_mat=jnp.asarray(avg_mat),
        wq_t=wq.T, wk_t=wk.T, wv_t=wv.T,                      # (E, E) so q = px @ wq_t + bq
        bq=bq.reshape(1, EMBED_DIM),
        bk=bk.reshape(1, EMBED_DIM),
        bv=bv.reshape(1, EMBED_DIM),
        wo_t=out_proj_w.T, bo=out_proj_b.reshape(1, EMBED_DIM),
        w1s=jnp.tile(norm1_w, (batch, 1)),                    # (B*S, E)
        b1s=jnp.tile(norm1_b, (batch, 1)),
        wf_t=fwd_w.T,                                         # (510, 510): lin = flat @ wf_t + bf
        bf=fwd_b.reshape(1, FLAT),
        w2=jnp.ones((1, FLAT), jnp.float32),
        b2=jnp.zeros((1, FLAT), jnp.float32),
    )


# ----------------------------------------------------------------------------
# Wrapper: one fused pallas_call, everything resident in VMEM.
# ----------------------------------------------------------------------------
def transformer_forward(x, p):
    bsz = x.shape[0]
    xs = x.reshape(bsz * SEQ_LEN, EMBED_DIM)   # trivial row-major input stacking

    args = (xs, p["pe_s"], p["attn_bias"], p["hmask"], p["avg_mat"],
            p["wq_t"], p["wk_t"], p["wv_t"], p["bq"], p["bk"], p["bv"],
            p["wo_t"], p["bo"], p["w1s"], p["b1s"],
            p["wf_t"], p["bf"], p["w2"], p["b2"])

    vmem = lambda: pl.BlockSpec(memory_space=pltpu.MemorySpace.VMEM)
    return pl.pallas_call(
        _transformer_kernel,
        out_shape=jax.ShapeDtypeStruct((bsz, FLAT), jnp.float32),
        in_specs=[vmem() for _ in args],
        out_specs=vmem(),
        scratch_shapes=[
            pltpu.VMEM((bsz * SEQ_LEN, EMBED_DIM), jnp.float32),  # normed (stacked)
            pltpu.VMEM((bsz, FLAT), jnp.float32),                 # flattened normed
        ],
    )(*args)


if __name__ == "__main__":
    key = jax.random.PRNGKey(0)
    pkey, xkey = jax.random.split(key)
    params = init_params(pkey, BATCH)
    x = jax.random.normal(xkey, (BATCH, SEQ_LEN, D_MODEL), jnp.float32)

    fwd = jax.jit(transformer_forward)
    out = jax.block_until_ready(fwd(x, params))
    assert out.shape == (BATCH, FLAT) and out.dtype == jnp.float32
    assert bool(jnp.all(jnp.isfinite(out)))
    print("KERNEL_OK")
</pallas_src>

<mosaic_0001>
module attributes {stable_mosaic.version = 11 : i64} {
  func.func @_transformer_kernel(%arg0: memref<20x51xf32, #tpu.memory_space<vmem>>, %arg1: memref<20x51xf32, #tpu.memory_space<vmem>>, %arg2: memref<20x20xf32, #tpu.memory_space<vmem>>, %arg3: memref<3x1x51xf32, #tpu.memory_space<vmem>>, %arg4: memref<20x20xf32, #tpu.memory_space<vmem>>, %arg5: memref<51x51xf32, #tpu.memory_space<vmem>>, %arg6: memref<51x51xf32, #tpu.memory_space<vmem>>, %arg7: memref<51x51xf32, #tpu.memory_space<vmem>>, %arg8: memref<1x51xf32, #tpu.memory_space<vmem>>, %arg9: memref<1x51xf32, #tpu.memory_space<vmem>>, %arg10: memref<1x51xf32, #tpu.memory_space<vmem>>, %arg11: memref<51x51xf32, #tpu.memory_space<vmem>>, %arg12: memref<1x51xf32, #tpu.memory_space<vmem>>, %arg13: memref<20x51xf32, #tpu.memory_space<vmem>>, %arg14: memref<20x51xf32, #tpu.memory_space<vmem>>, %arg15: memref<510x510xf32, #tpu.memory_space<vmem>>, %arg16: memref<1x510xf32, #tpu.memory_space<vmem>>, %arg17: memref<1x510xf32, #tpu.memory_space<vmem>>, %arg18: memref<1x510xf32, #tpu.memory_space<vmem>>, %arg19: memref<2x510xf32, #tpu.memory_space<vmem>>, %arg20: memref<20x51xf32, #tpu.memory_space<vmem>>, %arg21: memref<2x510xf32, #tpu.memory_space<vmem>>) attributes {dimension_semantics = [], scalar_prefetch = 0 : i64, scratch_operands = 2 : i64, tpu.core_type = #tpu.core_type<tc>} {
    %c0 = arith.constant 0 : index
    %c0_0 = arith.constant 0 : index
    %0 = vector.load %arg0[%c0, %c0_0] : memref<20x51xf32, #tpu.memory_space<vmem>>, vector<20x51xf32>
    %cst = arith.constant 7.14142847 : f32
    %1 = vector.broadcast %cst : f32 to vector<20x51xf32>
    %2 = arith.mulf %0, %1 : vector<20x51xf32>
    %c0_1 = arith.constant 0 : index
    %c0_2 = arith.constant 0 : index
    %3 = vector.load %arg1[%c0_1, %c0_2] : memref<20x51xf32, #tpu.memory_space<vmem>>, vector<20x51xf32>
    %4 = arith.addf %2, %3 : vector<20x51xf32>
    %c0_3 = arith.constant 0 : index
    %c0_4 = arith.constant 0 : index
    %5 = vector.load %arg5[%c0_3, %c0_4] : memref<51x51xf32, #tpu.memory_space<vmem>>, vector<51x51xf32>
    %cst_5 = arith.constant dense<0.000000e+00> : vector<20x51xf32>
    %6 = tpu.matmul %4, %5, %cst_5 {dimension_numbers = #tpu.dot_dimension_numbers<[1], [0], [0], [1], [0, 0, 1, 1], [], []>} : vector<20x51xf32>, vector<51x51xf32>, vector<20x51xf32> -> vector<20x51xf32>
    %c0_6 = arith.constant 0 : index
    %c0_7 = arith.constant 0 : index
    %7 = vector.load %arg8[%c0_6, %c0_7] : memref<1x51xf32, #tpu.memory_space<vmem>>, vector<1x51xf32>
    %8 = vector.broadcast %7 : vector<1x51xf32> to vector<20x51xf32>
    %9 = arith.addf %6, %8 : vector<20x51xf32>
    %c0_8 = arith.constant 0 : index
    %c0_9 = arith.constant 0 : index
    %10 = vector.load %arg6[%c0_8, %c0_9] : memref<51x51xf32, #tpu.memory_space<vmem>>, vector<51x51xf32>
    %cst_10 = arith.constant dense<0.000000e+00> : vector<20x51xf32>
    %11 = tpu.matmul %4, %10, %cst_10 {dimension_numbers = #tpu.dot_dimension_numbers<[1], [0], [0], [1], [0, 0, 1, 1], [], []>} : vector<20x51xf32>, vector<51x51xf32>, vector<20x51xf32> -> vector<20x51xf32>
    %c0_11 = arith.constant 0 : index
    %c0_12 = arith.constant 0 : index
    %12 = vector.load %arg9[%c0_11, %c0_12] : memref<1x51xf32, #tpu.memory_space<vmem>>, vector<1x51xf32>
    %13 = vector.broadcast %12 : vector<1x51xf32> to vector<20x51xf32>
    %14 = arith.addf %11, %13 : vector<20x51xf32>
    %c0_13 = arith.constant 0 : index
    %c0_14 = arith.constant 0 : index
    %15 = vector.load %arg7[%c0_13, %c0_14] : memref<51x51xf32, #tpu.memory_space<vmem>>, vector<51x51xf32>
    %cst_15 = arith.constant dense<0.000000e+00> : vector<20x51xf32>
    %16 = tpu.matmul %4, %15, %cst_15 {dimension_numbers = #tpu.dot_dimension_numbers<[1], [0], [0], [1], [0, 0, 1, 1], [], []>} : vector<20x51xf32>, vector<51x51xf32>, vector<20x51xf32> -> vector<20x51xf32>
    %c0_16 = arith.constant 0 : index
    %c0_17 = arith.constant 0 : index
    %17 = vector.load %arg10[%c0_16, %c0_17] : memref<1x51xf32, #tpu.memory_space<vmem>>, vector<1x51xf32>
    %18 = vector.broadcast %17 : vector<1x51xf32> to vector<20x51xf32>
    %19 = arith.addf %16, %18 : vector<20x51xf32>
    %c0_18 = arith.constant 0 : index
    %c0_19 = arith.constant 0 : index
    %20 = vector.load %arg2[%c0_18, %c0_19] : memref<20x20xf32, #tpu.memory_space<vmem>>, vector<20x20xf32>
    %cst_20 = arith.constant 0.000000e+00 : f32
    %21 = vector.broadcast %cst_20 : f32 to vector<20x51xf32>
    %c0_21 = arith.constant 0 : index
    %c0_22 = arith.constant 0 : index
    %c0_23 = arith.constant 0 : index
    %22 = vector.load %arg3[%c0_21, %c0_22, %c0_23] : memref<3x1x51xf32, #tpu.memory_space<vmem>>, vector<1x1x51xf32>
    %23 = vector.shape_cast %22 : vector<1x1x51xf32> to vector<1x51xf32>
    %24 = vector.broadcast %23 : vector<1x51xf32> to vector<20x51xf32>
    %25 = arith.mulf %9, %24 : vector<20x51xf32>
    %cst_24 = arith.constant 0.242535621 : f32
    %26 = vector.broadcast %cst_24 : f32 to vector<20x51xf32>
    %27 = arith.mulf %25, %26 : vector<20x51xf32>
    %cst_25 = arith.constant dense<0.000000e+00> : vector<20x20xf32>
    %28 = tpu.matmul %27, %14, %cst_25 {dimension_numbers = #tpu.dot_dimension_numbers<[1], [1], [0], [0], [0, 0, 1, 0], [], []>} : vector<20x51xf32>, vector<20x51xf32>, vector<20x20xf32> -> vector<20x20xf32>
    %29 = arith.addf %28, %20 : vector<20x20xf32>
    %cst_26 = arith.constant dense<0xFF800000> : vector<20xf32>
    %30 = vector.multi_reduction <maximumf>, %29, %cst_26 [1] : vector<20x20xf32> to vector<20xf32>
    %31 = vector.shape_cast %30 : vector<20xf32> to vector<20x1xf32>
    %32 = vector.broadcast %31 : vector<20x1xf32> to vector<20x20xf32>
    %33 = arith.subf %29, %32 : vector<20x20xf32>
    %34 = math.exp %33 : vector<20x20xf32>
    %cst_27 = arith.constant dense<0.000000e+00> : vector<20xf32>
    %35 = vector.multi_reduction <add>, %34, %cst_27 [1] : vector<20x20xf32> to vector<20xf32>
    %36 = vector.shape_cast %35 : vector<20xf32> to vector<20x1xf32>
    %37 = tpu.reciprocal %36 {approx = true} : vector<20x1xf32> -> vector<20x1xf32>
    %38 = vector.broadcast %37 : vector<20x1xf32> to vector<20x20xf32>
    %39 = arith.mulf %34, %38 : vector<20x20xf32>
    %cst_28 = arith.constant dense<0.000000e+00> : vector<20x51xf32>
    %40 = tpu.matmul %39, %19, %cst_28 {dimension_numbers = #tpu.dot_dimension_numbers<[1], [0], [0], [1], [0, 0, 1, 1], [], []>} : vector<20x20xf32>, vector<20x51xf32>, vector<20x51xf32> -> vector<20x51xf32>
    %41 = vector.broadcast %23 : vector<1x51xf32> to vector<20x51xf32>
    %42 = arith.mulf %40, %41 : vector<20x51xf32>
    %43 = arith.addf %21, %42 : vector<20x51xf32>
    %c1 = arith.constant 1 : index
    %c0_29 = arith.constant 0 : index
    %c0_30 = arith.constant 0 : index
    %44 = vector.load %arg3[%c1, %c0_29, %c0_30] : memref<3x1x51xf32, #tpu.memory_space<vmem>>, vector<1x1x51xf32>
    %45 = vector.shape_cast %44 : vector<1x1x51xf32> to vector<1x51xf32>
    %46 = vector.broadcast %45 : vector<1x51xf32> to vector<20x51xf32>
    %47 = arith.mulf %9, %46 : vector<20x51xf32>
    %cst_31 = arith.constant 0.242535621 : f32
    %48 = vector.broadcast %cst_31 : f32 to vector<20x51xf32>
    %49 = arith.mulf %47, %48 : vector<20x51xf32>
    %cst_32 = arith.constant dense<0.000000e+00> : vector<20x20xf32>
    %50 = tpu.matmul %49, %14, %cst_32 {dimension_numbers = #tpu.dot_dimension_numbers<[1], [1], [0], [0], [0, 0, 1, 0], [], []>} : vector<20x51xf32>, vector<20x51xf32>, vector<20x20xf32> -> vector<20x20xf32>
    %51 = arith.addf %50, %20 : vector<20x20xf32>
    %cst_33 = arith.constant dense<0xFF800000> : vector<20xf32>
    %52 = vector.multi_reduction <maximumf>, %51, %cst_33 [1] : vector<20x20xf32> to vector<20xf32>
    %53 = vector.shape_cast %52 : vector<20xf32> to vector<20x1xf32>
    %54 = vector.broadcast %53 : vector<20x1xf32> to vector<20x20xf32>
    %55 = arith.subf %51, %54 : vector<20x20xf32>
    %56 = math.exp %55 : vector<20x20xf32>
    %cst_34 = arith.constant dense<0.000000e+00> : vector<20xf32>
    %57 = vector.multi_reduction <add>, %56, %cst_34 [1] : vector<20x20xf32> to vector<20xf32>
    %58 = vector.shape_cast %57 : vector<20xf32> to vector<20x1xf32>
    %59 = tpu.reciprocal %58 {approx = true} : vector<20x1xf32> -> vector<20x1xf32>
    %60 = vector.broadcast %59 : vector<20x1xf32> to vector<20x20xf32>
    %61 = arith.mulf %56, %60 : vector<20x20xf32>
    %cst_35 = arith.constant dense<0.000000e+00> : vector<20x51xf32>
    %62 = tpu.matmul %61, %19, %cst_35 {dimension_numbers = #tpu.dot_dimension_numbers<[1], [0], [0], [1], [0, 0, 1, 1], [], []>} : vector<20x20xf32>, vector<20x51xf32>, vector<20x51xf32> -> vector<20x51xf32>
    %63 = vector.broadcast %45 : vector<1x51xf32> to vector<20x51xf32>
    %64 = arith.mulf %62, %63 : vector<20x51xf32>
    %65 = arith.addf %43, %64 : vector<20x51xf32>
    %c2 = arith.constant 2 : index
    %c0_36 = arith.constant 0 : index
    %c0_37 = arith.constant 0 : index
    %66 = vector.load %arg3[%c2, %c0_36, %c0_37] : memref<3x1x51xf32, #tpu.memory_space<vmem>>, vector<1x1x51xf32>
    %67 = vector.shape_cast %66 : vector<1x1x51xf32> to vector<1x51xf32>
    %68 = vector.broadcast %67 : vector<1x51xf32> to vector<20x51xf32>
    %69 = arith.mulf %9, %68 : vector<20x51xf32>
    %cst_38 = arith.constant 0.242535621 : f32
    %70 = vector.broadcast %cst_38 : f32 to vector<20x51xf32>
    %71 = arith.mulf %69, %70 : vector<20x51xf32>
    %cst_39 = arith.constant dense<0.000000e+00> : vector<20x20xf32>
    %72 = tpu.matmul %71, %14, %cst_39 {dimension_numbers = #tpu.dot_dimension_numbers<[1], [1], [0], [0], [0, 0, 1, 0], [], []>} : vector<20x51xf32>, vector<20x51xf32>, vector<20x20xf32> -> vector<20x20xf32>
    %73 = arith.addf %72, %20 : vector<20x20xf32>
    %cst_40 = arith.constant dense<0xFF800000> : vector<20xf32>
    %74 = vector.multi_reduction <maximumf>, %73, %cst_40 [1] : vector<20x20xf32> to vector<20xf32>
    %75 = vector.shape_cast %74 : vector<20xf32> to vector<20x1xf32>
    %76 = vector.broadcast %75 : vector<20x1xf32> to vector<20x20xf32>
    %77 = arith.subf %73, %76 : vector<20x20xf32>
    %78 = math.exp %77 : vector<20x20xf32>
    %cst_41 = arith.constant dense<0.000000e+00> : vector<20xf32>
    %79 = vector.multi_reduction <add>, %78, %cst_41 [1] : vector<20x20xf32> to vector<20xf32>
    %80 = vector.shape_cast %79 : vector<20xf32> to vector<20x1xf32>
    %81 = tpu.reciprocal %80 {approx = true} : vector<20x1xf32> -> vector<20x1xf32>
    %82 = vector.broadcast %81 : vector<20x1xf32> to vector<20x20xf32>
    %83 = arith.mulf %78, %82 : vector<20x20xf32>
    %cst_42 = arith.constant dense<0.000000e+00> : vector<20x51xf32>
    %84 = tpu.matmul %83, %19, %cst_42 {dimension_numbers = #tpu.dot_dimension_numbers<[1], [0], [0], [1], [0, 0, 1, 1], [], []>} : vector<20x20xf32>, vector<20x51xf32>, vector<20x51xf32> -> vector<20x51xf32>
    %85 = vector.broadcast %67 : vector<1x51xf32> to vector<20x51xf32>
    %86 = arith.mulf %84, %85 : vector<20x51xf32>
    %87 = arith.addf %65, %86 : vector<20x51xf32>
    %c0_43 = arith.constant 0 : index
    %c0_44 = arith.constant 0 : index
    %88 = vector.load %arg11[%c0_43, %c0_44] : memref<51x51xf32, #tpu.memory_space<vmem>>, vector<51x51xf32>
    %cst_45 = arith.constant dense<0.000000e+00> : vector<20x51xf32>
    %89 = tpu.matmul %87, %88, %cst_45 {dimension_numbers = #tpu.dot_dimension_numbers<[1], [0], [0], [1], [0, 0, 1, 1], [], []>} : vector<20x51xf32>, vector<51x51xf32>, vector<20x51xf32> -> vector<20x51xf32>
    %c0_46 = arith.constant 0 : index
    %c0_47 = arith.constant 0 : index
    %90 = vector.load %arg12[%c0_46, %c0_47] : memref<1x51xf32, #tpu.memory_space<vmem>>, vector<1x51xf32>
    %91 = vector.broadcast %90 : vector<1x51xf32> to vector<20x51xf32>
    %92 = arith.addf %89, %91 : vector<20x51xf32>
    %93 = arith.addf %0, %92 : vector<20x51xf32>
    %cst_48 = arith.constant dense<0.000000e+00> : vector<20xf32>
    %94 = vector.multi_reduction <add>, %93, %cst_48 [1] : vector<20x51xf32> to vector<20xf32>
    %95 = vector.shape_cast %94 : vector<20xf32> to vector<20x1xf32>
    %c0_49 = arith.constant 0 : index
    %c0_50 = arith.constant 0 : index
    %96 = vector.load %arg4[%c0_49, %c0_50] : memref<20x20xf32, #tpu.memory_space<vmem>>, vector<20x20xf32>
    %cst_51 = arith.constant dense<0.000000e+00> : vector<20x1xf32>
    %97 = tpu.matmul %96, %95, %cst_51 {dimension_numbers = #tpu.dot_dimension_numbers<[1], [0], [0], [1], [0, 0, 1, 1], [], []>} : vector<20x20xf32>, vector<20x1xf32>, vector<20x1xf32> -> vector<20x1xf32>
    %98 = vector.broadcast %97 : vector<20x1xf32> to vector<20x51xf32>
    %99 = arith.subf %93, %98 : vector<20x51xf32>
    %100 = arith.mulf %99, %99 : vector<20x51xf32>
    %cst_52 = arith.constant dense<0.000000e+00> : vector<20xf32>
    %101 = vector.multi_reduction <add>, %100, %cst_52 [1] : vector<20x51xf32> to vector<20xf32>
    %102 = vector.shape_cast %101 : vector<20xf32> to vector<20x1xf32>
    %c0_53 = arith.constant 0 : index
    %c0_54 = arith.constant 0 : index
    %103 = vector.load %arg4[%c0_53, %c0_54] : memref<20x20xf32, #tpu.memory_space<vmem>>, vector<20x20xf32>
    %cst_55 = arith.constant dense<0.000000e+00> : vector<20x1xf32>
    %104 = tpu.matmul %103, %102, %cst_55 {dimension_numbers = #tpu.dot_dimension_numbers<[1], [0], [0], [1], [0, 0, 1, 1], [], []>} : vector<20x20xf32>, vector<20x1xf32>, vector<20x1xf32> -> vector<20x1xf32>
    %cst_56 = arith.constant 9.99999974E-6 : f32
    %105 = vector.broadcast %cst_56 : f32 to vector<20x1xf32>
    %106 = arith.addf %104, %105 : vector<20x1xf32>
    %107 = math.rsqrt %106 : vector<20x1xf32>
    %108 = vector.broadcast %107 : vector<20x1xf32> to vector<20x51xf32>
    %109 = arith.mulf %99, %108 : vector<20x51xf32>
    %c0_57 = arith.constant 0 : index
    %c0_58 = arith.constant 0 : index
    %110 = vector.load %arg13[%c0_57, %c0_58] : memref<20x51xf32, #tpu.memory_space<vmem>>, vector<20x51xf32>
    %111 = arith.mulf %109, %110 : vector<20x51xf32>
    %c0_59 = arith.constant 0 : index
    %c0_60 = arith.constant 0 : index
    %112 = vector.load %arg14[%c0_59, %c0_60] : memref<20x51xf32, #tpu.memory_space<vmem>>, vector<20x51xf32>
    %113 = arith.addf %111, %112 : vector<20x51xf32>
    %c0_61 = arith.constant 0 : index
    %c0_62 = arith.constant 0 : index
    %114 = vector.load %arg20[%c0_61, %c0_62] : memref<20x51xf32, #tpu.memory_space<vmem>>, vector<20x51xf32>
    tpu.vector_store %arg20[%c0_61, %c0_62], %113 {strides = array<i32>} : memref<20x51xf32, #tpu.memory_space<vmem>>, vector<20x51xf32>,
    %c0_63 = arith.constant 0 : index
    %c0_64 = arith.constant 0 : index
    %115 = vector.load %arg20[%c0_63, %c0_64] : memref<20x51xf32, #tpu.memory_space<vmem>>, vector<1x51xf32>
    %c0_65 = arith.constant 0 : index
    %c0_66 = arith.constant 0 : index
    %116 = vector.load %arg21[%c0_65, %c0_66] : memref<2x510xf32, #tpu.memory_space<vmem>>, vector<1x51xf32>
    tpu.vector_store %arg21[%c0_65, %c0_66], %115 {strides = array<i32>} : memref<2x510xf32, #tpu.memory_space<vmem>>, vector<1x51xf32>,
    %c1_67 = arith.constant 1 : index
    %c0_68 = arith.constant 0 : index
    %117 = vector.load %arg20[%c1_67, %c0_68] : memref<20x51xf32, #tpu.memory_space<vmem>>, vector<1x51xf32>
    %c0_69 = arith.constant 0 : index
    %c51 = arith.constant 51 : index
    %118 = vector.load %arg21[%c0_69, %c51] : memref<2x510xf32, #tpu.memory_space<vmem>>, vector<1x51xf32>
    tpu.vector_store %arg21[%c0_69, %c51], %117 {strides = array<i32>} : memref<2x510xf32, #tpu.memory_space<vmem>>, vector<1x51xf32>,
    %c2_70 = arith.constant 2 : index
    %c0_71 = arith.constant 0 : index
    %119 = vector.load %arg20[%c2_70, %c0_71] : memref<20x51xf32, #tpu.memory_space<vmem>>, vector<1x51xf32>
    %c0_72 = arith.constant 0 : index
    %c102 = arith.constant 102 : index
    %120 = vector.load %arg21[%c0_72, %c102] : memref<2x510xf32, #tpu.memory_space<vmem>>, vector<1x51xf32>
    tpu.vector_store %arg21[%c0_72, %c102], %119 {strides = array<i32>} : memref<2x510xf32, #tpu.memory_space<vmem>>, vector<1x51xf32>,
    %c3 = arith.constant 3 : index
    %c0_73 = arith.constant 0 : index
    %121 = vector.load %arg20[%c3, %c0_73] : memref<20x51xf32, #tpu.memory_space<vmem>>, vector<1x51xf32>
    %c0_74 = arith.constant 0 : index
    %c153 = arith.constant 153 : index
    %122 = vector.load %arg21[%c0_74, %c153] : memref<2x510xf32, #tpu.memory_space<vmem>>, vector<1x51xf32>
    tpu.vector_store %arg21[%c0_74, %c153], %121 {strides = array<i32>} : memref<2x510xf32, #tpu.memory_space<vmem>>, vector<1x51xf32>,
    %c4 = arith.constant 4 : index
    %c0_75 = arith.constant 0 : index
    %123 = vector.load %arg20[%c4, %c0_75] : memref<20x51xf32, #tpu.memory_space<vmem>>, vector<1x51xf32>
    %c0_76 = arith.constant 0 : index
    %c204 = arith.constant 204 : index
    %124 = vector.load %arg21[%c0_76, %c204] : memref<2x510xf32, #tpu.memory_space<vmem>>, vector<1x51xf32>
    tpu.vector_store %arg21[%c0_76, %c204], %123 {strides = array<i32>} : memref<2x510xf32, #tpu.memory_space<vmem>>, vector<1x51xf32>,
    %c5 = arith.constant 5 : index
    %c0_77 = arith.constant 0 : index
    %125 = vector.load %arg20[%c5, %c0_77] : memref<20x51xf32, #tpu.memory_space<vmem>>, vector<1x51xf32>
    %c0_78 = arith.constant 0 : index
    %c255 = arith.constant 255 : index
    %126 = vector.load %arg21[%c0_78, %c255] : memref<2x510xf32, #tpu.memory_space<vmem>>, vector<1x51xf32>
    tpu.vector_store %arg21[%c0_78, %c255], %125 {strides = array<i32>} : memref<2x510xf32, #tpu.memory_space<vmem>>, vector<1x51xf32>,
    %c6 = arith.constant 6 : index
    %c0_79 = arith.constant 0 : index
    %127 = vector.load %arg20[%c6, %c0_79] : memref<20x51xf32, #tpu.memory_space<vmem>>, vector<1x51xf32>
    %c0_80 = arith.constant 0 : index
    %c306 = arith.constant 306 : index
    %128 = vector.load %arg21[%c0_80, %c306] : memref<2x510xf32, #tpu.memory_space<vmem>>, vector<1x51xf32>
    tpu.vector_store %arg21[%c0_80, %c306], %127 {strides = array<i32>} : memref<2x510xf32, #tpu.memory_space<vmem>>, vector<1x51xf32>,
    %c7 = arith.constant 7 : index
    %c0_81 = arith.constant 0 : index
    %129 = vector.load %arg20[%c7, %c0_81] : memref<20x51xf32, #tpu.memory_space<vmem>>, vector<1x51xf32>
    %c0_82 = arith.constant 0 : index
    %c357 = arith.constant 357 : index
    %130 = vector.load %arg21[%c0_82, %c357] : memref<2x510xf32, #tpu.memory_space<vmem>>, vector<1x51xf32>
    tpu.vector_store %arg21[%c0_82, %c357], %129 {strides = array<i32>} : memref<2x510xf32, #tpu.memory_space<vmem>>, vector<1x51xf32>,
    %c8 = arith.constant 8 : index
    %c0_83 = arith.constant 0 : index
    %131 = vector.load %arg20[%c8, %c0_83] : memref<20x51xf32, #tpu.memory_space<vmem>>, vector<1x51xf32>
    %c0_84 = arith.constant 0 : index
    %c408 = arith.constant 408 : index
    %132 = vector.load %arg21[%c0_84, %c408] : memref<2x510xf32, #tpu.memory_space<vmem>>, vector<1x51xf32>
    tpu.vector_store %arg21[%c0_84, %c408], %131 {strides = array<i32>} : memref<2x510xf32, #tpu.memory_space<vmem>>, vector<1x51xf32>,
    %c9 = arith.constant 9 : index
    %c0_85 = arith.constant 0 : index
    %133 = vector.load %arg20[%c9, %c0_85] : memref<20x51xf32, #tpu.memory_space<vmem>>, vector<1x51xf32>
    %c0_86 = arith.constant 0 : index
    %c459 = arith.constant 459 : index
    %134 = vector.load %arg21[%c0_86, %c459] : memref<2x510xf32, #tpu.memory_space<vmem>>, vector<1x51xf32>
    tpu.vector_store %arg21[%c0_86, %c459], %133 {strides = array<i32>} : memref<2x510xf32, #tpu.memory_space<vmem>>, vector<1x51xf32>,
    %c10 = arith.constant 10 : index
    %c0_87 = arith.constant 0 : index
    %135 = vector.load %arg20[%c10, %c0_87] : memref<20x51xf32, #tpu.memory_space<vmem>>, vector<1x51xf32>
    %c1_88 = arith.constant 1 : index
    %c0_89 = arith.constant 0 : index
    %136 = vector.load %arg21[%c1_88, %c0_89] : memref<2x510xf32, #tpu.memory_space<vmem>>, vector<1x51xf32>
    tpu.vector_store %arg21[%c1_88, %c0_89], %135 {strides = array<i32>} : memref<2x510xf32, #tpu.memory_space<vmem>>, vector<1x51xf32>,
    %c11 = arith.constant 11 : index
    %c0_90 = arith.constant 0 : index
    %137 = vector.load %arg20[%c11, %c0_90] : memref<20x51xf32, #tpu.memory_space<vmem>>, vector<1x51xf32>
    %c1_91 = arith.constant 1 : index
    %c51_92 = arith.constant 51 : index
    %138 = vector.load %arg21[%c1_91, %c51_92] : memref<2x510xf32, #tpu.memory_space<vmem>>, vector<1x51xf32>
    tpu.vector_store %arg21[%c1_91, %c51_92], %137 {strides = array<i32>} : memref<2x510xf32, #tpu.memory_space<vmem>>, vector<1x51xf32>,
    %c12 = arith.constant 12 : index
    %c0_93 = arith.constant 0 : index
    %139 = vector.load %arg20[%c12, %c0_93] : memref<20x51xf32, #tpu.memory_space<vmem>>, vector<1x51xf32>
    %c1_94 = arith.constant 1 : index
    %c102_95 = arith.constant 102 : index
    %140 = vector.load %arg21[%c1_94, %c102_95] : memref<2x510xf32, #tpu.memory_space<vmem>>, vector<1x51xf32>
    tpu.vector_store %arg21[%c1_94, %c102_95], %139 {strides = array<i32>} : memref<2x510xf32, #tpu.memory_space<vmem>>, vector<1x51xf32>,
    %c13 = arith.constant 13 : index
    %c0_96 = arith.constant 0 : index
    %141 = vector.load %arg20[%c13, %c0_96] : memref<20x51xf32, #tpu.memory_space<vmem>>, vector<1x51xf32>
    %c1_97 = arith.constant 1 : index
    %c153_98 = arith.constant 153 : index
    %142 = vector.load %arg21[%c1_97, %c153_98] : memref<2x510xf32, #tpu.memory_space<vmem>>, vector<1x51xf32>
    tpu.vector_store %arg21[%c1_97, %c153_98], %141 {strides = array<i32>} : memref<2x510xf32, #tpu.memory_space<vmem>>, vector<1x51xf32>,
    %c14 = arith.constant 14 : index
    %c0_99 = arith.constant 0 : index
    %143 = vector.load %arg20[%c14, %c0_99] : memref<20x51xf32, #tpu.memory_space<vmem>>, vector<1x51xf32>
    %c1_100 = arith.constant 1 : index
    %c204_101 = arith.constant 204 : index
    %144 = vector.load %arg21[%c1_100, %c204_101] : memref<2x510xf32, #tpu.memory_space<vmem>>, vector<1x51xf32>
    tpu.vector_store %arg21[%c1_100, %c204_101], %143 {strides = array<i32>} : memref<2x510xf32, #tpu.memory_space<vmem>>, vector<1x51xf32>,
    %c15 = arith.constant 15 : index
    %c0_102 = arith.constant 0 : index
    %145 = vector.load %arg20[%c15, %c0_102] : memref<20x51xf32, #tpu.memory_space<vmem>>, vector<1x51xf32>
    %c1_103 = arith.constant 1 : index
    %c255_104 = arith.constant 255 : index
    %146 = vector.load %arg21[%c1_103, %c255_104] : memref<2x510xf32, #tpu.memory_space<vmem>>, vector<1x51xf32>
    tpu.vector_store %arg21[%c1_103, %c255_104], %145 {strides = array<i32>} : memref<2x510xf32, #tpu.memory_space<vmem>>, vector<1x51xf32>,
    %c16 = arith.constant 16 : index
    %c0_105 = arith.constant 0 : index
    %147 = vector.load %arg20[%c16, %c0_105] : memref<20x51xf32, #tpu.memory_space<vmem>>, vector<1x51xf32>
    %c1_106 = arith.constant 1 : index
    %c306_107 = arith.constant 306 : index
    %148 = vector.load %arg21[%c1_106, %c306_107] : memref<2x510xf32, #tpu.memory_space<vmem>>, vector<1x51xf32>
    tpu.vector_store %arg21[%c1_106, %c306_107], %147 {strides = array<i32>} : memref<2x510xf32, #tpu.memory_space<vmem>>, vector<1x51xf32>,
    %c17 = arith.constant 17 : index
    %c0_108 = arith.constant 0 : index
    %149 = vector.load %arg20[%c17, %c0_108] : memref<20x51xf32, #tpu.memory_space<vmem>>, vector<1x51xf32>
    %c1_109 = arith.constant 1 : index
    %c357_110 = arith.constant 357 : index
    %150 = vector.load %arg21[%c1_109, %c357_110] : memref<2x510xf32, #tpu.memory_space<vmem>>, vector<1x51xf32>
    tpu.vector_store %arg21[%c1_109, %c357_110], %149 {strides = array<i32>} : memref<2x510xf32, #tpu.memory_space<vmem>>, vector<1x51xf32>,
    %c18 = arith.constant 18 : index
    %c0_111 = arith.constant 0 : index
    %151 = vector.load %arg20[%c18, %c0_111] : memref<20x51xf32, #tpu.memory_space<vmem>>, vector<1x51xf32>
    %c1_112 = arith.constant 1 : index
    %c408_113 = arith.constant 408 : index
    %152 = vector.load %arg21[%c1_112, %c408_113] : memref<2x510xf32, #tpu.memory_space<vmem>>, vector<1x51xf32>
    tpu.vector_store %arg21[%c1_112, %c408_113], %151 {strides = array<i32>} : memref<2x510xf32, #tpu.memory_space<vmem>>, vector<1x51xf32>,
    %c19 = arith.constant 19 : index
    %c0_114 = arith.constant 0 : index
    %153 = vector.load %arg20[%c19, %c0_114] : memref<20x51xf32, #tpu.memory_space<vmem>>, vector<1x51xf32>
    %c1_115 = arith.constant 1 : index
    %c459_116 = arith.constant 459 : index
    %154 = vector.load %arg21[%c1_115, %c459_116] : memref<2x510xf32, #tpu.memory_space<vmem>>, vector<1x51xf32>
    tpu.vector_store %arg21[%c1_115, %c459_116], %153 {strides = array<i32>} : memref<2x510xf32, #tpu.memory_space<vmem>>, vector<1x51xf32>,
    %c0_117 = arith.constant 0 : index
    %c0_118 = arith.constant 0 : index
    %155 = vector.load %arg21[%c0_117, %c0_118] : memref<2x510xf32, #tpu.memory_space<vmem>>, vector<2x510xf32>
    %c0_119 = arith.constant 0 : index
    %c0_120 = arith.constant 0 : index
    %156 = vector.load %arg15[%c0_119, %c0_120] : memref<510x510xf32, #tpu.memory_space<vmem>>, vector<510x510xf32>
    %cst_121 = arith.constant dense<0.000000e+00> : vector<2x510xf32>
    %157 = tpu.matmul %155, %156, %cst_121 {dimension_numbers = #tpu.dot_dimension_numbers<[1], [0], [0], [1], [0, 0, 1, 1], [], []>} : vector<2x510xf32>, vector<510x510xf32>, vector<2x510xf32> -> vector<2x510xf32>
    %c0_122 = arith.constant 0 : index
    %c0_123 = arith.constant 0 : index
    %158 = vector.load %arg16[%c0_122, %c0_123] : memref<1x510xf32, #tpu.memory_space<vmem>>, vector<1x510xf32>
    %159 = vector.broadcast %158 : vector<1x510xf32> to vector<2x510xf32>
    %160 = arith.addf %157, %159 : vector<2x510xf32>
    %161 = arith.addf %160, %155 : vector<2x510xf32>
    %cst_124 = arith.constant dense<0.000000e+00> : vector<2xf32>
    %162 = vector.multi_reduction <add>, %161, %cst_124 [1] : vector<2x510xf32> to vector<2xf32>
    %163 = vector.shape_cast %162 : vector<2xf32> to vector<2x1xf32>
    %cst_125 = arith.constant 5.100000e+02 : f32
    %164 = vector.broadcast %cst_125 : f32 to vector<2x1xf32>
    %165 = arith.divf %163, %164 : vector<2x1xf32>
    %166 = vector.broadcast %165 : vector<2x1xf32> to vector<2x510xf32>
    %167 = arith.subf %161, %166 : vector<2x510xf32>
    %168 = arith.mulf %167, %167 : vector<2x510xf32>
    %cst_126 = arith.constant dense<0.000000e+00> : vector<2xf32>
    %169 = vector.multi_reduction <add>, %168, %cst_126 [1] : vector<2x510xf32> to vector<2xf32>
    %170 = vector.shape_cast %169 : vector<2xf32> to vector<2x1xf32>
    %cst_127 = arith.constant 5.100000e+02 : f32
    %171 = vector.broadcast %cst_127 : f32 to vector<2x1xf32>
    %172 = arith.divf %170, %171 : vector<2x1xf32>
    %173 = vector.broadcast %165 : vector<2x1xf32> to vector<2x510xf32>
    %174 = arith.subf %161, %173 : vector<2x510xf32>
    %cst_128 = arith.constant 9.99999974E-6 : f32
    %175 = vector.broadcast %cst_128 : f32 to vector<2x1xf32>
    %176 = arith.addf %172, %175 : vector<2x1xf32>
    %177 = math.rsqrt %176 : vector<2x1xf32>
    %178 = vector.broadcast %177 : vector<2x1xf32> to vector<2x510xf32>
    %179 = arith.mulf %174, %178 : vector<2x510xf32>
    %c0_129 = arith.constant 0 : index
    %c0_130 = arith.constant 0 : index
    %180 = vector.load %arg17[%c0_129, %c0_130] : memref<1x510xf32, #tpu.memory_space<vmem>>, vector<1x510xf32>
    %181 = vector.broadcast %180 : vector<1x510xf32> to vector<2x510xf32>
    %182 = arith.mulf %179, %181 : vector<2x510xf32>
    %c0_131 = arith.constant 0 : index
    %c0_132 = arith.constant 0 : index
    %183 = vector.load %arg18[%c0_131, %c0_132] : memref<1x510xf32, #tpu.memory_space<vmem>>, vector<1x510xf32>
    %184 = vector.broadcast %183 : vector<1x510xf32> to vector<2x510xf32>
    %185 = arith.addf %182, %184 : vector<2x510xf32>
    %c0_133 = arith.constant 0 : index
    %c0_134 = arith.constant 0 : index
    %186 = vector.load %arg19[%c0_133, %c0_134] : memref<2x510xf32, #tpu.memory_space<vmem>>, vector<2x510xf32>
    tpu.vector_store %arg19[%c0_133, %c0_134], %185 {strides = array<i32>} : memref<2x510xf32, #tpu.memory_space<vmem>>, vector<2x510xf32>,
    return
  }
}

</mosaic_0001>

<llo_original>
// kernel: transformer_forward.1
$region0: #{transformer_forward.1}
  #allocation0 [shape = 'u32[]', space=smem, size = 0x4, offset = 0x4, fixed_abs, tag = 'smem constant byte address 0x4 - core index']
  #allocation1 [shape = 'u32[144,128]{1,0:T(1,128)}', space=vmem, size = 0x12000, scoped, tag = 'internal scratch']
  #allocation2 [shape = 'f32[20,51]{1,0:T(8,128)}', space=vmem, size = 0x3000, scoped, tag = 'scratch operand']
  #allocation3 [shape = 'f32[2,510]{1,0:T(2,128)}', space=vmem, size = 0x1000, scoped, tag = 'scratch operand']
  %s0 = inlined_call_operand.vmem [shape: f32[20,51], index: 0, kind: input, shape index: {}]
  %s1 = inlined_call_operand.hbm [shape: f32[20,51], index: 1, kind: input, shape index: {}]
  %s2 = inlined_call_operand.hbm [shape: f32[20,20], index: 2, kind: input, shape index: {}]
  %s3 = inlined_call_operand.hbm [shape: f32[3,1,51], index: 3, kind: input, shape index: {}]
  %s4 = inlined_call_operand.hbm [shape: f32[20,20], index: 4, kind: input, shape index: {}]
  %s5 = inlined_call_operand.vmem [shape: f32[51,51], index: 5, kind: input, shape index: {}]
  %s6 = inlined_call_operand.vmem [shape: f32[51,51], index: 6, kind: input, shape index: {}]
  %s7 = inlined_call_operand.vmem [shape: f32[51,51], index: 7, kind: input, shape index: {}]
  %s8 = inlined_call_operand.hbm [shape: f32[1,51], index: 8, kind: input, shape index: {}]
  %s9 = inlined_call_operand.hbm [shape: f32[1,51], index: 9, kind: input, shape index: {}]
  %s10 = inlined_call_operand.hbm [shape: f32[1,51], index: 10, kind: input, shape index: {}]
  %s11 = inlined_call_operand.hbm [shape: f32[51,51], index: 11, kind: input, shape index: {}]
  %s12 = inlined_call_operand.hbm [shape: f32[1,51], index: 12, kind: input, shape index: {}]
  %s13 = inlined_call_operand.hbm [shape: f32[20,51], index: 13, kind: input, shape index: {}]
  %s14 = inlined_call_operand.hbm [shape: f32[20,51], index: 14, kind: input, shape index: {}]
  %s15 = inlined_call_operand.hbm [shape: f32[510,510], index: 15, kind: input, shape index: {}]
  %s16 = inlined_call_operand.hbm [shape: f32[1,510], index: 16, kind: input, shape index: {}]
  %s17 = inlined_call_operand.hbm [shape: f32[1,510], index: 17, kind: input, shape index: {}]
  %s18 = inlined_call_operand.hbm [shape: f32[1,510], index: 18, kind: input, shape index: {}]
  %s19 = inlined_call_operand.hbm [shape: f32[2,510], index: 19, kind: output, shape index: {}]
  %s20 = sld [smem:[#allocation0]]
  $region146: #{transformer_forward.1} parent=0
    _
  %s22 = ssub.s32 1, %s20
  %s23 = scalar_select 0, %s22, %s20
  $region1: #{transformer_forward.1} parent=0
    #allocation4 [shape = 'u8[12288]{0}', space=vmem, size = 0x3000, scoped, tag = 'input window, operand 1, single buffered']
    #allocation5 [shape = 's32[1]{0}', space=sflag, size = 0x4, scoped, tag = 'scoped memory for transformer_forward.1']
    #allocation6 [shape = 's32[1]{0}', space=sflag, size = 0x4, scoped, tag = 'scoped memory for transformer_forward.1']
    #allocation7 [shape = 'u8[12288]{0}', space=vmem, size = 0x3000, scoped, tag = 'input window, operand 2, single buffered']
    #allocation8 [shape = 's32[1]{0}', space=sflag, size = 0x4, scoped, tag = 'scoped memory for transformer_forward.1']
    #allocation9 [shape = 'u8[1536]{0}', space=vmem, size = 0x800, scoped, tag = 'input window, operand 3, single buffered']
    #allocation10 [shape = 'u8[12288]{0}', space=vmem, size = 0x3000, scoped, tag = 'input window, operand 4, single buffered']
    #allocation11 [shape = 's32[1]{0}', space=sflag, size = 0x4, scoped, tag = 'scoped memory for transformer_forward.1']
    #allocation12 [shape = 'u8[512]{0}', space=vmem, size = 0x400, scoped, tag = 'input window, operand 8, single buffered']
    #allocation13 [shape = 'u8[512]{0}', space=vmem, size = 0x400, scoped, tag = 'input window, operand 9, single buffered']
    #allocation14 [shape = 's32[1]{0}', space=sflag, size = 0x4, scoped, tag = 'scoped memory for transformer_forward.1']
    #allocation15 [shape = 'u8[512]{0}', space=vmem, size = 0x400, scoped, tag = 'input window, operand 10, single buffered']
    #allocation16 [shape = 'u8[28672]{0}', space=vmem, size = 0x7000, scoped, tag = 'input window, operand 11, single buffered']
    #allocation17 [shape = 's32[1]{0}', space=sflag, size = 0x4, scoped, tag = 'scoped memory for transformer_forward.1']
    #allocation18 [shape = 'u8[512]{0}', space=vmem, size = 0x400, scoped, tag = 'input window, operand 12, single buffered']
    #allocation19 [shape = 'u8[12288]{0}', space=vmem, size = 0x3000, scoped, tag = 'input window, operand 13, single buffered']
    #allocation20 [shape = 's32[1]{0}', space=sflag, size = 0x4, scoped, tag = 'scoped memory for transformer_forward.1']
    #allocation21 [shape = 'u8[12288]{0}', space=vmem, size = 0x3000, scoped, tag = 'input window, operand 14, single buffered']
    #allocation22 [shape = 'u8[1048576]{0}', space=vmem, size = 0x100000, scoped, tag = 'input window, operand 15, single buffered']
    #allocation23 [shape = 's32[1]{0}', space=sflag, size = 0x4, scoped, tag = 'scoped memory for transformer_forward.1']
    #allocation24 [shape = 'u8[2048]{0}', space=vmem, size = 0x800, scoped, tag = 'input window, operand 16, single buffered']
    #allocation25 [shape = 'u8[2048]{0}', space=vmem, size = 0x800, scoped, tag = 'input window, operand 17, single buffered']
    #allocation26 [shape = 's32[1]{0}', space=sflag, size = 0x4, scoped, tag = 'scoped memory for transformer_forward.1']
    #allocation27 [shape = 'u8[2048]{0}', space=vmem, size = 0x800, scoped, tag = 'input window, operand 18, single buffered']
    #allocation28 [shape = 'u8[4096]{0}', space=vmem, size = 0x1000, scoped, tag = 'output window, operand 0, single buffered']
    %24 = vsyncpa [#allocation5], 0
    %25 = vsyncpa [#allocation8], 0
    %26 = vsyncpa [#allocation11], 0
    %27 = vsyncpa [#allocation14], 0
    %28 = vsyncpa [#allocation17], 0
    %29 = vsyncpa [#allocation20], 0
    %30 = vsyncpa [#allocation23], 0
    %31 = vsyncpa [#allocation26], 0
    %32 = vsyncpa [#allocation6], 0
    // Predicated region
    $region2: #{transformer_forward.1} parent=1 // pred_check
      _
    $region3: #{transformer_forward.1} parent=1 // pred_check_branch
      %34 = sbr.rel (0) target = $region5
    $region4: #{transformer_forward.1} parent=1 // pred_region
      _
    $region5: #{transformer_forward.1} parent=1 // pred_fallthru
      _
    // Predicated region
    $region6: #{transformer_forward.1} parent=1 // pred_check
      _
    $region7: #{transformer_forward.1} parent=1 // pred_check_branch
      %36 = sbr.rel (0) target = $region9
    $region8: #{transformer_forward.1} parent=1 // pred_region
      %s38 = ssub.s32 384, 384
      %39 = vsyncadd [#allocation5], %s38
      %s40 = sshll.u32 [#allocation4], 4
      %s41 = int_to_ptr.vmem [resolvable:$true] %s40
      %46 = dma.hbm_to_vmem [thread:$0]  %s1, 384, %s41, [#allocation5], 128, 128, 8
    $region9: #{transformer_forward.1} parent=1 // pred_fallthru
      _
    // Predicated region
    $region10: #{transformer_forward.1} parent=1 // pred_check
      _
    $region11: #{transformer_forward.1} parent=1 // pred_check_branch
      %48 = sbr.rel (0) target = $region13
    $region12: #{transformer_forward.1} parent=1 // pred_region
      %s50 = ssub.s32 384, 384
      %51 = vsyncadd [#allocation8], %s50
      %s52 = sshll.u32 [#allocation7], 4
      %s53 = int_to_ptr.vmem [resolvable:$true] %s52
      %58 = dma.hbm_to_vmem [thread:$0]  %s2, 384, %s53, [#allocation8], 128, 128, 8
    $region13: #{transformer_forward.1} parent=1 // pred_fallthru
      _
    // Predicated region
    $region14: #{transformer_forward.1} parent=1 // pred_check
      _
    $region15: #{transformer_forward.1} parent=1 // pred_check_branch
      %60 = sbr.rel (0) target = $region17
    $region16: #{transformer_forward.1} parent=1 // pred_region
      %s62 = ssub.s32 48, 48
      %63 = vsyncadd [#allocation8], %s62
      %s64 = sshll.u32 [#allocation9], 4
      %s65 = int_to_ptr.vmem [resolvable:$true] %s64
      %70 = dma.hbm_to_vmem [thread:$0]  %s3, 48, %s65, [#allocation8], 16, 16, 1
    $region17: #{transformer_forward.1} parent=1 // pred_fallthru
      _
    // Predicated region
    $region18: #{transformer_forward.1} parent=1 // pred_check
      _
    $region19: #{transformer_forward.1} parent=1 // pred_check_branch
      %72 = sbr.rel (0) target = $region21
    $region20: #{transformer_forward.1} parent=1 // pred_region
      %s74 = ssub.s32 384, 384
      %75 = vsyncadd [#allocation11], %s74
      %s76 = sshll.u32 [#allocation10], 4
      %s77 = int_to_ptr.vmem [resolvable:$true] %s76
      %82 = dma.hbm_to_vmem [thread:$0]  %s4, 384, %s77, [#allocation11], 128, 128, 8
    $region21: #{transformer_forward.1} parent=1 // pred_fallthru
      _
    // Predicated region
    $region22: #{transformer_forward.1} parent=1 // pred_check
      _
    $region23: #{transformer_forward.1} parent=1 // pred_check_branch
      %84 = sbr.rel (0) target = $region25
    $region24: #{transformer_forward.1} parent=1 // pred_region
      _
    $region25: #{transformer_forward.1} parent=1 // pred_fallthru
      _
    // Predicated region
    $region26: #{transformer_forward.1} parent=1 // pred_check
      _
    $region27: #{transformer_forward.1} parent=1 // pred_check_branch
      %86 = sbr.rel (0) target = $region29
    $region28: #{transformer_forward.1} parent=1 // pred_region
      _
    $region29: #{transformer_forward.1} parent=1 // pred_fallthru
      _
    // Predicated region
    $region30: #{transformer_forward.1} parent=1 // pred_check
      _
    $region31: #{transformer_forward.1} parent=1 // pred_check_branch
      %88 = sbr.rel (0) target = $region33
    $region32: #{transformer_forward.1} parent=1 // pred_region
      _
    $region33: #{transformer_forward.1} parent=1 // pred_fallthru
      _
    // Predicated region
    $region34: #{transformer_forward.1} parent=1 // pred_check
      _
    $region35: #{transformer_forward.1} parent=1 // pred_check_branch
      %90 = sbr.rel (0) target = $region37
    $region36: #{transformer_forward.1} parent=1 // pred_region
      %s92 = ssub.s32 16, 16
      %93 = vsyncadd [#allocation11], %s92
      %s95 = sshll.u32 [#allocation12], 4
      %s96 = int_to_ptr.vmem [resolvable:$true] %s95
      %98 = dma.hbm_to_vmem [thread:$0]  %s8, 16, %s96, [#allocation11]
    $region37: #{transformer_forward.1} parent=1 // pred_fallthru
      _
    // Predicated region
    $region38: #{transformer_forward.1} parent=1 // pred_check
      _
    $region39: #{transformer_forward.1} parent=1 // pred_check_branch
      %100 = sbr.rel (0) target = $region41
    $region40: #{transformer_forward.1} parent=1 // pred_region
      %s102 = ssub.s32 16, 16
      %103 = vsyncadd [#allocation14], %s102
      %s105 = sshll.u32 [#allocation13], 4
      %s106 = int_to_ptr.vmem [resolvable:$true] %s105
      %108 = dma.hbm_to_vmem [thread:$0]  %s9, 16, %s106, [#allocation14]
    $region41: #{transformer_forward.1} parent=1 // pred_fallthru
      _
    // Predicated region
    $region42: #{transformer_forward.1} parent=1 // pred_check
      _
    $region43: #{transformer_forward.1} parent=1 // pred_check_branch
      %110 = sbr.rel (0) target = $region45
    $region44: #{transformer_forward.1} parent=1 // pred_region
      %s112 = ssub.s32 16, 16
      %113 = vsyncadd [#allocation14], %s112
      %s115 = sshll.u32 [#allocation15], 4
      %s116 = int_to_ptr.vmem [resolvable:$true] %s115
      %118 = dma.hbm_to_vmem [thread:$0]  %s10, 16, %s116, [#allocation14]
    $region45: #{transformer_forward.1} parent=1 // pred_fallthru
      _
    // Predicated region
    $region46: #{transformer_forward.1} parent=1 // pred_check
      _
    $region47: #{transformer_forward.1} parent=1 // pred_check_branch
      %120 = sbr.rel (0) target = $region49
    $region48: #{transformer_forward.1} parent=1 // pred_region
      %s122 = ssub.s32 896, 896
      %123 = vsyncadd [#allocation17], %s122
      %s124 = sshll.u32 [#allocation16], 4
      %s125 = int_to_ptr.vmem [resolvable:$true] %s124
      %130 = dma.hbm_to_vmem [thread:$0]  %s11, 896, %s125, [#allocation17], 128, 128, 8
    $region49: #{transformer_forward.1} parent=1 // pred_fallthru
      _
    // Predicated region
    $region50: #{transformer_forward.1} parent=1 // pred_check
      _
    $region51: #{transformer_forward.1} parent=1 // pred_check_branch
      %132 = sbr.rel (0) target = $region53
    $region52: #{transformer_forward.1} parent=1 // pred_region
      %s134 = ssub.s32 16, 16
      %135 = vsyncadd [#allocation17], %s134
      %s137 = sshll.u32 [#allocation18], 4
      %s138 = int_to_ptr.vmem [resolvable:$true] %s137
      %140 = dma.hbm_to_vmem [thread:$0]  %s12, 16, %s138, [#allocation17]
    $region53: #{transformer_forward.1} parent=1 // pred_fallthru
      _
    // Predicated region
    $region54: #{transformer_forward.1} parent=1 // pred_check
      _
    $region55: #{transformer_forward.1} parent=1 // pred_check_branch
      %142 = sbr.rel (0) target = $region57
    $region56: #{transformer_forward.1} parent=1 // pred_region
      %s144 = ssub.s32 384, 384
      %145 = vsyncadd [#allocation20], %s144
      %s146 = sshll.u32 [#allocation19], 4
      %s147 = int_to_ptr.vmem [resolvable:$true] %s146
      %152 = dma.hbm_to_vmem [thread:$0]  %s13, 384, %s147, [#allocation20], 128, 128, 8
    $region57: #{transformer_forward.1} parent=1 // pred_fallthru
      _
    // Predicated region
    $region58: #{transformer_forward.1} parent=1 // pred_check
      _
    $region59: #{transformer_forward.1} parent=1 // pred_check_branch
      %154 = sbr.rel (0) target = $region61
    $region60: #{transformer_forward.1} parent=1 // pred_region
      %s156 = ssub.s32 384, 384
      %157 = vsyncadd [#allocation20], %s156
      %s158 = sshll.u32 [#allocation21], 4
      %s159 = int_to_ptr.vmem [resolvable:$true] %s158
      %164 = dma.hbm_to_vmem [thread:$0]  %s14, 384, %s159, [#allocation20], 128, 128, 8
    $region61: #{transformer_forward.1} parent=1 // pred_fallthru
      _
    // Predicated region
    $region62: #{transformer_forward.1} parent=1 // pred_check
      _
    $region63: #{transformer_forward.1} parent=1 // pred_check_branch
      %166 = sbr.rel (0) target = $region65
    $region64: #{transformer_forward.1} parent=1 // pred_region
      %s168 = ssub.s32 32768, 32768
      %169 = vsyncadd [#allocation23], %s168
      %s170 = sshll.u32 [#allocation22], 4
      %s171 = int_to_ptr.vmem [resolvable:$true] %s170
      %176 = dma.hbm_to_vmem [thread:$0]  %s15, 32768, %s171, [#allocation23], 512, 512, 32
    $region65: #{transformer_forward.1} parent=1 // pred_fallthru
      _
    // Predicated region
    $region66: #{transformer_forward.1} parent=1 // pred_check
      _
    $region67: #{transformer_forward.1} parent=1 // pred_check_branch
      %178 = sbr.rel (0) target = $region69
    $region68: #{transformer_forward.1} parent=1 // pred_region
      %s180 = ssub.s32 64, 64
      %181 = vsyncadd [#allocation23], %s180
      %s183 = sshll.u32 [#allocation24], 4
      %s184 = int_to_ptr.vmem [resolvable:$true] %s183
      %186 = dma.hbm_to_vmem [thread:$0]  %s16, 64, %s184, [#allocation23]
    $region69: #{transformer_forward.1} parent=1 // pred_fallthru
      _
    // Predicated region
    $region70: #{transformer_forward.1} parent=1 // pred_check
      _
    $region71: #{transformer_forward.1} parent=1 // pred_check_branch
      %188 = sbr.rel (0) target = $region73
    $region72: #{transformer_forward.1} parent=1 // pred_region
      %s190 = ssub.s32 64, 64
      %191 = vsyncadd [#allocation26], %s190
      %s193 = sshll.u32 [#allocation25], 4
      %s194 = int_to_ptr.vmem [resolvable:$true] %s193
      %196 = dma.hbm_to_vmem [thread:$0]  %s17, 64, %s194, [#allocation26]
    $region73: #{transformer_forward.1} parent=1 // pred_fallthru
      _
    // Predicated region
    $region74: #{transformer_forward.1} parent=1 // pred_check
      _
    $region75: #{transformer_forward.1} parent=1 // pred_check_branch
      %198 = sbr.rel (0) target = $region77
    $region76: #{transformer_forward.1} parent=1 // pred_region
      %s200 = ssub.s32 64, 64
      %201 = vsyncadd [#allocation26], %s200
      %s203 = sshll.u32 [#allocation27], 4
      %s204 = int_to_ptr.vmem [resolvable:$true] %s203
      %206 = dma.hbm_to_vmem [thread:$0]  %s18, 64, %s204, [#allocation26]
    $region77: #{transformer_forward.1} parent=1 // pred_fallthru
      _
    // Predicated region
    $region78: #{transformer_forward.1} parent=1 // pred_check
      _
    $region79: #{transformer_forward.1} parent=1 // pred_check_branch
      %208 = sbr.rel (0) target = $region81
    $region80: #{transformer_forward.1} parent=1 // pred_region
      %209 = dma.done [#allocation5], 384
    $region81: #{transformer_forward.1} parent=1 // pred_fallthru
      _
    // Predicated region
    $region82: #{transformer_forward.1} parent=1 // pred_check
      _
    $region83: #{transformer_forward.1} parent=1 // pred_check_branch
      %211 = sbr.rel (0) target = $region85
    $region84: #{transformer_forward.1} parent=1 // pred_region
      %212 = dma.done [#allocation8], 384
    $region85: #{transformer_forward.1} parent=1 // pred_fallthru
      _
    // Predicated region
    $region86: #{transformer_forward.1} parent=1 // pred_check
      _
    $region87: #{transformer_forward.1} parent=1 // pred_check_branch
      %214 = sbr.rel (0) target = $region89
    $region88: #{transformer_forward.1} parent=1 // pred_region
      %215 = dma.done [#allocation8], 48
    $region89: #{transformer_forward.1} parent=1 // pred_fallthru
      _
    // Predicated region
    $region90: #{transformer_forward.1} parent=1 // pred_check
      _
    $region91: #{transformer_forward.1} parent=1 // pred_check_branch
      %217 = sbr.rel (0) target = $region93
    $region92: #{transformer_forward.1} parent=1 // pred_region
      %218 = dma.done [#allocation11], 384
    $region93: #{transformer_forward.1} parent=1 // pred_fallthru
      _
    // Predicated region
    $region94: #{transformer_forward.1} parent=1 // pred_check
      _
    $region95: #{transformer_forward.1} parent=1 // pred_check_branch
      %220 = sbr.rel (0) target = $region97
    $region96: #{transformer_forward.1} parent=1 // pred_region
      %221 = dma.done [#allocation11], 16
    $region97: #{transformer_forward.1} parent=1 // pred_fallthru
      _
    // Predicated region
    $region98: #{transformer_forward.1} parent=1 // pred_check
      _
    $region99: #{transformer_forward.1} parent=1 // pred_check_branch
      %223 = sbr.rel (0) target = $region101
    $region100: #{transformer_forward.1} parent=1 // pred_region
      %224 = dma.done [#allocation14], 16
    $region101: #{transformer_forward.1} parent=1 // pred_fallthru
      _
    // Predicated region
    $region102: #{transformer_forward.1} parent=1 // pred_check
      _
    $region103: #{transformer_forward.1} parent=1 // pred_check_branch
      %226 = sbr.rel (0) target = $region105
    $region104: #{transformer_forward.1} parent=1 // pred_region
      %227 = dma.done [#allocation14], 16
    $region105: #{transformer_forward.1} parent=1 // pred_fallthru
      _
    // Predicated region
    $region106: #{transformer_forward.1} parent=1 // pred_check
      _
    $region107: #{transformer_forward.1} parent=1 // pred_check_branch
      %229 = sbr.rel (0) target = $region109
    $region108: #{transformer_forward.1} parent=1 // pred_region
      %230 = dma.done [#allocation17], 896
    $region109: #{transformer_forward.1} parent=1 // pred_fallthru
      _
    // Predicated region
    $region110: #{transformer_forward.1} parent=1 // pred_check
      _
    $region111: #{transformer_forward.1} parent=1 // pred_check_branch
      %232 = sbr.rel (0) target = $region113
    $region112: #{transformer_forward.1} parent=1 // pred_region
      %233 = dma.done [#allocation17], 16
    $region113: #{transformer_forward.1} parent=1 // pred_fallthru
      _
    // Predicated region
    $region114: #{transformer_forward.1} parent=1 // pred_check
      _
    $region115: #{transformer_forward.1} parent=1 // pred_check_branch
      %235 = sbr.rel (0) target = $region117
    $region116: #{transformer_forward.1} parent=1 // pred_region
      %236 = dma.done [#allocation20], 384
    $region117: #{transformer_forward.1} parent=1 // pred_fallthru
      _
    // Predicated region
    $region118: #{transformer_forward.1} parent=1 // pred_check
      _
    $region119: #{transformer_forward.1} parent=1 // pred_check_branch
      %238 = sbr.rel (0) target = $region121
    $region120: #{transformer_forward.1} parent=1 // pred_region
      %239 = dma.done [#allocation20], 384
    $region121: #{transformer_forward.1} parent=1 // pred_fallthru
      _
    // Predicated region
    $region122: #{transformer_forward.1} parent=1 // pred_check
      _
    $region123: #{transformer_forward.1} parent=1 // pred_check_branch
      %241 = sbr.rel (0) target = $region125
    $region124: #{transformer_forward.1} parent=1 // pred_region
      %242 = dma.done [#allocation23], 32768
    $region125: #{transformer_forward.1} parent=1 // pred_fallthru
      _
    // Predicated region
    $region126: #{transformer_forward.1} parent=1 // pred_check
      _
    $region127: #{transformer_forward.1} parent=1 // pred_check_branch
      %244 = sbr.rel (0) target = $region129
    $region128: #{transformer_forward.1} parent=1 // pred_region
      %245 = dma.done [#allocation23], 64
    $region129: #{transformer_forward.1} parent=1 // pred_fallthru
      _
    // Predicated region
    $region130: #{transformer_forward.1} parent=1 // pred_check
      _
    $region131: #{transformer_forward.1} parent=1 // pred_check_branch
      %247 = sbr.rel (0) target = $region133
    $region132: #{transformer_forward.1} parent=1 // pred_region
      %248 = dma.done [#allocation26], 64
    $region133: #{transformer_forward.1} parent=1 // pred_fallthru
      _
    // Predicated region
    $region134: #{transformer_forward.1} parent=1 // pred_check
      _
    $region135: #{transformer_forward.1} parent=1 // pred_check_branch
      %250 = sbr.rel (0) target = $region137
    $region136: #{transformer_forward.1} parent=1 // pred_region
      %251 = dma.done [#allocation26], 64
    $region137: #{transformer_forward.1} parent=1 // pred_fallthru
      _
    %v252 = vld [vmem:[%s0] sm:$0xff]
    %v253 = vld [vmem:[%s0 + $0x8] sm:$0xff]
    %v254 = vld [vmem:[%s0 + $0x10] sm:$0xf]
    %v255 = vmul.f32 %v252, 7.1414285
    %v256 = vmul.f32 %v253, 7.1414285
    %v257 = vmul.f32 %v254, 7.1414285
    %v258 = vld [vmem:[#allocation4] sm:$0xff]
    %v259 = vld [vmem:[#allocation4 + $0x8] sm:$0xff]
    %v260 = vld [vmem:[#allocation4 + $0x10] sm:$0xf]
    %v261 = vadd.f32 %v255, %v258
    %v262 = vadd.f32 %v256, %v259
    %v263 = vadd.f32 %v257, %v260
    %v264 = vld [vmem:[%s5] sm:$0xff]
    %v265 = vld [vmem:[%s5 + $0x8] sm:$0xff]
    %v266 = vld [vmem:[%s5 + $0x10] sm:$0xff]
    %v267 = vld [vmem:[%s5 + $0x18] sm:$0xff]
    %v268 = vld [vmem:[%s5 + $0x20] sm:$0xff]
    %v269 = vld [vmem:[%s5 + $0x28] sm:$0xff]
    %v270 = vld [vmem:[%s5 + $0x30] sm:$0x7]
    %v271 = vld [vmem:[#allocation12] sm:$0x1]
    %v273 = vlaneseq
    %v274 = vshrl.u32 %v273, 7
    %v275 = vsub.s32 0, %v274
    %v276 = vrot.slane %v271, %v275
    %vm278 = vcmask 416768
    %v280 = vsel %vm278, %v261, 0
    %v283 = vsel %vm278, %v262, 0
    %v286 = vsel %vm278, %v263, 0
    %vm288 = vcmask 1042432
    %v290 = vsel %vm288, %v270, 0
    %292 = vmatprep.subr.mxu0 0.0
    %293 = vmatpush1.msra.mxu0 %v264
    %294 = vmatprep.subr.mxu0 0.0
    %295 = vmatpush1.msra.mxu0 %v265
    %296 = vmatprep.subr.mxu0 0.0
    %297 = vmatpush1.msra.mxu0 %v266
    %298 = vmatprep.subr.mxu0 0.0
    %299 = vmatpush1.msra.mxu0 %v267
    %300 = vmatprep.subr.mxu0 0.0
    %301 = vmatpush1.msra.mxu0 %v268
    %302 = vmatprep.subr.mxu0 0.0
    %303 = vmatpush1.msra.mxu0 %v269
    %304 = vmatprep.subr.mxu0 0.0
    %305 = vmatpush1.msra.mxu0 %v290
    %306 = vmatprep.subr.mxu0 0.0
    %307 = vmatpush1.msra.mxu0 0.0
    %308 = vmatprep.subr.mxu0 0.0
    %309 = vmatpush1.msra.mxu0 0.0
    %310 = vmatprep.subr.mxu0 0.0
    %311 = vmatpush1.msra.mxu0 0.0
    %312 = vmatprep.subr.mxu0 0.0
    %313 = vmatpush1.msra.mxu0 0.0
    %314 = vmatprep.subr.mxu0 0.0
    %315 = vmatpush1.msra.mxu0 0.0
    %316 = vmatprep.subr.mxu0 0.0
    %317 = vmatpush1.msra.mxu0 0.0
    %318 = vmatprep.subr.mxu0 0.0
    %319 = vmatpush1.msra.mxu0 0.0
    %320 = vmatprep.subr.mxu0 0.0
    %321 = vmatpush1.msra.mxu0 0.0
    %322 = vmatprep.subr.mxu0 0.0
    %323 = vmatpush1.msra.mxu0 0.0
    %324 = vmatprep.subr.mxu0 0.0
    %325 = vmatpush1.msra.mxu0 0.0
    %326 = vmatprep.subr.mxu0 0.0
    %327 = vmatpush1.msra.mxu0 0.0
    %328 = vmatprep.subr.mxu0 0.0
    %329 = vmatpush1.msra.mxu0 0.0
    %330 = vmatprep.subr.mxu0 0.0
    %331 = vmatpush1.msra.mxu0 0.0
    %332 = vmatprep.subr.mxu0 0.0
    %333 = vmatpush1.msra.mxu0 0.0
    %334 = vmatprep.subr.mxu0 0.0
    %335 = vmatpush1.msra.mxu0 0.0
    %336 = vmatprep.subr.mxu0 0.0
    %337 = vmatpush1.msra.mxu0 0.0
    %338 = vmatprep.subr.mxu0 0.0
    %339 = vmatpush1.msra.mxu0 0.0
    %340 = vmatprep.subr.mxu0 0.0
    %341 = vmatpush1.msra.mxu0 0.0
    %342 = vmatprep.subr.mxu0 0.0
    %343 = vmatpush1.msra.mxu0 0.0
    %344 = vmatprep.subr.mxu0 0.0
    %345 = vmatpush1.msra.mxu0 0.0
    %346 = vmatprep.subr.mxu0 0.0
    %347 = vmatpush1.msra.mxu0 0.0
    %348 = vmatprep.subr.mxu0 0.0
    %349 = vmatpush1.msra.mxu0 0.0
    %350 = vmatprep.subr.mxu0 0.0
    %351 = vmatpush1.msra.mxu0 0.0
    %352 = vmatprep.subr.mxu0 0.0
    %353 = vmatpush1.msra.mxu0 0.0
    %354 = vmatprep.subr.mxu0 0.0
    %355 = vmatpush1.msra.mxu0 0.0
    %356 = vmatprep.mubr.f32.mxu0 0.0
    %357 = vmatmul.mubr.f32.gmra.mrb[0].mxu0 %v280
    %v358 = vpop.f32.mrb[0].mxu0
    %v359 = vadd.f32 %v276, %v358
    %v360 = vpop.f32.mrb[0].mxu0
    %361 = vmatprep.mubr.f32.mxu0 0.0
    %362 = vmatmul.mubr.f32.gmra.mrb[0].mxu0 %v283
    %v363 = vpop.f32.mrb[0].mxu0
    %v364 = vadd.f32 %v276, %v363
    %v365 = vpop.f32.mrb[0].mxu0
    %366 = vmatprep.mubr.f32.mxu0 0.0
    %367 = vmatmul.mubr.f32.gmra.mrb[0].mxu0 %v286
    %v368 = vpop.f32.mrb[0].mxu0
    %v369 = vadd.f32 %v276, %v368
    %v370 = vpop.f32.mrb[0].mxu0
    %371 = vdwg.mxu0
    %v372 = vld [vmem:[%s6] sm:$0xff]
    %v373 = vld [vmem:[%s6 + $0x8] sm:$0xff]
    %v374 = vld [vmem:[%s6 + $0x10] sm:$0xff]
    %v375 = vld [vmem:[%s6 + $0x18] sm:$0xff]
    %v376 = vld [vmem:[%s6 + $0x20] sm:$0xff]
    %v377 = vld [vmem:[%s6 + $0x28] sm:$0xff]
    %v378 = vld [vmem:[%s6 + $0x30] sm:$0x7]
    %v379 = vld [vmem:[#allocation13] sm:$0x1]
    %v381 = vlaneseq
    %v382 = vshrl.u32 %v381, 7
    %v383 = vsub.s32 0, %v382
    %v384 = vrot.slane %v379, %v383
    %v387 = vsel %vm288, %v378, 0
    %389 = vmatprep.subr.mxu0 0.0
    %390 = vmatpush1.msra.mxu0 %v372
    %391 = vmatprep.subr.mxu0 0.0
    %392 = vmatpush1.msra.mxu0 %v373
    %393 = vmatprep.subr.mxu0 0.0
    %394 = vmatpush1.msra.mxu0 %v374
    %395 = vmatprep.subr.mxu0 0.0
    %396 = vmatpush1.msra.mxu0 %v375
    %397 = vmatprep.subr.mxu0 0.0
    %398 = vmatpush1.msra.mxu0 %v376
    %399 = vmatprep.subr.mxu0 0.0
    %400 = vmatpush1.msra.mxu0 %v377
    %401 = vmatprep.subr.mxu0 0.0
    %402 = vmatpush1.msra.mxu0 %v387
    %403 = vmatprep.subr.mxu0 0.0
    %404 = vmatpush1.msra.mxu0 0.0
    %405 = vmatprep.subr.mxu0 0.0
    %406 = vmatpush1.msra.mxu0 0.0
    %407 = vmatprep.subr.mxu0 0.0
    %408 = vmatpush1.msra.mxu0 0.0
    %409 = vmatprep.subr.mxu0 0.0
    %410 = vmatpush1.msra.mxu0 0.0
    %411 = vmatprep.subr.mxu0 0.0
    %412 = vmatpush1.msra.mxu0 0.0
    %413 = vmatprep.subr.mxu0 0.0
    %414 = vmatpush1.msra.mxu0 0.0
    %415 = vmatprep.subr.mxu0 0.0
    %416 = vmatpush1.msra.mxu0 0.0
    %417 = vmatprep.subr.mxu0 0.0
    %418 = vmatpush1.msra.mxu0 0.0
    %419 = vmatprep.subr.mxu0 0.0
    %420 = vmatpush1.msra.mxu0 0.0
    %421 = vmatprep.subr.mxu0 0.0
    %422 = vmatpush1.msra.mxu0 0.0
    %423 = vmatprep.subr.mxu0 0.0
    %424 = vmatpush1.msra.mxu0 0.0
    %425 = vmatprep.subr.mxu0 0.0
    %426 = vmatpush1.msra.mxu0 0.0
    %427 = vmatprep.subr.mxu0 0.0
    %428 = vmatpush1.msra.mxu0 0.0
    %429 = vmatprep.subr.mxu0 0.0
    %430 = vmatpush1.msra.mxu0 0.0
    %431 = vmatprep.subr.mxu0 0.0
    %432 = vmatpush1.msra.mxu0 0.0
    %433 = vmatprep.subr.mxu0 0.0
    %434 = vmatpush1.msra.mxu0 0.0
    %435 = vmatprep.subr.mxu0 0.0
    %436 = vmatpush1.msra.mxu0 0.0
    %437 = vmatprep.subr.mxu0 0.0
    %438 = vmatpush1.msra.mxu0 0.0
    %439 = vmatprep.subr.mxu0 0.0
    %440 = vmatpush1.msra.mxu0 0.0
    %441 = vmatprep.subr.mxu0 0.0
    %442 = vmatpush1.msra.mxu0 0.0
    %443 = vmatprep.subr.mxu0 0.0
    %444 = vmatpush1.msra.mxu0 0.0
    %445 = vmatprep.subr.mxu0 0.0
    %446 = vmatpush1.msra.mxu0 0.0
    %447 = vmatprep.subr.mxu0 0.0
    %448 = vmatpush1.msra.mxu0 0.0
    %449 = vmatprep.subr.mxu0 0.0
    %450 = vmatpush1.msra.mxu0 0.0
    %451 = vmatprep.subr.mxu0 0.0
    %452 = vmatpush1.msra.mxu0 0.0
    %453 = vmatprep.mubr.f32.mxu0 0.0
    %454 = vmatmul.mubr.f32.gmra.mrb[0].mxu0 %v280
    %v455 = vpop.f32.mrb[0].mxu0
    %v456 = vadd.f32 %v384, %v455
    %v457 = vpop.f32.mrb[0].mxu0
    %458 = vmatprep.mubr.f32.mxu0 0.0
    %459 = vmatmul.mubr.f32.gmra.mrb[0].mxu0 %v283
    %v460 = vpop.f32.mrb[0].mxu0
    %v461 = vadd.f32 %v384, %v460
    %v462 = vpop.f32.mrb[0].mxu0
    %463 = vmatprep.mubr.f32.mxu0 0.0
    %464 = vmatmul.mubr.f32.gmra.mrb[0].mxu0 %v286
    %v465 = vpop.f32.mrb[0].mxu0
    %v466 = vadd.f32 %v384, %v465
    %v467 = vpop.f32.mrb[0].mxu0
    %468 = vdwg.mxu0
    %v469 = vld [vmem:[%s7] sm:$0xff]
    %v470 = vld [vmem:[%s7 + $0x8] sm:$0xff]
    %v471 = vld [vmem:[%s7 + $0x10] sm:$0xff]
    %v472 = vld [vmem:[%s7 + $0x18] sm:$0xff]
    %v473 = vld [vmem:[%s7 + $0x20] sm:$0xff]
    %v474 = vld [vmem:[%s7 + $0x28] sm:$0xff]
    %v475 = vld [vmem:[%s7 + $0x30] sm:$0x7]
    %v476 = vld [vmem:[#allocation15] sm:$0x1]
    %v478 = vlaneseq
    %v479 = vshrl.u32 %v478, 7
    %v480 = vsub.s32 0, %v479
    %v481 = vrot.slane %v476, %v480
    %v484 = vsel %vm288, %v475, 0
    %486 = vmatprep.subr.mxu0 0.0
    %487 = vmatpush1.msra.mxu0 %v469
    %488 = vmatprep.subr.mxu0 0.0
    %489 = vmatpush1.msra.mxu0 %v470
    %490 = vmatprep.subr.mxu0 0.0
    %491 = vmatpush1.msra.mxu0 %v471
    %492 = vmatprep.subr.mxu0 0.0
    %493 = vmatpush1.msra.mxu0 %v472
    %494 = vmatprep.subr.mxu0 0.0
    %495 = vmatpush1.msra.mxu0 %v473
    %496 = vmatprep.subr.mxu0 0.0
    %497 = vmatpush1.msra.mxu0 %v474
    %498 = vmatprep.subr.mxu0 0.0
    %499 = vmatpush1.msra.mxu0 %v484
    %500 = vmatprep.subr.mxu0 0.0
    %501 = vmatpush1.msra.mxu0 0.0
    %502 = vmatprep.subr.mxu0 0.0
    %503 = vmatpush1.msra.mxu0 0.0
    %504 = vmatprep.subr.mxu0 0.0
    %505 = vmatpush1.msra.mxu0 0.0
    %506 = vmatprep.subr.mxu0 0.0
    %507 = vmatpush1.msra.mxu0 0.0
    %508 = vmatprep.subr.mxu0 0.0
    %509 = vmatpush1.msra.mxu0 0.0
    %510 = vmatprep.subr.mxu0 0.0
    %511 = vmatpush1.msra.mxu0 0.0
    %512 = vmatprep.subr.mxu0 0.0
    %513 = vmatpush1.msra.mxu0 0.0
    %514 = vmatprep.subr.mxu0 0.0
    %515 = vmatpush1.msra.mxu0 0.0
    %516 = vmatprep.subr.mxu0 0.0
    %517 = vmatpush1.msra.mxu0 0.0
    %518 = vmatprep.subr.mxu0 0.0
    %519 = vmatpush1.msra.mxu0 0.0
    %520 = vmatprep.subr.mxu0 0.0
    %521 = vmatpush1.msra.mxu0 0.0
    %522 = vmatprep.subr.mxu0 0.0
    %523 = vmatpush1.msra.mxu0 0.0
    %524 = vmatprep.subr.mxu0 0.0
    %525 = vmatpush1.msra.mxu0 0.0
    %526 = vmatprep.subr.mxu0 0.0
    %527 = vmatpush1.msra.mxu0 0.0
    %528 = vmatprep.subr.mxu0 0.0
    %529 = vmatpush1.msra.mxu0 0.0
    %530 = vmatprep.subr.mxu0 0.0
    %531 = vmatpush1.msra.mxu0 0.0
    %532 = vmatprep.subr.mxu0 0.0
    %533 = vmatpush1.msra.mxu0 0.0
    %534 = vmatprep.subr.mxu0 0.0
    %535 = vmatpush1.msra.mxu0 0.0
    %536 = vmatprep.subr.mxu0 0.0
    %537 = vmatpush1.msra.mxu0 0.0
    %538 = vmatprep.subr.mxu0 0.0
    %539 = vmatpush1.msra.mxu0 0.0
    %540 = vmatprep.subr.mxu0 0.0
    %541 = vmatpush1.msra.mxu0 0.0
    %542 = vmatprep.subr.mxu0 0.0
    %543 = vmatpush1.msra.mxu0 0.0
    %544 = vmatprep.subr.mxu0 0.0
    %545 = vmatpush1.msra.mxu0 0.0
    %546 = vmatprep.subr.mxu0 0.0
    %547 = vmatpush1.msra.mxu0 0.0
    %548 = vmatprep.subr.mxu0 0.0
    %549 = vmatpush1.msra.mxu0 0.0
    %550 = vmatprep.mubr.f32.mxu0 0.0
    %551 = vmatmul.mubr.f32.gmra.mrb[0].mxu0 %v280
    %v552 = vpop.f32.mrb[0].mxu0
    %v553 = vadd.f32 %v481, %v552
    %v554 = vpop.f32.mrb[0].mxu0
    %555 = vmatprep.mubr.f32.mxu0 0.0
    %556 = vmatmul.mubr.f32.gmra.mrb[0].mxu0 %v283
    %v557 = vpop.f32.mrb[0].mxu0
    %v558 = vadd.f32 %v481, %v557
    %v559 = vpop.f32.mrb[0].mxu0
    %560 = vmatprep.mubr.f32.mxu0 0.0
    %561 = vmatmul.mubr.f32.gmra.mrb[0].mxu0 %v286
    %v562 = vpop.f32.mrb[0].mxu0
    %v563 = vadd.f32 %v481, %v562
    %v564 = vpop.f32.mrb[0].mxu0
    %565 = vdwg.mxu0
    %v566 = vld [vmem:[#allocation7] sm:$0xff]
    %v567 = vld [vmem:[#allocation7 + $0x8] sm:$0xff]
    %v568 = vld [vmem:[#allocation7 + $0x10] sm:$0xf]
    %v569 = vld [vmem:[#allocation9] sm:$0x1]
    %v571 = vlaneseq
    %v572 = vshrl.u32 %v571, 7
    %v573 = vsub.s32 0, %v572
    %v574 = vrot.slane %v569, %v573
    %v576 = vmul.f32 %v359, %v574
    %v577 = vmul.f32 %v364, %v574
    %v578 = vmul.f32 %v369, %v574
    %v579 = vmul.f32 %v576, 0.24253562
    %v580 = vmul.f32 %v577, 0.24253562
    %v581 = vmul.f32 %v578, 0.24253562
    %v583 = vsel %vm278, %v579, 0
    %v586 = vsel %vm278, %v580, 0
    %v589 = vsel %vm278, %v581, 0
    %v592 = vsel %vm278, %v456, 0
    %v595 = vsel %vm278, %v461, 0
    %v598 = vsel %vm278, %v466, 0
    %600 = vmatprep.subr.mxu0 0.0
    %601 = vmatpush1.xpose.msra.mxu0 %v592
    %602 = vmatprep.subr.mxu0 0.0
    %603 = vmatpush1.xpose.msra.mxu0 %v595
    %604 = vmatprep.subr.mxu0 0.0
    %605 = vmatpush1.xpose.msra.mxu0 %v598
    %606 = vmatprep.subr.mxu0 0.0
    %607 = vmatpush1.xpose.msra.mxu0 0.0
    %608 = vmatprep.subr.mxu0 0.0
    %609 = vmatpush1.xpose.msra.mxu0 0.0
    %610 = vmatprep.subr.mxu0 0.0
    %611 = vmatpush1.xpose.msra.mxu0 0.0
    %612 = vmatprep.subr.mxu0 0.0
    %613 = vmatpush1.xpose.msra.mxu0 0.0
    %614 = vmatprep.subr.mxu0 0.0
    %615 = vmatpush1.xpose.msra.mxu0 0.0
    %616 = vmatprep.subr.mxu0 0.0
    %617 = vmatpush1.xpose.msra.mxu0 0.0
    %618 = vmatprep.subr.mxu0 0.0
    %619 = vmatpush1.xpose.msra.mxu0 0.0
    %620 = vmatprep.subr.mxu0 0.0
    %621 = vmatpush1.xpose.msra.mxu0 0.0
    %622 = vmatprep.subr.mxu0 0.0
    %623 = vmatpush1.xpose.msra.mxu0 0.0
    %624 = vmatprep.subr.mxu0 0.0
    %625 = vmatpush1.xpose.msra.mxu0 0.0
    %626 = vmatprep.subr.mxu0 0.0
    %627 = vmatpush1.xpose.msra.mxu0 0.0
    %628 = vmatprep.subr.mxu0 0.0
    %629 = vmatpush1.xpose.msra.mxu0 0.0
    %630 = vmatprep.subr.mxu0 0.0
    %631 = vmatpush1.xpose.msra.mxu0 0.0
    %632 = vmatprep.subr.mxu0 0.0
    %633 = vmatpush1.xpose.msra.mxu0 0.0
    %634 = vmatprep.subr.mxu0 0.0
    %635 = vmatpush1.xpose.msra.mxu0 0.0
    %636 = vmatprep.subr.mxu0 0.0
    %637 = vmatpush1.xpose.msra.mxu0 0.0
    %638 = vmatprep.subr.mxu0 0.0
    %639 = vmatpush1.xpose.msra.mxu0 0.0
    %640 = vmatprep.subr.mxu0 0.0
    %641 = vmatpush1.xpose.msra.mxu0 0.0
    %642 = vmatprep.subr.mxu0 0.0
    %643 = vmatpush1.xpose.msra.mxu0 0.0
    %644 = vmatprep.subr.mxu0 0.0
    %645 = vmatpush1.xpose.msra.mxu0 0.0
    %646 = vmatprep.subr.mxu0 0.0
    %647 = vmatpush1.xpose.msra.mxu0 0.0
    %648 = vmatprep.subr.mxu0 0.0
    %649 = vmatpush1.xpose.msra.mxu0 0.0
    %650 = vmatprep.subr.mxu0 0.0
    %651 = vmatpush1.xpose.msra.mxu0 0.0
    %652 = vmatprep.subr.mxu0 0.0
    %653 = vmatpush1.xpose.msra.mxu0 0.0
    %654 = vmatprep.subr.mxu0 0.0
    %655 = vmatpush1.xpose.msra.mxu0 0.0
    %656 = vmatprep.subr.mxu0 0.0
    %657 = vmatpush1.xpose.msra.mxu0 0.0
    %658 = vmatprep.subr.mxu0 0.0
    %659 = vmatpush1.xpose.msra.mxu0 0.0
    %660 = vmatprep.subr.mxu0 0.0
    %661 = vmatpush1.xpose.msra.mxu0 0.0
    %662 = vmatprep.subr.mxu0 0.0
    %663 = vmatpush1.xpose.msra.mxu0 0.0
    %664 = vmatprep.mubr.f32.mxu0 0.0
    %665 = vmatmul.mubr.f32.gmra.mrb[0].mxu0 %v583
    %v666 = vpop.f32.mrb[0].mxu0
    %v667 = vadd.f32 %v566, %v666
    %v668 = vpop.f32.mrb[0].mxu0
    %669 = vmatprep.mubr.f32.mxu0 0.0
    %670 = vmatmul.mubr.f32.gmra.mrb[0].mxu0 %v586
    %v671 = vpop.f32.mrb[0].mxu0
    %v672 = vadd.f32 %v567, %v671
    %v673 = vpop.f32.mrb[0].mxu0
    %674 = vmatprep.mubr.f32.mxu0 0.0
    %675 = vmatmul.mubr.f32.gmra.mrb[0].mxu0 %v589
    %v676 = vpop.f32.mrb[0].mxu0
    %v677 = vadd.f32 %v568, %v676
    %v678 = vpop.f32.mrb[0].mxu0
    %679 = vdwg.mxu0
    %vm680 = vcmask 162816
    %v681 = vsel %vm680, %v667, -inf
    %682 = vmax.xlane.f32.xlu0 %v681
    %v683 = vpop.xlane.xlu0 %682
    %v684 = vsel %vm680, %v672, -inf
    %685 = vmax.xlane.f32.xlu0 %v684
    %v686 = vpop.xlane.xlu0 %685
    %vm687 = vcmask 158720
    %v688 = vsel %vm687, %v677, -inf
    %689 = vmax.xlane.f32.xlu0 %v688
    %v690 = vpop.xlane.xlu0 %689
    %v691 = vsub.f32 %v667, %v683
    %v692 = vsub.f32 %v672, %v686
    %v693 = vsub.f32 %v677, %v690
    %v694 = vmul.f32 %v691, 1.442695
    %v695 = vpow.pop %v694
    %v696 = vmul.f32 %v692, 1.442695
    %v697 = vpow.pop %v696
    %v698 = vmul.f32 %v693, 1.442695
    %v699 = vpow.pop %v698
    %v700 = vsel %vm680, %v695, 0.0
    %701 = vadd.xlane.f32.xlu0 %v700
    %v702 = vpop.xlane.xlu0 %701
    %v703 = vsel %vm680, %v697, 0.0
    %704 = vadd.xlane.f32.xlu0 %v703
    %v705 = vpop.xlane.xlu0 %704
    %v706 = vsel %vm687, %v699, 0.0
    %707 = vadd.xlane.f32.xlu0 %v706
    %v708 = vpop.xlane.xlu0 %707
    %v709 = vrcp.pop %v702
    %v710 = vrcp.pop %v705
    %v711 = vrcp.pop %v708
    %v712 = vmul.f32 %v695, %v709
    %v713 = vmul.f32 %v697, %v710
    %v714 = vmul.f32 %v699, %v711
    %v716 = vsel %vm680, %v712, 0
    %v719 = vsel %vm680, %v713, 0
    %v722 = vsel %vm680, %v714, 0
    %vm724 = vcmask 1043456
    %v726 = vsel %vm724, %v563, 0
    %728 = vmatprep.subr.mxu0 0.0
    %729 = vmatpush1.msra.mxu0 %v553
    %730 = vmatprep.subr.mxu0 0.0
    %731 = vmatpush1.msra.mxu0 %v558
    %732 = vmatprep.subr.mxu0 0.0
    %733 = vmatpush1.msra.mxu0 %v726
    %734 = vmatprep.subr.mxu0 0.0
    %735 = vmatpush1.msra.mxu0 0.0
    %736 = vmatprep.subr.mxu0 0.0
    %737 = vmatpush1.msra.mxu0 0.0
    %738 = vmatprep.subr.mxu0 0.0
    %739 = vmatpush1.msra.mxu0 0.0
    %740 = vmatprep.subr.mxu0 0.0
    %741 = vmatpush1.msra.mxu0 0.0
    %742 = vmatprep.subr.mxu0 0.0
    %743 = vmatpush1.msra.mxu0 0.0
    %744 = vmatprep.subr.mxu0 0.0
    %745 = vmatpush1.msra.mxu0 0.0
    %746 = vmatprep.subr.mxu0 0.0
    %747 = vmatpush1.msra.mxu0 0.0
    %748 = vmatprep.subr.mxu0 0.0
    %749 = vmatpush1.msra.mxu0 0.0
    %750 = vmatprep.subr.mxu0 0.0
    %751 = vmatpush1.msra.mxu0 0.0
    %752 = vmatprep.subr.mxu0 0.0
    %753 = vmatpush1.msra.mxu0 0.0
    %754 = vmatprep.subr.mxu0 0.0
    %755 = vmatpush1.msra.mxu0 0.0
    %756 = vmatprep.subr.mxu0 0.0
    %757 = vmatpush1.msra.mxu0 0.0
    %758 = vmatprep.subr.mxu0 0.0
    %759 = vmatpush1.msra.mxu0 0.0
    %760 = vmatprep.subr.mxu0 0.0
    %761 = vmatpush1.msra.mxu0 0.0
    %762 = vmatprep.subr.mxu0 0.0
    %763 = vmatpush1.msra.mxu0 0.0
    %764 = vmatprep.subr.mxu0 0.0
    %765 = vmatpush1.msra.mxu0 0.0
    %766 = vmatprep.subr.mxu0 0.0
    %767 = vmatpush1.msra.mxu0 0.0
    %768 = vmatprep.subr.mxu0 0.0
    %769 = vmatpush1.msra.mxu0 0.0
    %770 = vmatprep.subr.mxu0 0.0
    %771 = vmatpush1.msra.mxu0 0.0
    %772 = vmatprep.subr.mxu0 0.0
    %773 = vmatpush1.msra.mxu0 0.0
    %774 = vmatprep.subr.mxu0 0.0
    %775 = vmatpush1.msra.mxu0 0.0
    %776 = vmatprep.subr.mxu0 0.0
    %777 = vmatpush1.msra.mxu0 0.0
    %778 = vmatprep.subr.mxu0 0.0
    %779 = vmatpush1.msra.mxu0 0.0
    %780 = vmatprep.subr.mxu0 0.0
    %781 = vmatpush1.msra.mxu0 0.0
    %782 = vmatprep.subr.mxu0 0.0
    %783 = vmatpush1.msra.mxu0 0.0
    %784 = vmatprep.subr.mxu0 0.0
    %785 = vmatpush1.msra.mxu0 0.0
    %786 = vmatprep.subr.mxu0 0.0
    %787 = vmatpush1.msra.mxu0 0.0
    %788 = vmatprep.subr.mxu0 0.0
    %789 = vmatpush1.msra.mxu0 0.0
    %790 = vmatprep.subr.mxu0 0.0
    %791 = vmatpush1.msra.mxu0 0.0
    %792 = vmatprep.mubr.f32.mxu0 0.0
    %793 = vmatmul.mubr.f32.gmra.mrb[0].mxu0 %v716
    %v794 = vpop.f32.mrb[0].mxu0
    %v795 = vadd.f32 0.0, %v794
    %v796 = vpop.f32.mrb[0].mxu0
    %797 = vmatprep.mubr.f32.mxu0 0.0
    %798 = vmatmul.mubr.f32.gmra.mrb[0].mxu0 %v719
    %v799 = vpop.f32.mrb[0].mxu0
    %v800 = vadd.f32 0.0, %v799
    %v801 = vpop.f32.mrb[0].mxu0
    %802 = vmatprep.mubr.f32.mxu0 0.0
    %803 = vmatmul.mubr.f32.gmra.mrb[0].mxu0 %v722
    %v804 = vpop.f32.mrb[0].mxu0
    %v805 = vadd.f32 0.0, %v804
    %v806 = vpop.f32.mrb[0].mxu0
    %807 = vdwg.mxu0
    %v808 = vmul.f32 %v795, %v574
    %v809 = vmul.f32 %v800, %v574
    %v810 = vmul.f32 %v805, %v574
    %v811 = vadd.f32 %v808, 0.0
    %v812 = vadd.f32 %v809, 0.0
    %v813 = vadd.f32 %v810, 0.0
    %s814 = scalar_lea.vmem [#allocation9], 1
    %v815 = vld [vmem:[%s814] sm:$0x1]
    %v817 = vlaneseq
    %v818 = vshrl.u32 %v817, 7
    %v819 = vsub.s32 0, %v818
    %v820 = vrot.slane %v815, %v819
    %v822 = vmul.f32 %v359, %v820
    %v823 = vmul.f32 %v364, %v820
    %v824 = vmul.f32 %v369, %v820
    %v825 = vmul.f32 %v822, 0.24253562
    %v826 = vmul.f32 %v823, 0.24253562
    %v827 = vmul.f32 %v824, 0.24253562
    %v829 = vsel %vm278, %v825, 0
    %v832 = vsel %vm278, %v826, 0
    %v835 = vsel %vm278, %v827, 0
    %837 = vmatprep.subr.mxu0 0.0
    %838 = vmatpush1.xpose.msra.mxu0 %v592
    %839 = vmatprep.subr.mxu0 0.0
    %840 = vmatpush1.xpose.msra.mxu0 %v595
    %841 = vmatprep.subr.mxu0 0.0
    %842 = vmatpush1.xpose.msra.mxu0 %v598
    %843 = vmatprep.subr.mxu0 0.0
    %844 = vmatpush1.xpose.msra.mxu0 0.0
    %845 = vmatprep.subr.mxu0 0.0
    %846 = vmatpush1.xpose.msra.mxu0 0.0
    %847 = vmatprep.subr.mxu0 0.0
    %848 = vmatpush1.xpose.msra.mxu0 0.0
    %849 = vmatprep.subr.mxu0 0.0
    %850 = vmatpush1.xpose.msra.mxu0 0.0
    %851 = vmatprep.subr.mxu0 0.0
    %852 = vmatpush1.xpose.msra.mxu0 0.0
    %853 = vmatprep.subr.mxu0 0.0
    %854 = vmatpush1.xpose.msra.mxu0 0.0
    %855 = vmatprep.subr.mxu0 0.0
    %856 = vmatpush1.xpose.msra.mxu0 0.0
    %857 = vmatprep.subr.mxu0 0.0
    %858 = vmatpush1.xpose.msra.mxu0 0.0
    %859 = vmatprep.subr.mxu0 0.0
    %860 = vmatpush1.xpose.msra.mxu0 0.0
    %861 = vmatprep.subr.mxu0 0.0
    %862 = vmatpush1.xpose.msra.mxu0 0.0
    %863 = vmatprep.subr.mxu0 0.0
    %864 = vmatpush1.xpose.msra.mxu0 0.0
    %865 = vmatprep.subr.mxu0 0.0
    %866 = vmatpush1.xpose.msra.mxu0 0.0
    %867 = vmatprep.subr.mxu0 0.0
    %868 = vmatpush1.xpose.msra.mxu0 0.0
    %869 = vmatprep.subr.mxu0 0.0
    %870 = vmatpush1.xpose.msra.mxu0 0.0
    %871 = vmatprep.subr.mxu0 0.0
    %872 = vmatpush1.xpose.msra.mxu0 0.0
    %873 = vmatprep.subr.mxu0 0.0
    %874 = vmatpush1.xpose.msra.mxu0 0.0
    %875 = vmatprep.subr.mxu0 0.0
    %876 = vmatpush1.xpose.msra.mxu0 0.0
    %877 = vmatprep.subr.mxu0 0.0
    %878 = vmatpush1.xpose.msra.mxu0 0.0
    %879 = vmatprep.subr.mxu0 0.0
    %880 = vmatpush1.xpose.msra.mxu0 0.0
    %881 = vmatprep.subr.mxu0 0.0
    %882 = vmatpush1.xpose.msra.mxu0 0.0
    %883 = vmatprep.subr.mxu0 0.0
    %884 = vmatpush1.xpose.msra.mxu0 0.0
    %885 = vmatprep.subr.mxu0 0.0
    %886 = vmatpush1.xpose.msra.mxu0 0.0
    %887 = vmatprep.subr.mxu0 0.0
    %888 = vmatpush1.xpose.msra.mxu0 0.0
    %889 = vmatprep.subr.mxu0 0.0
    %890 = vmatpush1.xpose.msra.mxu0 0.0
    %891 = vmatprep.subr.mxu0 0.0
    %892 = vmatpush1.xpose.msra.mxu0 0.0
    %893 = vmatprep.subr.mxu0 0.0
    %894 = vmatpush1.xpose.msra.mxu0 0.0
    %895 = vmatprep.subr.mxu0 0.0
    %896 = vmatpush1.xpose.msra.mxu0 0.0
    %897 = vmatprep.subr.mxu0 0.0
    %898 = vmatpush1.xpose.msra.mxu0 0.0
    %899 = vmatprep.subr.mxu0 0.0
    %900 = vmatpush1.xpose.msra.mxu0 0.0
    %901 = vmatprep.mubr.f32.mxu0 0.0
    %902 = vmatmul.mubr.f32.gmra.mrb[0].mxu0 %v829
    %v903 = vpop.f32.mrb[0].mxu0
    %v904 = vadd.f32 %v566, %v903
    %v905 = vpop.f32.mrb[0].mxu0
    %906 = vmatprep.mubr.f32.mxu0 0.0
    %907 = vmatmul.mubr.f32.gmra.mrb[0].mxu0 %v832
    %v908 = vpop.f32.mrb[0].mxu0
    %v909 = vadd.f32 %v567, %v908
    %v910 = vpop.f32.mrb[0].mxu0
    %911 = vmatprep.mubr.f32.mxu0 0.0
    %912 = vmatmul.mubr.f32.gmra.mrb[0].mxu0 %v835
    %v913 = vpop.f32.mrb[0].mxu0
    %v914 = vadd.f32 %v568, %v913
    %v915 = vpop.f32.mrb[0].mxu0
    %916 = vdwg.mxu0
    %v917 = vsel %vm680, %v904, -inf
    %918 = vmax.xlane.f32.xlu0 %v917
    %v919 = vpop.xlane.xlu0 %918
    %v920 = vsel %vm680, %v909, -inf
    %921 = vmax.xlane.f32.xlu0 %v920
    %v922 = vpop.xlane.xlu0 %921
    %v923 = vsel %vm687, %v914, -inf
    %924 = vmax.xlane.f32.xlu0 %v923
    %v925 = vpop.xlane.xlu0 %924
    %v926 = vsub.f32 %v904, %v919
    %v927 = vsub.f32 %v909, %v922
    %v928 = vsub.f32 %v914, %v925
    %v929 = vmul.f32 %v926, 1.442695
    %v930 = vpow.pop %v929
    %v931 = vmul.f32 %v927, 1.442695
    %v932 = vpow.pop %v931
    %v933 = vmul.f32 %v928, 1.442695
    %v934 = vpow.pop %v933
    %v935 = vsel %vm680, %v930, 0.0
    %936 = vadd.xlane.f32.xlu0 %v935
    %v937 = vpop.xlane.xlu0 %936
    %v938 = vsel %vm680, %v932, 0.0
    %939 = vadd.xlane.f32.xlu0 %v938
    %v940 = vpop.xlane.xlu0 %939
    %v941 = vsel %vm687, %v934, 0.0
    %942 = vadd.xlane.f32.xlu0 %v941
    %v943 = vpop.xlane.xlu0 %942
    %v944 = vrcp.pop %v937
    %v945 = vrcp.pop %v940
    %v946 = vrcp.pop %v943
    %v947 = vmul.f32 %v930, %v944
    %v948 = vmul.f32 %v932, %v945
    %v949 = vmul.f32 %v934, %v946
    %v951 = vsel %vm680, %v947, 0
    %v954 = vsel %vm680, %v948, 0
    %v957 = vsel %vm680, %v949, 0
    %959 = vmatprep.subr.mxu0 0.0
    %960 = vmatpush1.msra.mxu0 %v553
    %961 = vmatprep.subr.mxu0 0.0
    %962 = vmatpush1.msra.mxu0 %v558
    %963 = vmatprep.subr.mxu0 0.0
    %964 = vmatpush1.msra.mxu0 %v726
    %965 = vmatprep.subr.mxu0 0.0
    %966 = vmatpush1.msra.mxu0 0.0
    %967 = vmatprep.subr.mxu0 0.0
    %968 = vmatpush1.msra.mxu0 0.0
    %969 = vmatprep.subr.mxu0 0.0
    %970 = vmatpush1.msra.mxu0 0.0
    %971 = vmatprep.subr.mxu0 0.0
    %972 = vmatpush1.msra.mxu0 0.0
    %973 = vmatprep.subr.mxu0 0.0
    %974 = vmatpush1.msra.mxu0 0.0
    %975 = vmatprep.subr.mxu0 0.0
    %976 = vmatpush1.msra.mxu0 0.0
    %977 = vmatprep.subr.mxu0 0.0
    %978 = vmatpush1.msra.mxu0 0.0
    %979 = vmatprep.subr.mxu0 0.0
    %980 = vmatpush1.msra.mxu0 0.0
    %981 = vmatprep.subr.mxu0 0.0
    %982 = vmatpush1.msra.mxu0 0.0
    %983 = vmatprep.subr.mxu0 0.0
    %984 = vmatpush1.msra.mxu0 0.0
    %985 = vmatprep.subr.mxu0 0.0
    %986 = vmatpush1.msra.mxu0 0.0
    %987 = vmatprep.subr.mxu0 0.0
    %988 = vmatpush1.msra.mxu0 0.0
    %989 = vmatprep.subr.mxu0 0.0
    %990 = vmatpush1.msra.mxu0 0.0
    %991 = vmatprep.subr.mxu0 0.0
    %992 = vmatpush1.msra.mxu0 0.0
    %993 = vmatprep.subr.mxu0 0.0
    %994 = vmatpush1.msra.mxu0 0.0
    %995 = vmatprep.subr.mxu0 0.0
    %996 = vmatpush1.msra.mxu0 0.0
    %997 = vmatprep.subr.mxu0 0.0
    %998 = vmatpush1.msra.mxu0 0.0
    %999 = vmatprep.subr.mxu0 0.0
    %1000 = vmatpush1.msra.mxu0 0.0
    %1001 = vmatprep.subr.mxu0 0.0
    %1002 = vmatpush1.msra.mxu0 0.0
    %1003 = vmatprep.subr.mxu0 0.0
    %1004 = vmatpush1.msra.mxu0 0.0
    %1005 = vmatprep.subr.mxu0 0.0
    %1006 = vmatpush1.msra.mxu0 0.0
    %1007 = vmatprep.subr.mxu0 0.0
    %1008 = vmatpush1.msra.mxu0 0.0
    %1009 = vmatprep.subr.mxu0 0.0
    %1010 = vmatpush1.msra.mxu0 0.0
    %1011 = vmatprep.subr.mxu0 0.0
    %1012 = vmatpush1.msra.mxu0 0.0
    %1013 = vmatprep.subr.mxu0 0.0
    %1014 = vmatpush1.msra.mxu0 0.0
    %1015 = vmatprep.subr.mxu0 0.0
    %1016 = vmatpush1.msra.mxu0 0.0
    %1017 = vmatprep.subr.mxu0 0.0
    %1018 = vmatpush1.msra.mxu0 0.0
    %1019 = vmatprep.subr.mxu0 0.0
    %1020 = vmatpush1.msra.mxu0 0.0
    %1021 = vmatprep.subr.mxu0 0.0
    %1022 = vmatpush1.msra.mxu0 0.0
    %1023 = vmatprep.mubr.f32.mxu0 0.0
    %1024 = vmatmul.mubr.f32.gmra.mrb[0].mxu0 %v951
    %v1025 = vpop.f32.mrb[0].mxu0
    %v1026 = vadd.f32 0.0, %v1025
    %v1027 = vpop.f32.mrb[0].mxu0
    %1028 = vmatprep.mubr.f32.mxu0 0.0
    %1029 = vmatmul.mubr.f32.gmra.mrb[0].mxu0 %v954
    %v1030 = vpop.f32.mrb[0].mxu0
    %v1031 = vadd.f32 0.0, %v1030
    %v1032 = vpop.f32.mrb[0].mxu0
    %1033 = vmatprep.mubr.f32.mxu0 0.0
    %1034 = vmatmul.mubr.f32.gmra.mrb[0].mxu0 %v957
    %v1035 = vpop.f32.mrb[0].mxu0
    %v1036 = vadd.f32 0.0, %v1035
    %v1037 = vpop.f32.mrb[0].mxu0
    %1038 = vdwg.mxu0
    %v1039 = vmul.f32 %v1026, %v820
    %v1040 = vmul.f32 %v1031, %v820
    %v1041 = vmul.f32 %v1036, %v820
    %v1042 = vadd.f32 %v811, %v1039
    %v1043 = vadd.f32 %v812, %v1040
    %v1044 = vadd.f32 %v813, %v1041
    %s1045 = scalar_lea.vmem [#allocation9], 2
    %v1046 = vld [vmem:[%s1045] sm:$0x1]
    %v1048 = vlaneseq
    %v1049 = vshrl.u32 %v1048, 7
    %v1050 = vsub.s32 0, %v1049
    %v1051 = vrot.slane %v1046, %v1050
    %v1053 = vmul.f32 %v359, %v1051
    %v1054 = vmul.f32 %v364, %v1051
    %v1055 = vmul.f32 %v369, %v1051
    %v1056 = vmul.f32 %v1053, 0.24253562
    %v1057 = vmul.f32 %v1054, 0.24253562
    %v1058 = vmul.f32 %v1055, 0.24253562
    %v1060 = vsel %vm278, %v1056, 0
    %v1063 = vsel %vm278, %v1057, 0
    %v1066 = vsel %vm278, %v1058, 0
    %1068 = vmatprep.subr.mxu0 0.0
    %1069 = vmatpush1.xpose.msra.mxu0 %v592
    %1070 = vmatprep.subr.mxu0 0.0
    %1071 = vmatpush1.xpose.msra.mxu0 %v595
    %1072 = vmatprep.subr.mxu0 0.0
    %1073 = vmatpush1.xpose.msra.mxu0 %v598
    %1074 = vmatprep.subr.mxu0 0.0
    %1075 = vmatpush1.xpose.msra.mxu0 0.0
    %1076 = vmatprep.subr.mxu0 0.0
    %1077 = vmatpush1.xpose.msra.mxu0 0.0
    %1078 = vmatprep.subr.mxu0 0.0
    %1079 = vmatpush1.xpose.msra.mxu0 0.0
    %1080 = vmatprep.subr.mxu0 0.0
    %1081 = vmatpush1.xpose.msra.mxu0 0.0
    %1082 = vmatprep.subr.mxu0 0.0
    %1083 = vmatpush1.xpose.msra.mxu0 0.0
    %1084 = vmatprep.subr.mxu0 0.0
    %1085 = vmatpush1.xpose.msra.mxu0 0.0
    %1086 = vmatprep.subr.mxu0 0.0
    %1087 = vmatpush1.xpose.msra.mxu0 0.0
    %1088 = vmatprep.subr.mxu0 0.0
    %1089 = vmatpush1.xpose.msra.mxu0 0.0
    %1090 = vmatprep.subr.mxu0 0.0
    %1091 = vmatpush1.xpose.msra.mxu0 0.0
    %1092 = vmatprep.subr.mxu0 0.0
    %1093 = vmatpush1.xpose.msra.mxu0 0.0
    %1094 = vmatprep.subr.mxu0 0.0
    %1095 = vmatpush1.xpose.msra.mxu0 0.0
    %1096 = vmatprep.subr.mxu0 0.0
    %1097 = vmatpush1.xpose.msra.mxu0 0.0
    %1098 = vmatprep.subr.mxu0 0.0
    %1099 = vmatpush1.xpose.msra.mxu0 0.0
    %1100 = vmatprep.subr.mxu0 0.0
    %1101 = vmatpush1.xpose.msra.mxu0 0.0
    %1102 = vmatprep.subr.mxu0 0.0
    %1103 = vmatpush1.xpose.msra.mxu0 0.0
    %1104 = vmatprep.subr.mxu0 0.0
    %1105 = vmatpush1.xpose.msra.mxu0 0.0
    %1106 = vmatprep.subr.mxu0 0.0
    %1107 = vmatpush1.xpose.msra.mxu0 0.0
    %1108 = vmatprep.subr.mxu0 0.0
    %1109 = vmatpush1.xpose.msra.mxu0 0.0
    %1110 = vmatprep.subr.mxu0 0.0
    %1111 = vmatpush1.xpose.msra.mxu0 0.0
    %1112 = vmatprep.subr.mxu0 0.0
    %1113 = vmatpush1.xpose.msra.mxu0 0.0
    %1114 = vmatprep.subr.mxu0 0.0
    %1115 = vmatpush1.xpose.msra.mxu0 0.0
    %1116 = vmatprep.subr.mxu0 0.0
    %1117 = vmatpush1.xpose.msra.mxu0 0.0
    %1118 = vmatprep.subr.mxu0 0.0
    %1119 = vmatpush1.xpose.msra.mxu0 0.0
    %1120 = vmatprep.subr.mxu0 0.0
    %1121 = vmatpush1.xpose.msra.mxu0 0.0
    %1122 = vmatprep.subr.mxu0 0.0
    %1123 = vmatpush1.xpose.msra.mxu0 0.0
    %1124 = vmatprep.subr.mxu0 0.0
    %1125 = vmatpush1.xpose.msra.mxu0 0.0
    %1126 = vmatprep.subr.mxu0 0.0
    %1127 = vmatpush1.xpose.msra.mxu0 0.0
    %1128 = vmatprep.subr.mxu0 0.0
    %1129 = vmatpush1.xpose.msra.mxu0 0.0
    %1130 = vmatprep.subr.mxu0 0.0
    %1131 = vmatpush1.xpose.msra.mxu0 0.0
    %1132 = vmatprep.mubr.f32.mxu0 0.0
    %1133 = vmatmul.mubr.f32.gmra.mrb[0].mxu0 %v1060
    %v1134 = vpop.f32.mrb[0].mxu0
    %v1135 = vadd.f32 %v566, %v1134
    %v1136 = vpop.f32.mrb[0].mxu0
    %1137 = vmatprep.mubr.f32.mxu0 0.0
    %1138 = vmatmul.mubr.f32.gmra.mrb[0].mxu0 %v1063
    %v1139 = vpop.f32.mrb[0].mxu0
    %v1140 = vadd.f32 %v567, %v1139
    %v1141 = vpop.f32.mrb[0].mxu0
    %1142 = vmatprep.mubr.f32.mxu0 0.0
    %1143 = vmatmul.mubr.f32.gmra.mrb[0].mxu0 %v1066
    %v1144 = vpop.f32.mrb[0].mxu0
    %v1145 = vadd.f32 %v568, %v1144
    %v1146 = vpop.f32.mrb[0].mxu0
    %1147 = vdwg.mxu0
    %v1148 = vsel %vm680, %v1135, -inf
    %1149 = vmax.xlane.f32.xlu0 %v1148
    %v1150 = vpop.xlane.xlu0 %1149
    %v1151 = vsel %vm680, %v1140, -inf
    %1152 = vmax.xlane.f32.xlu0 %v1151
    %v1153 = vpop.xlane.xlu0 %1152
    %v1154 = vsel %vm687, %v1145, -inf
    %1155 = vmax.xlane.f32.xlu0 %v1154
    %v1156 = vpop.xlane.xlu0 %1155
    %v1157 = vsub.f32 %v1135, %v1150
    %v1158 = vsub.f32 %v1140, %v1153
    %v1159 = vsub.f32 %v1145, %v1156
    %v1160 = vmul.f32 %v1157, 1.442695
    %v1161 = vpow.pop %v1160
    %v1162 = vmul.f32 %v1158, 1.442695
    %v1163 = vpow.pop %v1162
    %v1164 = vmul.f32 %v1159, 1.442695
    %v1165 = vpow.pop %v1164
    %v1166 = vsel %vm680, %v1161, 0.0
    %1167 = vadd.xlane.f32.xlu0 %v1166
    %v1168 = vpop.xlane.xlu0 %1167
    %v1169 = vsel %vm680, %v1163, 0.0
    %1170 = vadd.xlane.f32.xlu0 %v1169
    %v1171 = vpop.xlane.xlu0 %1170
    %v1172 = vsel %vm687, %v1165, 0.0
    %1173 = vadd.xlane.f32.xlu0 %v1172
    %v1174 = vpop.xlane.xlu0 %1173
    %v1175 = vrcp.pop %v1168
    %v1176 = vrcp.pop %v1171
    %v1177 = vrcp.pop %v1174
    %v1178 = vmul.f32 %v1161, %v1175
    %v1179 = vmul.f32 %v1163, %v1176
    %v1180 = vmul.f32 %v1165, %v1177
    %v1182 = vsel %vm680, %v1178, 0
    %v1185 = vsel %vm680, %v1179, 0
    %v1188 = vsel %vm680, %v1180, 0
    %1190 = vmatprep.subr.mxu0 0.0
    %1191 = vmatpush1.msra.mxu0 %v553
    %1192 = vmatprep.subr.mxu0 0.0
    %1193 = vmatpush1.msra.mxu0 %v558
    %1194 = vmatprep.subr.mxu0 0.0
    %1195 = vmatpush1.msra.mxu0 %v726
    %1196 = vmatprep.subr.mxu0 0.0
    %1197 = vmatpush1.msra.mxu0 0.0
    %1198 = vmatprep.subr.mxu0 0.0
    %1199 = vmatpush1.msra.mxu0 0.0
    %1200 = vmatprep.subr.mxu0 0.0
    %1201 = vmatpush1.msra.mxu0 0.0
    %1202 = vmatprep.subr.mxu0 0.0
    %1203 = vmatpush1.msra.mxu0 0.0
    %1204 = vmatprep.subr.mxu0 0.0
    %1205 = vmatpush1.msra.mxu0 0.0
    %1206 = vmatprep.subr.mxu0 0.0
    %1207 = vmatpush1.msra.mxu0 0.0
    %1208 = vmatprep.subr.mxu0 0.0
    %1209 = vmatpush1.msra.mxu0 0.0
    %1210 = vmatprep.subr.mxu0 0.0
    %1211 = vmatpush1.msra.mxu0 0.0
    %1212 = vmatprep.subr.mxu0 0.0
    %1213 = vmatpush1.msra.mxu0 0.0
    %1214 = vmatprep.subr.mxu0 0.0
    %1215 = vmatpush1.msra.mxu0 0.0
    %1216 = vmatprep.subr.mxu0 0.0
    %1217 = vmatpush1.msra.mxu0 0.0
    %1218 = vmatprep.subr.mxu0 0.0
    %1219 = vmatpush1.msra.mxu0 0.0
    %1220 = vmatprep.subr.mxu0 0.0
    %1221 = vmatpush1.msra.mxu0 0.0
    %1222 = vmatprep.subr.mxu0 0.0
    %1223 = vmatpush1.msra.mxu0 0.0
    %1224 = vmatprep.subr.mxu0 0.0
    %1225 = vmatpush1.msra.mxu0 0.0
    %1226 = vmatprep.subr.mxu0 0.0
    %1227 = vmatpush1.msra.mxu0 0.0
    %1228 = vmatprep.subr.mxu0 0.0
    %1229 = vmatpush1.msra.mxu0 0.0
    %1230 = vmatprep.subr.mxu0 0.0
    %1231 = vmatpush1.msra.mxu0 0.0
    %1232 = vmatprep.subr.mxu0 0.0
    %1233 = vmatpush1.msra.mxu0 0.0
    %1234 = vmatprep.subr.mxu0 0.0
    %1235 = vmatpush1.msra.mxu0 0.0
    %1236 = vmatprep.subr.mxu0 0.0
    %1237 = vmatpush1.msra.mxu0 0.0
    %1238 = vmatprep.subr.mxu0 0.0
    %1239 = vmatpush1.msra.mxu0 0.0
    %1240 = vmatprep.subr.mxu0 0.0
    %1241 = vmatpush1.msra.mxu0 0.0
    %1242 = vmatprep.subr.mxu0 0.0
    %1243 = vmatpush1.msra.mxu0 0.0
    %1244 = vmatprep.subr.mxu0 0.0
    %1245 = vmatpush1.msra.mxu0 0.0
    %1246 = vmatprep.subr.mxu0 0.0
    %1247 = vmatpush1.msra.mxu0 0.0
    %1248 = vmatprep.subr.mxu0 0.0
    %1249 = vmatpush1.msra.mxu0 0.0
    %1250 = vmatprep.subr.mxu0 0.0
    %1251 = vmatpush1.msra.mxu0 0.0
    %1252 = vmatprep.subr.mxu0 0.0
    %1253 = vmatpush1.msra.mxu0 0.0
    %1254 = vmatprep.mubr.f32.mxu0 0.0
    %1255 = vmatmul.mubr.f32.gmra.mrb[0].mxu0 %v1182
    %v1256 = vpop.f32.mrb[0].mxu0
    %v1257 = vadd.f32 0.0, %v1256
    %v1258 = vpop.f32.mrb[0].mxu0
    %1259 = vmatprep.mubr.f32.mxu0 0.0
    %1260 = vmatmul.mubr.f32.gmra.mrb[0].mxu0 %v1185
    %v1261 = vpop.f32.mrb[0].mxu0
    %v1262 = vadd.f32 0.0, %v1261
    %v1263 = vpop.f32.mrb[0].mxu0
    %1264 = vmatprep.mubr.f32.mxu0 0.0
    %1265 = vmatmul.mubr.f32.gmra.mrb[0].mxu0 %v1188
    %v1266 = vpop.f32.mrb[0].mxu0
    %v1267 = vadd.f32 0.0, %v1266
    %v1268 = vpop.f32.mrb[0].mxu0
    %1269 = vdwg.mxu0
    %v1270 = vmul.f32 %v1257, %v1051
    %v1271 = vmul.f32 %v1262, %v1051
    %v1272 = vmul.f32 %v1267, %v1051
    %v1273 = vadd.f32 %v1042, %v1270
    %v1274 = vadd.f32 %v1043, %v1271
    %v1275 = vadd.f32 %v1044, %v1272
    %v1276 = vld [vmem:[#allocation16] sm:$0xff]
    %v1277 = vld [vmem:[#allocation16 + $0x8] sm:$0xff]
    %v1278 = vld [vmem:[#allocation16 + $0x10] sm:$0xff]
    %v1279 = vld [vmem:[#allocation16 + $0x18] sm:$0xff]
    %v1280 = vld [vmem:[#allocation16 + $0x20] sm:$0xff]
    %v1281 = vld [vmem:[#allocation16 + $0x28] sm:$0xff]
    %v1282 = vld [vmem:[#allocation16 + $0x30] sm:$0x7]
    %v1283 = vld [vmem:[#allocation18] sm:$0x1]
    %v1285 = vlaneseq
    %v1286 = vshrl.u32 %v1285, 7
    %v1287 = vsub.s32 0, %v1286
    %v1288 = vrot.slane %v1283, %v1287
    %v1291 = vsel %vm278, %v1273, 0
    %v1294 = vsel %vm278, %v1274, 0
    %v1297 = vsel %vm278, %v1275, 0
    %v1300 = vsel %vm288, %v1282, 0
    %1302 = vmatprep.subr.mxu0 0.0
    %1303 = vmatpush1.msra.mxu0 %v1276
    %1304 = vmatprep.subr.mxu0 0.0
    %1305 = vmatpush1.msra.mxu0 %v1277
    %1306 = vmatprep.subr.mxu0 0.0
    %1307 = vmatpush1.msra.mxu0 %v1278
    %1308 = vmatprep.subr.mxu0 0.0
    %1309 = vmatpush1.msra.mxu0 %v1279
    %1310 = vmatprep.subr.mxu0 0.0
    %1311 = vmatpush1.msra.mxu0 %v1280
    %1312 = vmatprep.subr.mxu0 0.0
    %1313 = vmatpush1.msra.mxu0 %v1281
    %1314 = vmatprep.subr.mxu0 0.0
    %1315 = vmatpush1.msra.mxu0 %v1300
    %1316 = vmatprep.subr.mxu0 0.0
    %1317 = vmatpush1.msra.mxu0 0.0
    %1318 = vmatprep.subr.mxu0 0.0
    %1319 = vmatpush1.msra.mxu0 0.0
    %1320 = vmatprep.subr.mxu0 0.0
    %1321 = vmatpush1.msra.mxu0 0.0
    %1322 = vmatprep.subr.mxu0 0.0
    %1323 = vmatpush1.msra.mxu0 0.0
    %1324 = vmatprep.subr.mxu0 0.0
    %1325 = vmatpush1.msra.mxu0 0.0
    %1326 = vmatprep.subr.mxu0 0.0
    %1327 = vmatpush1.msra.mxu0 0.0
    %1328 = vmatprep.subr.mxu0 0.0
    %1329 = vmatpush1.msra.mxu0 0.0
    %1330 = vmatprep.subr.mxu0 0.0
    %1331 = vmatpush1.msra.mxu0 0.0
    %1332 = vmatprep.subr.mxu0 0.0
    %1333 = vmatpush1.msra.mxu0 0.0
    %1334 = vmatprep.subr.mxu0 0.0
    %1335 = vmatpush1.msra.mxu0 0.0
    %1336 = vmatprep.subr.mxu0 0.0
    %1337 = vmatpush1.msra.mxu0 0.0
    %1338 = vmatprep.subr.mxu0 0.0
    %1339 = vmatpush1.msra.mxu0 0.0
    %1340 = vmatprep.subr.mxu0 0.0
    %1341 = vmatpush1.msra.mxu0 0.0
    %1342 = vmatprep.subr.mxu0 0.0
    %1343 = vmatpush1.msra.mxu0 0.0
    %1344 = vmatprep.subr.mxu0 0.0
    %1345 = vmatpush1.msra.mxu0 0.0
    %1346 = vmatprep.subr.mxu0 0.0
    %1347 = vmatpush1.msra.mxu0 0.0
    %1348 = vmatprep.subr.mxu0 0.0
    %1349 = vmatpush1.msra.mxu0 0.0
    %1350 = vmatprep.subr.mxu0 0.0
    %1351 = vmatpush1.msra.mxu0 0.0
    %1352 = vmatprep.subr.mxu0 0.0
    %1353 = vmatpush1.msra.mxu0 0.0
    %1354 = vmatprep.subr.mxu0 0.0
    %1355 = vmatpush1.msra.mxu0 0.0
    %1356 = vmatprep.subr.mxu0 0.0
    %1357 = vmatpush1.msra.mxu0 0.0
    %1358 = vmatprep.subr.mxu0 0.0
    %1359 = vmatpush1.msra.mxu0 0.0
    %1360 = vmatprep.subr.mxu0 0.0
    %1361 = vmatpush1.msra.mxu0 0.0
    %1362 = vmatprep.subr.mxu0 0.0
    %1363 = vmatpush1.msra.mxu0 0.0
    %1364 = vmatprep.subr.mxu0 0.0
    %1365 = vmatpush1.msra.mxu0 0.0
    %1366 = vmatprep.mubr.f32.mxu0 0.0
    %1367 = vmatmul.mubr.f32.gmra.mrb[0].mxu0 %v1291
    %v1368 = vpop.f32.mrb[0].mxu0
    %v1369 = vadd.f32 %v1288, %v1368
    %v1370 = vpop.f32.mrb[0].mxu0
    %1371 = vmatprep.mubr.f32.mxu0 0.0
    %1372 = vmatmul.mubr.f32.gmra.mrb[0].mxu0 %v1294
    %v1373 = vpop.f32.mrb[0].mxu0
    %v1374 = vadd.f32 %v1288, %v1373
    %v1375 = vpop.f32.mrb[0].mxu0
    %1376 = vmatprep.mubr.f32.mxu0 0.0
    %1377 = vmatmul.mubr.f32.gmra.mrb[0].mxu0 %v1297
    %v1378 = vpop.f32.mrb[0].mxu0
    %v1379 = vadd.f32 %v1288, %v1378
    %v1380 = vpop.f32.mrb[0].mxu0
    %1381 = vdwg.mxu0
    %v1382 = vadd.f32 %v252, %v1369
    %v1383 = vadd.f32 %v253, %v1374
    %v1384 = vadd.f32 %v254, %v1379
    %v1385 = vsel %vm278, %v1382, 0.0
    %1386 = vadd.xlane.f32.xlu0 %v1385
    %v1387 = vpop.xlane.xlu0 %1386
    %v1388 = vsel %vm278, %v1383, 0.0
    %1389 = vadd.xlane.f32.xlu0 %v1388
    %v1390 = vpop.xlane.xlu0 %1389
    %vm1391 = vcmask 412672
    %v1392 = vsel %vm1391, %v1384, 0.0
    %1393 = vadd.xlane.f32.xlu0 %v1392
    %v1394 = vpop.xlane.xlu0 %1393
    %v1395 = vld [vmem:[#allocation10] sm:$0xff]
    %v1396 = vld [vmem:[#allocation10 + $0x8] sm:$0xff]
    %v1397 = vld [vmem:[#allocation10 + $0x10] sm:$0xf]
    %v1399 = vsel %vm680, %v1395, 0
    %v1402 = vsel %vm680, %v1396, 0
    %v1405 = vsel %vm680, %v1397, 0
    %v1408 = vsel %vm724, %v1394, 0
    %1410 = vmatprep.subr.mxu0 0.0
    %1411 = vmatpush1.msra.mxu0 %v1387
    %1412 = vmatprep.subr.mxu0 0.0
    %1413 = vmatpush1.msra.mxu0 %v1390
    %1414 = vmatprep.subr.mxu0 0.0
    %1415 = vmatpush1.msra.mxu0 %v1408
    %1416 = vmatprep.subr.mxu0 0.0
    %1417 = vmatpush1.msra.mxu0 0.0
    %1418 = vmatprep.subr.mxu0 0.0
    %1419 = vmatpush1.msra.mxu0 0.0
    %1420 = vmatprep.subr.mxu0 0.0
    %1421 = vmatpush1.msra.mxu0 0.0
    %1422 = vmatprep.subr.mxu0 0.0
    %1423 = vmatpush1.msra.mxu0 0.0
    %1424 = vmatprep.subr.mxu0 0.0
    %1425 = vmatpush1.msra.mxu0 0.0
    %1426 = vmatprep.subr.mxu0 0.0
    %1427 = vmatpush1.msra.mxu0 0.0
    %1428 = vmatprep.subr.mxu0 0.0
    %1429 = vmatpush1.msra.mxu0 0.0
    %1430 = vmatprep.subr.mxu0 0.0
    %1431 = vmatpush1.msra.mxu0 0.0
    %1432 = vmatprep.subr.mxu0 0.0
    %1433 = vmatpush1.msra.mxu0 0.0
    %1434 = vmatprep.subr.mxu0 0.0
    %1435 = vmatpush1.msra.mxu0 0.0
    %1436 = vmatprep.subr.mxu0 0.0
    %1437 = vmatpush1.msra.mxu0 0.0
    %1438 = vmatprep.subr.mxu0 0.0
    %1439 = vmatpush1.msra.mxu0 0.0
    %1440 = vmatprep.subr.mxu0 0.0
    %1441 = vmatpush1.msra.mxu0 0.0
    %1442 = vmatprep.subr.mxu0 0.0
    %1443 = vmatpush1.msra.mxu0 0.0
    %1444 = vmatprep.subr.mxu0 0.0
    %1445 = vmatpush1.msra.mxu0 0.0
    %1446 = vmatprep.subr.mxu0 0.0
    %1447 = vmatpush1.msra.mxu0 0.0
    %1448 = vmatprep.subr.mxu0 0.0
    %1449 = vmatpush1.msra.mxu0 0.0
    %1450 = vmatprep.subr.mxu0 0.0
    %1451 = vmatpush1.msra.mxu0 0.0
    %1452 = vmatprep.subr.mxu0 0.0
    %1453 = vmatpush1.msra.mxu0 0.0
    %1454 = vmatprep.subr.mxu0 0.0
    %1455 = vmatpush1.msra.mxu0 0.0
    %1456 = vmatprep.subr.mxu0 0.0
    %1457 = vmatpush1.msra.mxu0 0.0
    %1458 = vmatprep.subr.mxu0 0.0
    %1459 = vmatpush1.msra.mxu0 0.0
    %1460 = vmatprep.subr.mxu0 0.0
    %1461 = vmatpush1.msra.mxu0 0.0
    %1462 = vmatprep.subr.mxu0 0.0
    %1463 = vmatpush1.msra.mxu0 0.0
    %1464 = vmatprep.subr.mxu0 0.0
    %1465 = vmatpush1.msra.mxu0 0.0
    %1466 = vmatprep.subr.mxu0 0.0
    %1467 = vmatpush1.msra.mxu0 0.0
    %1468 = vmatprep.subr.mxu0 0.0
    %1469 = vmatpush1.msra.mxu0 0.0
    %1470 = vmatprep.subr.mxu0 0.0
    %1471 = vmatpush1.msra.mxu0 0.0
    %1472 = vmatprep.subr.mxu0 0.0
    %1473 = vmatpush1.msra.mxu0 0.0
    %1474 = vmatprep.mubr.f32.mxu0 0.0
    %1475 = vmatmul.mubr.f32.gmra.mrb[0].mxu0 %v1399
    %v1476 = vpop.f32.mrb[0].mxu0
    %v1477 = vadd.f32 0.0, %v1476
    %v1478 = vpop.f32.mrb[0].mxu0
    %1479 = vmatprep.mubr.f32.mxu0 0.0
    %1480 = vmatmul.mubr.f32.gmra.mrb[0].mxu0 %v1402
    %v1481 = vpop.f32.mrb[0].mxu0
    %v1482 = vadd.f32 0.0, %v1481
    %v1483 = vpop.f32.mrb[0].mxu0
    %1484 = vmatprep.mubr.f32.mxu0 0.0
    %1485 = vmatmul.mubr.f32.gmra.mrb[0].mxu0 %v1405
    %v1486 = vpop.f32.mrb[0].mxu0
    %v1487 = vadd.f32 0.0, %v1486
    %v1488 = vpop.f32.mrb[0].mxu0
    %1489 = vdwg.mxu0
    %1491 = vset.pattern.permute.xlu0 0
    %1492 = vperm.xlu0 %1491, %v1477
    %v1493 = vpop.permute.xlu0 %1492
    %1496 = vset.pattern.permute.xlu0 0
    %1497 = vperm.xlu0 %1496, %v1482
    %v1498 = vpop.permute.xlu0 %1497
    %1501 = vset.pattern.permute.xlu0 0
    %1502 = vperm.xlu0 %1501, %v1487
    %v1503 = vpop.permute.xlu0 %1502
    %v1505 = vsub.f32 %v1382, %v1493
    %v1506 = vsub.f32 %v1383, %v1498
    %v1507 = vsub.f32 %v1384, %v1503
    %v1508 = vmul.f32 %v1505, %v1505
    %v1509 = vmul.f32 %v1506, %v1506
    %v1510 = vmul.f32 %v1507, %v1507
    %v1511 = vsel %vm278, %v1508, 0.0
    %1512 = vadd.xlane.f32.xlu0 %v1511
    %v1513 = vpop.xlane.xlu0 %1512
    %v1514 = vsel %vm278, %v1509, 0.0
    %1515 = vadd.xlane.f32.xlu0 %v1514
    %v1516 = vpop.xlane.xlu0 %1515
    %v1517 = vsel %vm1391, %v1510, 0.0
    %1518 = vadd.xlane.f32.xlu0 %v1517
    %v1519 = vpop.xlane.xlu0 %1518
    %v1521 = vsel %vm724, %v1519, 0
    %1523 = vmatprep.subr.mxu0 0.0
    %1524 = vmatpush1.msra.mxu0 %v1513
    %1525 = vmatprep.subr.mxu0 0.0
    %1526 = vmatpush1.msra.mxu0 %v1516
    %1527 = vmatprep.subr.mxu0 0.0
    %1528 = vmatpush1.msra.mxu0 %v1521
    %1529 = vmatprep.subr.mxu0 0.0
    %1530 = vmatpush1.msra.mxu0 0.0
    %1531 = vmatprep.subr.mxu0 0.0
    %1532 = vmatpush1.msra.mxu0 0.0
    %1533 = vmatprep.subr.mxu0 0.0
    %1534 = vmatpush1.msra.mxu0 0.0
    %1535 = vmatprep.subr.mxu0 0.0
    %1536 = vmatpush1.msra.mxu0 0.0
    %1537 = vmatprep.subr.mxu0 0.0
    %1538 = vmatpush1.msra.mxu0 0.0
    %1539 = vmatprep.subr.mxu0 0.0
    %1540 = vmatpush1.msra.mxu0 0.0
    %1541 = vmatprep.subr.mxu0 0.0
    %1542 = vmatpush1.msra.mxu0 0.0
    %1543 = vmatprep.subr.mxu0 0.0
    %1544 = vmatpush1.msra.mxu0 0.0
    %1545 = vmatprep.subr.mxu0 0.0
    %1546 = vmatpush1.msra.mxu0 0.0
    %1547 = vmatprep.subr.mxu0 0.0
    %1548 = vmatpush1.msra.mxu0 0.0
    %1549 = vmatprep.subr.mxu0 0.0
    %1550 = vmatpush1.msra.mxu0 0.0
    %1551 = vmatprep.subr.mxu0 0.0
    %1552 = vmatpush1.msra.mxu0 0.0
    %1553 = vmatprep.subr.mxu0 0.0
    %1554 = vmatpush1.msra.mxu0 0.0
    %1555 = vmatprep.subr.mxu0 0.0
    %1556 = vmatpush1.msra.mxu0 0.0
    %1557 = vmatprep.subr.mxu0 0.0
    %1558 = vmatpush1.msra.mxu0 0.0
    %1559 = vmatprep.subr.mxu0 0.0
    %1560 = vmatpush1.msra.mxu0 0.0
    %1561 = vmatprep.subr.mxu0 0.0
    %1562 = vmatpush1.msra.mxu0 0.0
    %1563 = vmatprep.subr.mxu0 0.0
    %1564 = vmatpush1.msra.mxu0 0.0
    %1565 = vmatprep.subr.mxu0 0.0
    %1566 = vmatpush1.msra.mxu0 0.0
    %1567 = vmatprep.subr.mxu0 0.0
    %1568 = vmatpush1.msra.mxu0 0.0
    %1569 = vmatprep.subr.mxu0 0.0
    %1570 = vmatpush1.msra.mxu0 0.0
    %1571 = vmatprep.subr.mxu0 0.0
    %1572 = vmatpush1.msra.mxu0 0.0
    %1573 = vmatprep.subr.mxu0 0.0
    %1574 = vmatpush1.msra.mxu0 0.0
    %1575 = vmatprep.subr.mxu0 0.0
    %1576 = vmatpush1.msra.mxu0 0.0
    %1577 = vmatprep.subr.mxu0 0.0
    %1578 = vmatpush1.msra.mxu0 0.0
    %1579 = vmatprep.subr.mxu0 0.0
    %1580 = vmatpush1.msra.mxu0 0.0
    %1581 = vmatprep.subr.mxu0 0.0
    %1582 = vmatpush1.msra.mxu0 0.0
    %1583 = vmatprep.subr.mxu0 0.0
    %1584 = vmatpush1.msra.mxu0 0.0
    %1585 = vmatprep.subr.mxu0 0.0
    %1586 = vmatpush1.msra.mxu0 0.0
    %1587 = vmatprep.mubr.f32.mxu0 0.0
    %1588 = vmatmul.mubr.f32.gmra.mrb[0].mxu0 %v1399
    %v1589 = vpop.f32.mrb[0].mxu0
    %v1590 = vadd.f32 1e-05, %v1589
    %v1591 = vpop.f32.mrb[0].mxu0
    %1592 = vmatprep.mubr.f32.mxu0 0.0
    %1593 = vmatmul.mubr.f32.gmra.mrb[0].mxu0 %v1402
    %v1594 = vpop.f32.mrb[0].mxu0
    %v1595 = vadd.f32 1e-05, %v1594
    %v1596 = vpop.f32.mrb[0].mxu0
    %1597 = vmatprep.mubr.f32.mxu0 0.0
    %1598 = vmatmul.mubr.f32.gmra.mrb[0].mxu0 %v1405
    %v1599 = vpop.f32.mrb[0].mxu0
    %v1600 = vadd.f32 1e-05, %v1599
    %v1601 = vpop.f32.mrb[0].mxu0
    %1602 = vdwg.mxu0
    %v1603 = vrsqrt.pop %v1590
    %v1604 = vrsqrt.pop %v1595
    %v1605 = vrsqrt.pop %v1600
    %1607 = vset.pattern.permute.xlu0 0
    %1608 = vperm.xlu0 %1607, %v1603
    %v1609 = vpop.permute.xlu0 %1608
    %1612 = vset.pattern.permute.xlu0 0
    %1613 = vperm.xlu0 %1612, %v1604
    %v1614 = vpop.permute.xlu0 %1613
    %1617 = vset.pattern.permute.xlu0 0
    %1618 = vperm.xlu0 %1617, %v1605
    %v1619 = vpop.permute.xlu0 %1618
    %v1621 = vmul.f32 %v1505, %v1609
    %v1622 = vmul.f32 %v1506, %v1614
    %v1623 = vmul.f32 %v1507, %v1619
    %v1624 = vld [vmem:[#allocation19] sm:$0xff]
    %v1625 = vld [vmem:[#allocation19 + $0x8] sm:$0xff]
    %v1626 = vld [vmem:[#allocation19 + $0x10] sm:$0xf]
    %v1627 = vmul.f32 %v1621, %v1624
    %v1628 = vmul.f32 %v1622, %v1625
    %v1629 = vmul.f32 %v1623, %v1626
    %v1630 = vld [vmem:[#allocation21] sm:$0xff]
    %v1631 = vld [vmem:[#allocation21 + $0x8] sm:$0xff]
    %v1632 = vld [vmem:[#allocation21 + $0x10] sm:$0xf]
    %v1633 = vadd.f32 %v1627, %v1630
    %v1634 = vadd.f32 %v1628, %v1631
    %v1635 = vadd.f32 %v1629, %v1632
    %1636 = vst.msk [vmem:[#allocation2] sm:$0xff] %vm278, %v1633
    %1637 = vst.msk [vmem:[#allocation2 + $0x8] sm:$0xff] %vm278, %v1634
    %1638 = vst.msk [vmem:[#allocation2 + $0x10] sm:$0xf] %vm1391, %v1635
    %v1639 = vld [vmem:[#allocation2] sm:$0x1]
    %vm1640 = vcmask 409600
    %1641 = vst.msk [vmem:[#allocation3] sm:$0x1] %vm1640, %v1639
    %v1642 = vld [vmem:[#allocation2 + $0x1] sm:$0x1]
    %v1645 = vunpack.c.l.s4 1983009808
    %v1646 = vunpack.c.0.s8 %v1645
    %v1647 = vlaneseq
    %v1648 = vshrl.u32 %v1647, 7
    %v1649 = vsub.s32 %v1646, %v1648
    %v1650 = vrot.slane %v1642, %v1649
    %1651 = vrot.lane.b32.xlu0 %v1650, 51
    %v1652 = vpop.permute.xlu0 %1651
    %vm1654 = vcmask 827800
    %1655 = vst.msk [vmem:[#allocation3] sm:$0x1] %vm1654, %v1652
    %v1656 = vld [vmem:[#allocation2 + $0x2] sm:$0x1]
    %v1659 = vunpack.c.l.s4 1983009808
    %v1660 = vunpack.c.0.s8 %v1659
    %v1661 = vlaneseq
    %v1662 = vshrl.u32 %v1661, 7
    %v1663 = vsub.s32 %v1660, %v1662
    %v1664 = vrot.slane %v1656, %v1663
    %1665 = vrot.lane.b32.xlu0 %v1664, 102
    %v1666 = vpop.permute.xlu0 %1665
    %v1667 = vrot.slane %v1666, 6
    %vm1668 = vcmask 834560
    %v1669 = vsel %vm1668, %v1667, %v1666
    %vm1671 = vcmask 1041200
    %vm1672 = vcmask 198658
    %vm1673 = vmor %vm1672, %vm1671
    %1674 = vst.msk [vmem:[#allocation3] sm:$0x5] %vm1673, %v1669
    %v1675 = vld [vmem:[#allocation2 + $0x3] sm:$0x1]
    %v1678 = vunpack.c.l.s4 1983009808
    %v1679 = vunpack.c.0.s8 %v1678
    %v1680 = vlaneseq
    %v1681 = vshrl.u32 %v1680, 7
    %v1682 = vsub.s32 %v1679, %v1681
    %v1683 = vrot.slane %v1675, %v1682
    %1684 = vrot.lane.b32.xlu0 %v1683, 25
    %v1685 = vpop.permute.xlu0 %1684
    %vm1687 = vcmask 614600
    %1688 = vst.msk [vmem:[#allocation3 + $0x2] sm:$0x1] %vm1687, %v1685
    %v1689 = vld [vmem:[#allocation2 + $0x4] sm:$0x1]
    %v1692 = vunpack.c.l.s4 1983009808
    %v1693 = vunpack.c.0.s8 %v1692
    %v1694 = vlaneseq
    %v1695 = vshrl.u32 %v1694, 7
    %v1696 = vsub.s32 %v1693, %v1695
    %v1697 = vrot.slane %v1689, %v1696
    %1698 = vrot.lane.b32.xlu0 %v1697, 76
    %v1699 = vpop.permute.xlu0 %1698
    %vm1701 = vcmask 1032800
    %1702 = vst.msk [vmem:[#allocation3 + $0x2] sm:$0x1] %vm1701, %v1699
    %v1703 = vld [vmem:[#allocation2 + $0x5] sm:$0x1]
    %v1706 = vunpack.c.l.s4 1983009808
    %v1707 = vunpack.c.0.s8 %v1706
    %v1708 = vlaneseq
    %v1709 = vshrl.u32 %v1708, 7
    %v1710 = vsub.s32 %v1707, %v1709
    %v1711 = vrot.slane %v1703, %v1710
    %1712 = vrot.lane.b32.xlu0 %v1711, 127
    %v1713 = vpop.permute.xlu0 %1712
    %v1714 = vrot.slane %v1713, 6
    %vm1715 = vcmask 1039360
    %v1716 = vsel %vm1715, %v1714, %v1713
    %vm1718 = vcmask 1041400
    %vm1719 = vcmask 403458
    %vm1720 = vmor %vm1719, %vm1718
    %1721 = vst.msk [vmem:[#allocation3 + $0x2] sm:$0x5] %vm1720, %v1716
    %v1722 = vld [vmem:[#allocation2 + $0x6] sm:$0x1]
    %v1725 = vunpack.c.l.s4 1983009808
    %v1726 = vunpack.c.0.s8 %v1725
    %v1727 = vlaneseq
    %v1728 = vshrl.u32 %v1727, 7
    %v1729 = vsub.s32 %v1726, %v1728
    %v1730 = vrot.slane %v1722, %v1729
    %1731 = vrot.lane.b32.xlu0 %v1730, 50
    %v1732 = vpop.permute.xlu0 %1731
    %vm1734 = vcmask 819600
    %1735 = vst.msk [vmem:[#allocation3 + $0x4] sm:$0x1] %vm1734, %v1732
    %v1736 = vld [vmem:[#allocation2 + $0x7] sm:$0x1]
    %v1739 = vunpack.c.l.s4 1983009808
    %v1740 = vunpack.c.0.s8 %v1739
    %v1741 = vlaneseq
    %v1742 = vshrl.u32 %v1741, 7
    %v1743 = vsub.s32 %v1740, %v1742
    %v1744 = vrot.slane %v1736, %v1743
    %1745 = vrot.lane.b32.xlu0 %v1744, 101
    %v1746 = vpop.permute.xlu0 %1745
    %v1747 = vrot.slane %v1746, 6
    %vm1748 = vcmask 826368
    %v1749 = vsel %vm1748, %v1747, %v1746
    %vm1751 = vcmask 1041192
    %vm1752 = vcmask 190466
    %vm1753 = vmor %vm1752, %vm1751
    %1754 = vst.msk [vmem:[#allocation3 + $0x4] sm:$0x5] %vm1753, %v1749
    %v1755 = vld [vmem:[#allocation2 + $0x8] sm:$0x1]
    %v1758 = vunpack.c.l.s4 1983009808
    %v1759 = vunpack.c.0.s8 %v1758
    %v1760 = vlaneseq
    %v1761 = vshrl.u32 %v1760, 7
    %v1762 = vsub.s32 %v1759, %v1761
    %v1763 = vrot.slane %v1755, %v1762
    %1764 = vrot.lane.b32.xlu0 %v1763, 24
    %v1765 = vpop.permute.xlu0 %1764
    %vm1767 = vcmask 606400
    %1768 = vst.msk [vmem:[#allocation3 + $0x6] sm:$0x1] %vm1767, %v1765
    %v1769 = vld [vmem:[#allocation2 + $0x9] sm:$0x1]
    %v1772 = vunpack.c.l.s4 1983009808
    %v1773 = vunpack.c.0.s8 %v1772
    %v1774 = vlaneseq
    %v1775 = vshrl.u32 %v1774, 7
    %v1776 = vsub.s32 %v1773, %v1775
    %v1777 = vrot.slane %v1769, %v1776
    %1778 = vrot.lane.b32.xlu0 %v1777, 75
    %v1779 = vpop.permute.xlu0 %1778
    %vm1781 = vcmask 1024600
    %1782 = vst.msk [vmem:[#allocation3 + $0x6] sm:$0x1] %vm1781, %v1779
    %v1783 = vld [vmem:[#allocation2 + $0xa] sm:$0x1]
    %1784 = vst.msk [vmem:[#allocation3 + $0x1] sm:$0x1] %vm1640, %v1783
    %v1785 = vld [vmem:[#allocation2 + $0xb] sm:$0x1]
    %v1788 = vunpack.c.l.s4 1983009808
    %v1789 = vunpack.c.0.s8 %v1788
    %v1790 = vlaneseq
    %v1791 = vshrl.u32 %v1790, 7
    %v1792 = vsub.s32 %v1789, %v1791
    %v1793 = vrot.slane %v1785, %v1792
    %1794 = vrot.lane.b32.xlu0 %v1793, 51
    %v1795 = vpop.permute.xlu0 %1794
    %1797 = vst.msk [vmem:[#allocation3 + $0x1] sm:$0x1] %vm1654, %v1795
    %v1798 = vld [vmem:[#allocation2 + $0xc] sm:$0x1]
    %v1801 = vunpack.c.l.s4 1983009808
    %v1802 = vunpack.c.0.s8 %v1801
    %v1803 = vlaneseq
    %v1804 = vshrl.u32 %v1803, 7
    %v1805 = vsub.s32 %v1802, %v1804
    %v1806 = vrot.slane %v1798, %v1805
    %1807 = vrot.lane.b32.xlu0 %v1806, 102
    %v1808 = vpop.permute.xlu0 %1807
    %v1809 = vrot.slane %v1808, 6
    %v1810 = vsel %vm1668, %v1809, %v1808
    %1812 = vst.msk [vmem:[#allocation3 + $0x1] sm:$0x5] %vm1673, %v1810
    %v1813 = vld [vmem:[#allocation2 + $0xd] sm:$0x1]
    %v1816 = vunpack.c.l.s4 1983009808
    %v1817 = vunpack.c.0.s8 %v1816
    %v1818 = vlaneseq
    %v1819 = vshrl.u32 %v1818, 7
    %v1820 = vsub.s32 %v1817, %v1819
    %v1821 = vrot.slane %v1813, %v1820
    %1822 = vrot.lane.b32.xlu0 %v1821, 25
    %v1823 = vpop.permute.xlu0 %1822
    %1825 = vst.msk [vmem:[#allocation3 + $0x3] sm:$0x1] %vm1687, %v1823
    %v1826 = vld [vmem:[#allocation2 + $0xe] sm:$0x1]
    %v1829 = vunpack.c.l.s4 1983009808
    %v1830 = vunpack.c.0.s8 %v1829
    %v1831 = vlaneseq
    %v1832 = vshrl.u32 %v1831, 7
    %v1833 = vsub.s32 %v1830, %v1832
    %v1834 = vrot.slane %v1826, %v1833
    %1835 = vrot.lane.b32.xlu0 %v1834, 76
    %v1836 = vpop.permute.xlu0 %1835
    %1838 = vst.msk [vmem:[#allocation3 + $0x3] sm:$0x1] %vm1701, %v1836
    %v1839 = vld [vmem:[#allocation2 + $0xf] sm:$0x1]
    %v1842 = vunpack.c.l.s4 1983009808
    %v1843 = vunpack.c.0.s8 %v1842
    %v1844 = vlaneseq
    %v1845 = vshrl.u32 %v1844, 7
    %v1846 = vsub.s32 %v1843, %v1845
    %v1847 = vrot.slane %v1839, %v1846
    %1848 = vrot.lane.b32.xlu0 %v1847, 127
    %v1849 = vpop.permute.xlu0 %1848
    %v1850 = vrot.slane %v1849, 6
    %v1851 = vsel %vm1715, %v1850, %v1849
    %1853 = vst.msk [vmem:[#allocation3 + $0x3] sm:$0x5] %vm1720, %v1851
    %v1854 = vld [vmem:[#allocation2 + $0x10] sm:$0x1]
    %v1857 = vunpack.c.l.s4 1983009808
    %v1858 = vunpack.c.0.s8 %v1857
    %v1859 = vlaneseq
    %v1860 = vshrl.u32 %v1859, 7
    %v1861 = vsub.s32 %v1858, %v1860
    %v1862 = vrot.slane %v1854, %v1861
    %1863 = vrot.lane.b32.xlu0 %v1862, 50
    %v1864 = vpop.permute.xlu0 %1863
    %1866 = vst.msk [vmem:[#allocation3 + $0x5] sm:$0x1] %vm1734, %v1864
    %v1867 = vld [vmem:[#allocation2 + $0x11] sm:$0x1]
    %v1870 = vunpack.c.l.s4 1983009808
    %v1871 = vunpack.c.0.s8 %v1870
    %v1872 = vlaneseq
    %v1873 = vshrl.u32 %v1872, 7
    %v1874 = vsub.s32 %v1871, %v1873
    %v1875 = vrot.slane %v1867, %v1874
    %1876 = vrot.lane.b32.xlu0 %v1875, 101
    %v1877 = vpop.permute.xlu0 %1876
    %v1878 = vrot.slane %v1877, 6
    %v1879 = vsel %vm1748, %v1878, %v1877
    %1881 = vst.msk [vmem:[#allocation3 + $0x5] sm:$0x5] %vm1753, %v1879
    %v1882 = vld [vmem:[#allocation2 + $0x12] sm:$0x1]
    %v1885 = vunpack.c.l.s4 1983009808
    %v1886 = vunpack.c.0.s8 %v1885
    %v1887 = vlaneseq
    %v1888 = vshrl.u32 %v1887, 7
    %v1889 = vsub.s32 %v1886, %v1888
    %v1890 = vrot.slane %v1882, %v1889
    %1891 = vrot.lane.b32.xlu0 %v1890, 24
    %v1892 = vpop.permute.xlu0 %1891
    %1894 = vst.msk [vmem:[#allocation3 + $0x7] sm:$0x1] %vm1767, %v1892
    %v1895 = vld [vmem:[#allocation2 + $0x13] sm:$0x1]
    %v1898 = vunpack.c.l.s4 1983009808
    %v1899 = vunpack.c.0.s8 %v1898
    %v1900 = vlaneseq
    %v1901 = vshrl.u32 %v1900, 7
    %v1902 = vsub.s32 %v1899, %v1901
    %v1903 = vrot.slane %v1895, %v1902
    %1904 = vrot.lane.b32.xlu0 %v1903, 75
    %v1905 = vpop.permute.xlu0 %1904
    %1907 = vst.msk [vmem:[#allocation3 + $0x7] sm:$0x1] %vm1781, %v1905
    %v1908 = vld [vmem:[#allocation3] sm:$0xff]
    %v1909 = vld [vmem:[#allocation22] sm:$0xff]
    %v1910 = vld [vmem:[#allocation22 + $0x8] sm:$0xff]
    %v1911 = vld [vmem:[#allocation22 + $0x10] sm:$0xff]
    %v1912 = vld [vmem:[#allocation22 + $0x18] sm:$0xff]
    %v1913 = vld [vmem:[#allocation22 + $0x20] sm:$0xff]
    %v1914 = vld [vmem:[#allocation22 + $0x28] sm:$0xff]
    %v1915 = vld [vmem:[#allocation22 + $0x30] sm:$0xff]
    %v1916 = vld [vmem:[#allocation22 + $0x38] sm:$0xff]
    %v1917 = vld [vmem:[#allocation22 + $0x40] sm:$0xff]
    %v1918 = vld [vmem:[#allocation22 + $0x48] sm:$0xff]
    %v1919 = vld [vmem:[#allocation22 + $0x50] sm:$0xff]
    %v1920 = vld [vmem:[#allocation22 + $0x58] sm:$0xff]
    %v1921 = vld [vmem:[#allocation22 + $0x60] sm:$0xff]
    %v1922 = vld [vmem:[#allocation22 + $0x68] sm:$0xff]
    %v1923 = vld [vmem:[#allocation22 + $0x70] sm:$0xff]
    %v1924 = vld [vmem:[#allocation22 + $0x78] sm:$0xff]
    %v1925 = vld [vmem:[#allocation22 + $0x80] sm:$0xff]
    %v1926 = vld [vmem:[#allocation22 + $0x88] sm:$0xff]
    %v1927 = vld [vmem:[#allocation22 + $0x90] sm:$0xff]
    %v1928 = vld [vmem:[#allocation22 + $0x98] sm:$0xff]
    %v1929 = vld [vmem:[#allocation22 + $0xa0] sm:$0xff]
    %v1930 = vld [vmem:[#allocation22 + $0xa8] sm:$0xff]
    %v1931 = vld [vmem:[#allocation22 + $0xb0] sm:$0xff]
    %v1932 = vld [vmem:[#allocation22 + $0xb8] sm:$0xff]
    %v1933 = vld [vmem:[#allocation22 + $0xc0] sm:$0xff]
    %v1934 = vld [vmem:[#allocation22 + $0xc8] sm:$0xff]
    %v1935 = vld [vmem:[#allocation22 + $0xd0] sm:$0xff]
    %v1936 = vld [vmem:[#allocation22 + $0xd8] sm:$0xff]
    %v1937 = vld [vmem:[#allocation22 + $0xe0] sm:$0xff]
    %v1938 = vld [vmem:[#allocation22 + $0xe8] sm:$0xff]
    %v1939 = vld [vmem:[#allocation22 + $0xf0] sm:$0xff]
    %v1940 = vld [vmem:[#allocation22 + $0xf8] sm:$0xff]
    %v1941 = vld [vmem:[#allocation22 + $0x100] sm:$0xff]
    %v1942 = vld [vmem:[#allocation22 + $0x108] sm:$0xff]
    %v1943 = vld [vmem:[#allocation22 + $0x110] sm:$0xff]
    %v1944 = vld [vmem:[#allocation22 + $0x118] sm:$0xff]
    %v1945 = vld [vmem:[#allocation22 + $0x120] sm:$0xff]
    %v1946 = vld [vmem:[#allocation22 + $0x128] sm:$0xff]
    %v1947 = vld [vmem:[#allocation22 + $0x130] sm:$0xff]
    %v1948 = vld [vmem:[#allocation22 + $0x138] sm:$0xff]
    %v1949 = vld [vmem:[#allocation22 + $0x140] sm:$0xff]
    %v1950 = vld [vmem:[#allocation22 + $0x148] sm:$0xff]
    %v1951 = vld [vmem:[#allocation22 + $0x150] sm:$0xff]
    %v1952 = vld [vmem:[#allocation22 + $0x158] sm:$0xff]
    %v1953 = vld [vmem:[#allocation22 + $0x160] sm:$0xff]
    %v1954 = vld [vmem:[#allocation22 + $0x168] sm:$0xff]
    %v1955 = vld [vmem:[#allocation22 + $0x170] sm:$0xff]
    %v1956 = vld [vmem:[#allocation22 + $0x178] sm:$0xff]
    %v1957 = vld [vmem:[#allocation22 + $0x180] sm:$0xff]
    %v1958 = vld [vmem:[#allocation22 + $0x188] sm:$0xff]
    %v1959 = vld [vmem:[#allocation22 + $0x190] sm:$0xff]
    %v1960 = vld [vmem:[#allocation22 + $0x198] sm:$0xff]
    %v1961 = vld [vmem:[#allocation22 + $0x1a0] sm:$0xff]
    %v1962 = vld [vmem:[#allocation22 + $0x1a8] sm:$0xff]
    %v1963 = vld [vmem:[#allocation22 + $0x1b0] sm:$0xff]
    %v1964 = vld [vmem:[#allocation22 + $0x1b8] sm:$0xff]
    %v1965 = vld [vmem:[#allocation22 + $0x1c0] sm:$0xff]
    %v1966 = vld [vmem:[#allocation22 + $0x1c8] sm:$0xff]
    %v1967 = vld [vmem:[#allocation22 + $0x1d0] sm:$0xff]
    %v1968 = vld [vmem:[#allocation22 + $0x1d8] sm:$0xff]
    %v1969 = vld [vmem:[#allocation22 + $0x1e0] sm:$0xff]
    %v1970 = vld [vmem:[#allocation22 + $0x1e8] sm:$0xff]
    %v1971 = vld [vmem:[#allocation22 + $0x1f0] sm:$0xff]
    %v1972 = vld [vmem:[#allocation22 + $0x1f8] sm:$0xff]
    %v1973 = vld [vmem:[#allocation22 + $0x200] sm:$0xff]
    %v1974 = vld [vmem:[#allocation22 + $0x208] sm:$0xff]
    %v1975 = vld [vmem:[#allocation22 + $0x210] sm:$0xff]
    %v1976 = vld [vmem:[#allocation22 + $0x218] sm:$0xff]
    %v1977 = vld [vmem:[#allocation22 + $0x220] sm:$0xff]
    %v1978 = vld [vmem:[#allocation22 + $0x228] sm:$0xff]
    %v1979 = vld [vmem:[#allocation22 + $0x230] sm:$0xff]
    %v1980 = vld [vmem:[#allocation22 + $0x238] sm:$0xff]
    %v1981 = vld [vmem:[#allocation22 + $0x240] sm:$0xff]
    %v1982 = vld [vmem:[#allocation22 + $0x248] sm:$0xff]
    %v1983 = vld [vmem:[#allocation22 + $0x250] sm:$0xff]
    %v1984 = vld [vmem:[#allocation22 + $0x258] sm:$0xff]
    %v1985 = vld [vmem:[#allocation22 + $0x260] sm:$0xff]
    %v1986 = vld [vmem:[#allocation22 + $0x268] sm:$0xff]
    %v1987 = vld [vmem:[#allocation22 + $0x270] sm:$0xff]
    %v1988 = vld [vmem:[#allocation22 + $0x278] sm:$0xff]
    %v1989 = vld [vmem:[#allocation22 + $0x280] sm:$0xff]
    %v1990 = vld [vmem:[#allocation22 + $0x288] sm:$0xff]
    %v1991 = vld [vmem:[#allocation22 + $0x290] sm:$0xff]
    %v1992 = vld [vmem:[#allocation22 + $0x298] sm:$0xff]
    %v1993 = vld [vmem:[#allocation22 + $0x2a0] sm:$0xff]
    %v1994 = vld [vmem:[#allocation22 + $0x2a8] sm:$0xff]
    %v1995 = vld [vmem:[#allocation22 + $0x2b0] sm:$0xff]
    %v1996 = vld [vmem:[#allocation22 + $0x2b8] sm:$0xff]
    %v1997 = vld [vmem:[#allocation22 + $0x2c0] sm:$0xff]
    %v1998 = vld [vmem:[#allocation22 + $0x2c8] sm:$0xff]
    %v1999 = vld [vmem:[#allocation22 + $0x2d0] sm:$0xff]
    %v2000 = vld [vmem:[#allocation22 + $0x2d8] sm:$0xff]
    %v2001 = vld [vmem:[#allocation22 + $0x2e0] sm:$0xff]
    %v2002 = vld [vmem:[#allocation22 + $0x2e8] sm:$0xff]
    %v2003 = vld [vmem:[#allocation22 + $0x2f0] sm:$0xff]
    %v2004 = vld [vmem:[#allocation22 + $0x2f8] sm:$0xff]
    %v2005 = vld [vmem:[#allocation22 + $0x300] sm:$0xff]
    %v2006 = vld [vmem:[#allocation22 + $0x308] sm:$0xff]
    %v2007 = vld [vmem:[#allocation22 + $0x310] sm:$0xff]
    %v2008 = vld [vmem:[#allocation22 + $0x318] sm:$0xff]
    %v2009 = vld [vmem:[#allocation22 + $0x320] sm:$0xff]
    %v2010 = vld [vmem:[#allocation22 + $0x328] sm:$0xff]
    %v2011 = vld [vmem:[#allocation22 + $0x330] sm:$0xff]
    %v2012 = vld [vmem:[#allocation22 + $0x338] sm:$0xff]
    %v2013 = vld [vmem:[#allocation22 + $0x340] sm:$0xff]
    %v2014 = vld [vmem:[#allocation22 + $0x348] sm:$0xff]
    %v2015 = vld [vmem:[#allocation22 + $0x350] sm:$0xff]
    %v2016 = vld [vmem:[#allocation22 + $0x358] sm:$0xff]
    %v2017 = vld [vmem:[#allocation22 + $0x360] sm:$0xff]
    %v2018 = vld [vmem:[#allocation22 + $0x368] sm:$0xff]
    %v2019 = vld [vmem:[#allocation22 + $0x370] sm:$0xff]
    %v2020 = vld [vmem:[#allocation22 + $0x378] sm:$0xff]
    %v2021 = vld [vmem:[#allocation22 + $0x380] sm:$0xff]
    %v2022 = vld [vmem:[#allocation22 + $0x388] sm:$0xff]
    %v2023 = vld [vmem:[#allocation22 + $0x390] sm:$0xff]
    %v2024 = vld [vmem:[#allocation22 + $0x398] sm:$0xff]
    %v2025 = vld [vmem:[#allocation22 + $0x3a0] sm:$0xff]
    %v2026 = vld [vmem:[#allocation22 + $0x3a8] sm:$0xff]
    %v2027 = vld [vmem:[#allocation22 + $0x3b0] sm:$0xff]
    %v2028 = vld [vmem:[#allocation22 + $0x3b8] sm:$0xff]
    %v2029 = vld [vmem:[#allocation22 + $0x3c0] sm:$0xff]
    %v2030 = vld [vmem:[#allocation22 + $0x3c8] sm:$0xff]
    %v2031 = vld [vmem:[#allocation22 + $0x3d0] sm:$0xff]
    %v2032 = vld [vmem:[#allocation22 + $0x3d8] sm:$0xff]
    %v2033 = vld [vmem:[#allocation22 + $0x3e0] sm:$0xff]
    %v2034 = vld [vmem:[#allocation22 + $0x3e8] sm:$0xff]
    %v2035 = vld [vmem:[#allocation22 + $0x3f0] sm:$0xff]
    %v2036 = vld [vmem:[#allocation22 + $0x3f8] sm:$0xff]
    %v2037 = vld [vmem:[#allocation22 + $0x400] sm:$0xff]
    %v2038 = vld [vmem:[#allocation22 + $0x408] sm:$0xff]
    %v2039 = vld [vmem:[#allocation22 + $0x410] sm:$0xff]
    %v2040 = vld [vmem:[#allocation22 + $0x418] sm:$0xff]
    %v2041 = vld [vmem:[#allocation22 + $0x420] sm:$0xff]
    %v2042 = vld [vmem:[#allocation22 + $0x428] sm:$0xff]
    %v2043 = vld [vmem:[#allocation22 + $0x430] sm:$0xff]
    %v2044 = vld [vmem:[#allocation22 + $0x438] sm:$0xff]
    %v2045 = vld [vmem:[#allocation22 + $0x440] sm:$0xff]
    %v2046 = vld [vmem:[#allocation22 + $0x448] sm:$0xff]
    %v2047 = vld [vmem:[#allocation22 + $0x450] sm:$0xff]
    %v2048 = vld [vmem:[#allocation22 + $0x458] sm:$0xff]
    %v2049 = vld [vmem:[#allocation22 + $0x460] sm:$0xff]
    %v2050 = vld [vmem:[#allocation22 + $0x468] sm:$0xff]
    %v2051 = vld [vmem:[#allocation22 + $0x470] sm:$0xff]
    %v2052 = vld [vmem:[#allocation22 + $0x478] sm:$0xff]
    %v2053 = vld [vmem:[#allocation22 + $0x480] sm:$0xff]
    %v2054 = vld [vmem:[#allocation22 + $0x488] sm:$0xff]
    %v2055 = vld [vmem:[#allocation22 + $0x490] sm:$0xff]
    %v2056 = vld [vmem:[#allocation22 + $0x498] sm:$0xff]
    %v2057 = vld [vmem:[#allocation22 + $0x4a0] sm:$0xff]
    %v2058 = vld [vmem:[#allocation22 + $0x4a8] sm:$0xff]
    %v2059 = vld [vmem:[#allocation22 + $0x4b0] sm:$0xff]
    %v2060 = vld [vmem:[#allocation22 + $0x4b8] sm:$0xff]
    %v2061 = vld [vmem:[#allocation22 + $0x4c0] sm:$0xff]
    %v2062 = vld [vmem:[#allocation22 + $0x4c8] sm:$0xff]
    %v2063 = vld [vmem:[#allocation22 + $0x4d0] sm:$0xff]
    %v2064 = vld [vmem:[#allocation22 + $0x4d8] sm:$0xff]
    %v2065 = vld [vmem:[#allocation22 + $0x4e0] sm:$0xff]
    %v2066 = vld [vmem:[#allocation22 + $0x4e8] sm:$0xff]
    %v2067 = vld [vmem:[#allocation22 + $0x4f0] sm:$0xff]
    %v2068 = vld [vmem:[#allocation22 + $0x4f8] sm:$0xff]
    %v2069 = vld [vmem:[#allocation22 + $0x500] sm:$0xff]
    %v2070 = vld [vmem:[#allocation22 + $0x508] sm:$0xff]
    %v2071 = vld [vmem:[#allocation22 + $0x510] sm:$0xff]
    %v2072 = vld [vmem:[#allocation22 + $0x518] sm:$0xff]
    %v2073 = vld [vmem:[#allocation22 + $0x520] sm:$0xff]
    %v2074 = vld [vmem:[#allocation22 + $0x528] sm:$0xff]
    %v2075 = vld [vmem:[#allocation22 + $0x530] sm:$0xff]
    %v2076 = vld [vmem:[#allocation22 + $0x538] sm:$0xff]
    %v2077 = vld [vmem:[#allocation22 + $0x540] sm:$0xff]
    %v2078 = vld [vmem:[#allocation22 + $0x548] sm:$0xff]
    %v2079 = vld [vmem:[#allocation22 + $0x550] sm:$0xff]
    %v2080 = vld [vmem:[#allocation22 + $0x558] sm:$0xff]
    %v2081 = vld [vmem:[#allocation22 + $0x560] sm:$0xff]
    %v2082 = vld [vmem:[#allocation22 + $0x568] sm:$0xff]
    %v2083 = vld [vmem:[#allocation22 + $0x570] sm:$0xff]
    %v2084 = vld [vmem:[#allocation22 + $0x578] sm:$0xff]
    %v2085 = vld [vmem:[#allocation22 + $0x580] sm:$0xff]
    %v2086 = vld [vmem:[#allocation22 + $0x588] sm:$0xff]
    %v2087 = vld [vmem:[#allocation22 + $0x590] sm:$0xff]
    %v2088 = vld [vmem:[#allocation22 + $0x598] sm:$0xff]
    %v2089 = vld [vmem:[#allocation22 + $0x5a0] sm:$0xff]
    %v2090 = vld [vmem:[#allocation22 + $0x5a8] sm:$0xff]
    %v2091 = vld [vmem:[#allocation22 + $0x5b0] sm:$0xff]
    %v2092 = vld [vmem:[#allocation22 + $0x5b8] sm:$0xff]
    %v2093 = vld [vmem:[#allocation22 + $0x5c0] sm:$0xff]
    %v2094 = vld [vmem:[#allocation22 + $0x5c8] sm:$0xff]
    %v2095 = vld [vmem:[#allocation22 + $0x5d0] sm:$0xff]
    %v2096 = vld [vmem:[#allocation22 + $0x5d8] sm:$0xff]
    %v2097 = vld [vmem:[#allocation22 + $0x5e0] sm:$0xff]
    %v2098 = vld [vmem:[#allocation22 + $0x5e8] sm:$0xff]
    %v2099 = vld [vmem:[#allocation22 + $0x5f0] sm:$0xff]
    %v2100 = vld [vmem:[#allocation22 + $0x5f8] sm:$0xff]
    %v2101 = vld [vmem:[#allocation22 + $0x600] sm:$0xff]
    %v2102 = vld [vmem:[#allocation22 + $0x608] sm:$0xff]
    %v2103 = vld [vmem:[#allocation22 + $0x610] sm:$0xff]
    %v2104 = vld [vmem:[#allocation22 + $0x618] sm:$0xff]
    %v2105 = vld [vmem:[#allocation22 + $0x620] sm:$0xff]
    %v2106 = vld [vmem:[#allocation22 + $0x628] sm:$0xff]
    %v2107 = vld [vmem:[#allocation22 + $0x630] sm:$0xff]
    %v2108 = vld [vmem:[#allocation22 + $0x638] sm:$0xff]
    %v2109 = vld [vmem:[#allocation22 + $0x640] sm:$0xff]
    %v2110 = vld [vmem:[#allocation22 + $0x648] sm:$0xff]
    %v2111 = vld [vmem:[#allocation22 + $0x650] sm:$0xff]
    %v2112 = vld [vmem:[#allocation22 + $0x658] sm:$0xff]
    %v2113 = vld [vmem:[#allocation22 + $0x660] sm:$0xff]
    %v2114 = vld [vmem:[#allocation22 + $0x668] sm:$0xff]
    %v2115 = vld [vmem:[#allocation22 + $0x670] sm:$0xff]
    %v2116 = vld [vmem:[#allocation22 + $0x678] sm:$0xff]
    %v2117 = vld [vmem:[#allocation22 + $0x680] sm:$0xff]
    %v2118 = vld [vmem:[#allocation22 + $0x688] sm:$0xff]
    %v2119 = vld [vmem:[#allocation22 + $0x690] sm:$0xff]
    %v2120 = vld [vmem:[#allocation22 + $0x698] sm:$0xff]
    %v2121 = vld [vmem:[#allocation22 + $0x6a0] sm:$0xff]
    %v2122 = vld [vmem:[#allocation22 + $0x6a8] sm:$0xff]
    %v2123 = vld [vmem:[#allocation22 + $0x6b0] sm:$0xff]
    %v2124 = vld [vmem:[#allocation22 + $0x6b8] sm:$0xff]
    %v2125 = vld [vmem:[#allocation22 + $0x6c0] sm:$0xff]
    %v2126 = vld [vmem:[#allocation22 + $0x6c8] sm:$0xff]
    %v2127 = vld [vmem:[#allocation22 + $0x6d0] sm:$0xff]
    %v2128 = vld [vmem:[#allocation22 + $0x6d8] sm:$0xff]
    %v2129 = vld [vmem:[#allocation22 + $0x6e0] sm:$0xff]
    %v2130 = vld [vmem:[#allocation22 + $0x6e8] sm:$0xff]
    %v2131 = vld [vmem:[#allocation22 + $0x6f0] sm:$0xff]
    %v2132 = vld [vmem:[#allocation22 + $0x6f8] sm:$0xff]
    %v2133 = vld [vmem:[#allocation22 + $0x700] sm:$0xff]
    %v2134 = vld [vmem:[#allocation22 + $0x708] sm:$0xff]
    %v2135 = vld [vmem:[#allocation22 + $0x710] sm:$0xff]
    %v2136 = vld [vmem:[#allocation22 + $0x718] sm:$0xff]
    %v2137 = vld [vmem:[#allocation22 + $0x720] sm:$0xff]
    %v2138 = vld [vmem:[#allocation22 + $0x728] sm:$0xff]
    %v2139 = vld [vmem:[#allocation22 + $0x730] sm:$0xff]
    %v2140 = vld [vmem:[#allocation22 + $0x738] sm:$0xff]
    %v2141 = vld [vmem:[#allocation22 + $0x740] sm:$0xff]
    %v2142 = vld [vmem:[#allocation22 + $0x748] sm:$0xff]
    %v2143 = vld [vmem:[#allocation22 + $0x750] sm:$0xff]
    %v2144 = vld [vmem:[#allocation22 + $0x758] sm:$0xff]
    %v2145 = vld [vmem:[#allocation22 + $0x760] sm:$0xff]
    %v2146 = vld [vmem:[#allocation22 + $0x768] sm:$0xff]
    %v2147 = vld [vmem:[#allocation22 + $0x770] sm:$0xff]
    %v2148 = vld [vmem:[#allocation22 + $0x778] sm:$0xff]
    %v2149 = vld [vmem:[#allocation22 + $0x780] sm:$0xff]
    %v2150 = vld [vmem:[#allocation22 + $0x788] sm:$0xff]
    %v2151 = vld [vmem:[#allocation22 + $0x790] sm:$0xff]
    %v2152 = vld [vmem:[#allocation22 + $0x798] sm:$0xff]
    %v2153 = vld [vmem:[#allocation22 + $0x7a0] sm:$0xff]
    %v2154 = vld [vmem:[#allocation22 + $0x7a8] sm:$0xff]
    %v2155 = vld [vmem:[#allocation22 + $0x7b0] sm:$0xff]
    %v2156 = vld [vmem:[#allocation22 + $0x7b8] sm:$0xff]
    %v2157 = vld [vmem:[#allocation22 + $0x7c0] sm:$0xff]
    %v2158 = vld [vmem:[#allocation22 + $0x7c8] sm:$0xff]
    %v2159 = vld [vmem:[#allocation22 + $0x7d0] sm:$0xff]
    %v2160 = vld [vmem:[#allocation22 + $0x7d8] sm:$0xff]
    %v2161 = vld [vmem:[#allocation22 + $0x7e0] sm:$0x3f]
    %v2162 = vld [vmem:[#allocation22 + $0x7e8] sm:$0x3f]
    %v2163 = vld [vmem:[#allocation22 + $0x7f0] sm:$0x3f]
    %v2164 = vld [vmem:[#allocation22 + $0x7f8] sm:$0x3f]
    %v2165 = vld [vmem:[#allocation24] sm:$0xf]
    %v2167 = vlaneseq
    %v2168 = vshrl.u32 %v2167, 7
    %v2169 = vsub.s32 0, %v2168
    %v2170 = vrot.slane %v2165, %v2169
    %v2171 = vlaneseq
    %v2172 = vshrl.u32 %v2171, 7
    %v2173 = vsub.s32 1, %v2172
    %v2174 = vrot.slane %v2165, %v2173
    %v2175 = vlaneseq
    %v2176 = vshrl.u32 %v2175, 7
    %v2177 = vsub.s32 2, %v2176
    %v2178 = vrot.slane %v2165, %v2177
    %v2179 = vlaneseq
    %v2180 = vshrl.u32 %v2179, 7
    %v2181 = vsub.s32 3, %v2180
    %v2182 = vrot.slane %v2165, %v2181
    %v2188 = vcombine.high %v1908, %v1908
    %v2190 = vunpack.c.l.s4 1983009808
    %v2191 = vunpack.c.0.s8 %v2190
    %v2192 = vlaneseq
    %v2193 = vshrl.u32 %v2192, 7
    %v2194 = vsub.s32 %v2191, %v2193
    %v2195 = vrot.slane %v1908, %v2194
    %v2197 = vunpack.c.l.s4 1983009808
    %v2198 = vunpack.c.0.s8 %v2197
    %v2199 = vlaneseq
    %v2200 = vshrl.u32 %v2199, 7
    %v2201 = vsub.s32 %v2198, %v2200
    %v2202 = vrot.slane %v2188, %v2201
    %v2203 = vcombine.high %v2195, %v2195
    %v2204 = vcombine.high %v2202, %v2202
    %vm2208 = vcmask 1031168
    %v2209 = vsel %vm2208, %v2204, 0
    %vm2211 = vcmask 1045504
    %v2213 = vsel %vm2211, %v2161, 0
    %v2216 = vsel %vm2211, %v2162, 0
    %v2219 = vsel %vm2211, %v2163, 0
    %v2222 = vsel %vm2211, %v2164, 0
    %2224 = vmatprep.subr.mxu0 %v1910
    %2225 = vmatpush1.msra.mxu0 %v1909
    %2226 = vmatprep.subr.mxu0 %v1914
    %2227 = vmatpush1.msra.mxu0 %v1913
    %2228 = vmatprep.subr.mxu0 %v1918
    %2229 = vmatpush1.msra.mxu0 %v1917
    %2230 = vmatprep.subr.mxu0 %v1922
    %2231 = vmatpush1.msra.mxu0 %v1921
    %2232 = vmatprep.subr.mxu0 %v1926
    %2233 = vmatpush1.msra.mxu0 %v1925
    %2234 = vmatprep.subr.mxu0 %v1930
    %2235 = vmatpush1.msra.mxu0 %v1929
    %2236 = vmatprep.subr.mxu0 %v1934
    %2237 = vmatpush1.msra.mxu0 %v1933
    %2238 = vmatprep.subr.mxu0 %v1938
    %2239 = vmatpush1.msra.mxu0 %v1937
    %2240 = vmatprep.subr.mxu0 %v1942
    %2241 = vmatpush1.msra.mxu0 %v1941
    %2242 = vmatprep.subr.mxu0 %v1946
    %2243 = vmatpush1.msra.mxu0 %v1945
    %2244 = vmatprep.subr.mxu0 %v1950
    %2245 = vmatpush1.msra.mxu0 %v1949
    %2246 = vmatprep.subr.mxu0 %v1954
    %2247 = vmatpush1.msra.mxu0 %v1953
    %2248 = vmatprep.subr.mxu0 %v1958
    %2249 = vmatpush1.msra.mxu0 %v1957
    %2250 = vmatprep.subr.mxu0 %v1962
    %2251 = vmatpush1.msra.mxu0 %v1961
    %2252 = vmatprep.subr.mxu0 %v1966
    %2253 = vmatpush1.msra.mxu0 %v1965
    %2254 = vmatprep.subr.mxu0 %v1970
    %2255 = vmatpush1.msra.mxu0 %v1969
    %2256 = vmatprep.subr.mxu0 %v1974
    %2257 = vmatpush1.msra.mxu0 %v1973
    %2258 = vmatprep.subr.mxu0 %v1978
    %2259 = vmatpush1.msra.mxu0 %v1977
    %2260 = vmatprep.subr.mxu0 %v1982
    %2261 = vmatpush1.msra.mxu0 %v1981
    %2262 = vmatprep.subr.mxu0 %v1986
    %2263 = vmatpush1.msra.mxu0 %v1985
    %2264 = vmatprep.subr.mxu0 %v1990
    %2265 = vmatpush1.msra.mxu0 %v1989
    %2266 = vmatprep.subr.mxu0 %v1994
    %2267 = vmatpush1.msra.mxu0 %v1993
    %2268 = vmatprep.subr.mxu0 %v1998
    %2269 = vmatpush1.msra.mxu0 %v1997
    %2270 = vmatprep.subr.mxu0 %v2002
    %2271 = vmatpush1.msra.mxu0 %v2001
    %2272 = vmatprep.subr.mxu0 %v2006
    %2273 = vmatpush1.msra.mxu0 %v2005
    %2274 = vmatprep.subr.mxu0 %v2010
    %2275 = vmatpush1.msra.mxu0 %v2009
    %2276 = vmatprep.subr.mxu0 %v2014
    %2277 = vmatpush1.msra.mxu0 %v2013
    %2278 = vmatprep.subr.mxu0 %v2018
    %2279 = vmatpush1.msra.mxu0 %v2017
    %2280 = vmatprep.subr.mxu0 %v2022
    %2281 = vmatpush1.msra.mxu0 %v2021
    %2282 = vmatprep.subr.mxu0 %v2026
    %2283 = vmatpush1.msra.mxu0 %v2025
    %2284 = vmatprep.subr.mxu0 %v2030
    %2285 = vmatpush1.msra.mxu0 %v2029
    %2286 = vmatprep.subr.mxu0 %v2034
    %2287 = vmatpush1.msra.mxu0 %v2033
    %2288 = vmatprep.mubr.f32.mxu0 %v2203
    %2289 = vmatmul.mubr.f32.gmra.mrb[0].mxu0 %v2195
    %v2290 = vpop.f32.mrb[0].mxu0
    %v2291 = vadd.f32 %v2170, %v2290
    %v2292 = vpop.f32.mrb[0].mxu0
    %v2293 = vadd.f32 %v2174, %v2292
    %2294 = vdwg.mxu0
    %2295 = vmatprep.subr.mxu0 %v2038
    %2296 = vmatpush1.msra.mxu0 %v2037
    %2297 = vmatprep.subr.mxu0 %v2042
    %2298 = vmatpush1.msra.mxu0 %v2041
    %2299 = vmatprep.subr.mxu0 %v2046
    %2300 = vmatpush1.msra.mxu0 %v2045
    %2301 = vmatprep.subr.mxu0 %v2050
    %2302 = vmatpush1.msra.mxu0 %v2049
    %2303 = vmatprep.subr.mxu0 %v2054
    %2304 = vmatpush1.msra.mxu0 %v2053
    %2305 = vmatprep.subr.mxu0 %v2058
    %2306 = vmatpush1.msra.mxu0 %v2057
    %2307 = vmatprep.subr.mxu0 %v2062
    %2308 = vmatpush1.msra.mxu0 %v2061
    %2309 = vmatprep.subr.mxu0 %v2066
    %2310 = vmatpush1.msra.mxu0 %v2065
    %2311 = vmatprep.subr.mxu0 %v2070
    %2312 = vmatpush1.msra.mxu0 %v2069
    %2313 = vmatprep.subr.mxu0 %v2074
    %2314 = vmatpush1.msra.mxu0 %v2073
    %2315 = vmatprep.subr.mxu0 %v2078
    %2316 = vmatpush1.msra.mxu0 %v2077
    %2317 = vmatprep.subr.mxu0 %v2082
    %2318 = vmatpush1.msra.mxu0 %v2081
    %2319 = vmatprep.subr.mxu0 %v2086
    %2320 = vmatpush1.msra.mxu0 %v2085
    %2321 = vmatprep.subr.mxu0 %v2090
    %2322 = vmatpush1.msra.mxu0 %v2089
    %2323 = vmatprep.subr.mxu0 %v2094
    %2324 = vmatpush1.msra.mxu0 %v2093
    %2325 = vmatprep.subr.mxu0 %v2098
    %2326 = vmatpush1.msra.mxu0 %v2097
    %2327 = vmatprep.subr.mxu0 %v2102
    %2328 = vmatpush1.msra.mxu0 %v2101
    %2329 = vmatprep.subr.mxu0 %v2106
    %2330 = vmatpush1.msra.mxu0 %v2105
    %2331 = vmatprep.subr.mxu0 %v2110
    %2332 = vmatpush1.msra.mxu0 %v2109
    %2333 = vmatprep.subr.mxu0 %v2114
    %2334 = vmatpush1.msra.mxu0 %v2113
    %2335 = vmatprep.subr.mxu0 %v2118
    %2336 = vmatpush1.msra.mxu0 %v2117
    %2337 = vmatprep.subr.mxu0 %v2122
    %2338 = vmatpush1.msra.mxu0 %v2121
    %2339 = vmatprep.subr.mxu0 %v2126
    %2340 = vmatpush1.msra.mxu0 %v2125
    %2341 = vmatprep.subr.mxu0 %v2130
    %2342 = vmatpush1.msra.mxu0 %v2129
    %2343 = vmatprep.subr.mxu0 %v2134
    %2344 = vmatpush1.msra.mxu0 %v2133
    %2345 = vmatprep.subr.mxu0 %v2138
    %2346 = vmatpush1.msra.mxu0 %v2137
    %2347 = vmatprep.subr.mxu0 %v2142
    %2348 = vmatpush1.msra.mxu0 %v2141
    %2349 = vmatprep.subr.mxu0 %v2146
    %2350 = vmatpush1.msra.mxu0 %v2145
    %2351 = vmatprep.subr.mxu0 %v2150
    %2352 = vmatpush1.msra.mxu0 %v2149
    %2353 = vmatprep.subr.mxu0 %v2154
    %2354 = vmatpush1.msra.mxu0 %v2153
    %2355 = vmatprep.subr.mxu0 %v2158
    %2356 = vmatpush1.msra.mxu0 %v2157
    %2357 = vmatprep.subr.mxu0 %v2216
    %2358 = vmatpush1.msra.mxu0 %v2213
    %2359 = vmatprep.mubr.f32.mxu0 %v2209
    %2360 = vmatmul.mubr.f32.gmra.mrb[0].mxu0 %v2202
    %v2361 = vpop.f32.mrb[0].mxu0
    %v2362 = vadd.f32 %v2291, %v2361
    %v2363 = vpop.f32.mrb[0].mxu0
    %v2364 = vadd.f32 %v2293, %v2363
    %2365 = vdwg.mxu0
    %2366 = vmatprep.subr.mxu0 %v1912
    %2367 = vmatpush1.msra.mxu0 %v1911
    %2368 = vmatprep.subr.mxu0 %v1916
    %2369 = vmatpush1.msra.mxu0 %v1915
    %2370 = vmatprep.subr.mxu0 %v1920
    %2371 = vmatpush1.msra.mxu0 %v1919
    %2372 = vmatprep.subr.mxu0 %v1924
    %2373 = vmatpush1.msra.mxu0 %v1923
    %2374 = vmatprep.subr.mxu0 %v1928
    %2375 = vmatpush1.msra.mxu0 %v1927
    %2376 = vmatprep.subr.mxu0 %v1932
    %2377 = vmatpush1.msra.mxu0 %v1931
    %2378 = vmatprep.subr.mxu0 %v1936
    %2379 = vmatpush1.msra.mxu0 %v1935
    %2380 = vmatprep.subr.mxu0 %v1940
    %2381 = vmatpush1.msra.mxu0 %v1939
    %2382 = vmatprep.subr.mxu0 %v1944
    %2383 = vmatpush1.msra.mxu0 %v1943
    %2384 = vmatprep.subr.mxu0 %v1948
    %2385 = vmatpush1.msra.mxu0 %v1947
    %2386 = vmatprep.subr.mxu0 %v1952
    %2387 = vmatpush1.msra.mxu0 %v1951
    %2388 = vmatprep.subr.mxu0 %v1956
    %2389 = vmatpush1.msra.mxu0 %v1955
    %2390 = vmatprep.subr.mxu0 %v1960
    %2391 = vmatpush1.msra.mxu0 %v1959
    %2392 = vmatprep.subr.mxu0 %v1964
    %2393 = vmatpush1.msra.mxu0 %v1963
    %2394 = vmatprep.subr.mxu0 %v1968
    %2395 = vmatpush1.msra.mxu0 %v1967
    %2396 = vmatprep.subr.mxu0 %v1972
    %2397 = vmatpush1.msra.mxu0 %v1971
    %2398 = vmatprep.subr.mxu0 %v1976
    %2399 = vmatpush1.msra.mxu0 %v1975
    %2400 = vmatprep.subr.mxu0 %v1980
    %2401 = vmatpush1.msra.mxu0 %v1979
    %2402 = vmatprep.subr.mxu0 %v1984
    %2403 = vmatpush1.msra.mxu0 %v1983
    %2404 = vmatprep.subr.mxu0 %v1988
    %2405 = vmatpush1.msra.mxu0 %v1987
    %2406 = vmatprep.subr.mxu0 %v1992
    %2407 = vmatpush1.msra.mxu0 %v1991
    %2408 = vmatprep.subr.mxu0 %v1996
    %2409 = vmatpush1.msra.mxu0 %v1995
    %2410 = vmatprep.subr.mxu0 %v2000
    %2411 = vmatpush1.msra.mxu0 %v1999
    %2412 = vmatprep.subr.mxu0 %v2004
    %2413 = vmatpush1.msra.mxu0 %v2003
    %2414 = vmatprep.subr.mxu0 %v2008
    %2415 = vmatpush1.msra.mxu0 %v2007
    %2416 = vmatprep.subr.mxu0 %v2012
    %2417 = vmatpush1.msra.mxu0 %v2011
    %2418 = vmatprep.subr.mxu0 %v2016
    %2419 = vmatpush1.msra.mxu0 %v2015
    %2420 = vmatprep.subr.mxu0 %v2020
    %2421 = vmatpush1.msra.mxu0 %v2019
    %2422 = vmatprep.subr.mxu0 %v2024
    %2423 = vmatpush1.msra.mxu0 %v2023
    %2424 = vmatprep.subr.mxu0 %v2028
    %2425 = vmatpush1.msra.mxu0 %v2027
    %2426 = vmatprep.subr.mxu0 %v2032
    %2427 = vmatpush1.msra.mxu0 %v2031
    %2428 = vmatprep.subr.mxu0 %v2036
    %2429 = vmatpush1.msra.mxu0 %v2035
    %2430 = vmatprep.mubr.f32.mxu0 %v2203
    %2431 = vmatmul.mubr.f32.gmra.mrb[0].mxu0 %v2195
    %v2432 = vpop.f32.mrb[0].mxu0
    %v2433 = vadd.f32 %v2178, %v2432
    %v2434 = vpop.f32.mrb[0].mxu0
    %v2435 = vadd.f32 %v2182, %v2434
    %2436 = vdwg.mxu0
    %2437 = vmatprep.subr.mxu0 %v2040
    %2438 = vmatpush1.msra.mxu0 %v2039
    %2439 = vmatprep.subr.mxu0 %v2044
    %2440 = vmatpush1.msra.mxu0 %v2043
    %2441 = vmatprep.subr.mxu0 %v2048
    %2442 = vmatpush1.msra.mxu0 %v2047
    %2443 = vmatprep.subr.mxu0 %v2052
    %2444 = vmatpush1.msra.mxu0 %v2051
    %2445 = vmatprep.subr.mxu0 %v2056
    %2446 = vmatpush1.msra.mxu0 %v2055
    %2447 = vmatprep.subr.mxu0 %v2060
    %2448 = vmatpush1.msra.mxu0 %v2059
    %2449 = vmatprep.subr.mxu0 %v2064
    %2450 = vmatpush1.msra.mxu0 %v2063
    %2451 = vmatprep.subr.mxu0 %v2068
    %2452 = vmatpush1.msra.mxu0 %v2067
    %2453 = vmatprep.subr.mxu0 %v2072
    %2454 = vmatpush1.msra.mxu0 %v2071
    %2455 = vmatprep.subr.mxu0 %v2076
    %2456 = vmatpush1.msra.mxu0 %v2075
    %2457 = vmatprep.subr.mxu0 %v2080
    %2458 = vmatpush1.msra.mxu0 %v2079
    %2459 = vmatprep.subr.mxu0 %v2084
    %2460 = vmatpush1.msra.mxu0 %v2083
    %2461 = vmatprep.subr.mxu0 %v2088
    %2462 = vmatpush1.msra.mxu0 %v2087
    %2463 = vmatprep.subr.mxu0 %v2092
    %2464 = vmatpush1.msra.mxu0 %v2091
    %2465 = vmatprep.subr.mxu0 %v2096
    %2466 = vmatpush1.msra.mxu0 %v2095
    %2467 = vmatprep.subr.mxu0 %v2100
    %2468 = vmatpush1.msra.mxu0 %v2099
    %2469 = vmatprep.subr.mxu0 %v2104
    %2470 = vmatpush1.msra.mxu0 %v2103
    %2471 = vmatprep.subr.mxu0 %v2108
    %2472 = vmatpush1.msra.mxu0 %v2107
    %2473 = vmatprep.subr.mxu0 %v2112
    %2474 = vmatpush1.msra.mxu0 %v2111
    %2475 = vmatprep.subr.mxu0 %v2116
    %2476 = vmatpush1.msra.mxu0 %v2115
    %2477 = vmatprep.subr.mxu0 %v2120
    %2478 = vmatpush1.msra.mxu0 %v2119
    %2479 = vmatprep.subr.mxu0 %v2124
    %2480 = vmatpush1.msra.mxu0 %v2123
    %2481 = vmatprep.subr.mxu0 %v2128
    %2482 = vmatpush1.msra.mxu0 %v2127
    %2483 = vmatprep.subr.mxu0 %v2132
    %2484 = vmatpush1.msra.mxu0 %v2131
    %2485 = vmatprep.subr.mxu0 %v2136
    %2486 = vmatpush1.msra.mxu0 %v2135
    %2487 = vmatprep.subr.mxu0 %v2140
    %2488 = vmatpush1.msra.mxu0 %v2139
    %2489 = vmatprep.subr.mxu0 %v2144
    %2490 = vmatpush1.msra.mxu0 %v2143
    %2491 = vmatprep.subr.mxu0 %v2148
    %2492 = vmatpush1.msra.mxu0 %v2147
    %2493 = vmatprep.subr.mxu0 %v2152
    %2494 = vmatpush1.msra.mxu0 %v2151
    %2495 = vmatprep.subr.mxu0 %v2156
    %2496 = vmatpush1.msra.mxu0 %v2155
    %2497 = vmatprep.subr.mxu0 %v2160
    %2498 = vmatpush1.msra.mxu0 %v2159
    %2499 = vmatprep.subr.mxu0 %v2222
    %2500 = vmatpush1.msra.mxu0 %v2219
    %2501 = vmatprep.mubr.f32.mxu0 %v2209
    %2502 = vmatmul.mubr.f32.gmra.mrb[0].mxu0 %v2202
    %v2503 = vpop.f32.mrb[0].mxu0
    %v2504 = vadd.f32 %v2433, %v2503
    %v2505 = vpop.f32.mrb[0].mxu0
    %v2506 = vadd.f32 %v2435, %v2505
    %2507 = vdwg.mxu0
    %v2509 = vadd.f32 %v2362, %v2195
    %v2510 = vadd.f32 %v2364, %v2203
    %v2511 = vadd.f32 %v2504, %v2202
    %v2512 = vadd.f32 %v2506, %v2204
    %vm2513 = vcmask 1041408
    %v2514 = vsel %vm2513, %v2509, 0.0
    %v2515 = vsel %vm2513, %v2510, 0.0
    %v2516 = vadd.f32 %v2514, %v2515
    %v2517 = vsel %vm2513, %v2511, 0.0
    %v2518 = vadd.f32 %v2516, %v2517
    %vm2519 = vcmask 1025024
    %v2520 = vsel %vm2519, %v2512, 0.0
    %v2521 = vadd.f32 %v2518, %v2520
    %2522 = vadd.xlane.f32.xlu0 %v2521
    %v2523 = vpop.xlane.xlu0 %2522
    %v2524 = vrcp.pop 510.0
    %v2525 = vmul.f32 %v2523, %v2524
    %v2526 = vsub.f32 %v2509, %v2525
    %v2527 = vsub.f32 %v2510, %v2525
    %v2528 = vsub.f32 %v2511, %v2525
    %v2529 = vsub.f32 %v2512, %v2525
    %v2530 = vmul.f32 %v2526, %v2526
    %v2531 = vmul.f32 %v2527, %v2527
    %v2532 = vmul.f32 %v2528, %v2528
    %v2533 = vmul.f32 %v2529, %v2529
    %v2534 = vsel %vm2513, %v2530, 0.0
    %v2535 = vsel %vm2513, %v2531, 0.0
    %v2536 = vadd.f32 %v2534, %v2535
    %v2537 = vsel %vm2513, %v2532, 0.0
    %v2538 = vadd.f32 %v2536, %v2537
    %v2539 = vsel %vm2519, %v2533, 0.0
    %v2540 = vadd.f32 %v2538, %v2539
    %2541 = vadd.xlane.f32.xlu0 %v2540
    %v2542 = vpop.xlane.xlu0 %2541
    %v2543 = vmul.f32 %v2542, %v2524
    %v2544 = vadd.f32 %v2543, 1e-05
    %v2545 = vrsqrt.pop %v2544
    %v2546 = vmul.f32 %v2526, %v2545
    %v2547 = vmul.f32 %v2527, %v2545
    %v2548 = vmul.f32 %v2528, %v2545
    %v2549 = vmul.f32 %v2529, %v2545
    %v2550 = vld [vmem:[#allocation25] sm:$0xf]
    %v2552 = vlaneseq
    %v2553 = vshrl.u32 %v2552, 7
    %v2554 = vsub.s32 0, %v2553
    %v2555 = vrot.slane %v2550, %v2554
    %v2556 = vlaneseq
    %v2557 = vshrl.u32 %v2556, 7
    %v2558 = vsub.s32 1, %v2557
    %v2559 = vrot.slane %v2550, %v2558
    %v2560 = vlaneseq
    %v2561 = vshrl.u32 %v2560, 7
    %v2562 = vsub.s32 2, %v2561
    %v2563 = vrot.slane %v2550, %v2562
    %v2564 = vlaneseq
    %v2565 = vshrl.u32 %v2564, 7
    %v2566 = vsub.s32 3, %v2565
    %v2567 = vrot.slane %v2550, %v2566
    %v2572 = vmul.f32 %v2546, %v2555
    %v2573 = vmul.f32 %v2547, %v2559
    %v2574 = vmul.f32 %v2548, %v2563
    %v2575 = vmul.f32 %v2549, %v2567
    %v2576 = vld [vmem:[#allocation27] sm:$0xf]
    %v2578 = vlaneseq
    %v2579 = vshrl.u32 %v2578, 7
    %v2580 = vsub.s32 0, %v2579
    %v2581 = vrot.slane %v2576, %v2580
    %v2582 = vlaneseq
    %v2583 = vshrl.u32 %v2582, 7
    %v2584 = vsub.s32 1, %v2583
    %v2585 = vrot.slane %v2576, %v2584
    %v2586 = vlaneseq
    %v2587 = vshrl.u32 %v2586, 7
    %v2588 = vsub.s32 2, %v2587
    %v2589 = vrot.slane %v2576, %v2588
    %v2590 = vlaneseq
    %v2591 = vshrl.u32 %v2590, 7
    %v2592 = vsub.s32 3, %v2591
    %v2593 = vrot.slane %v2576, %v2592
    %v2598 = vadd.f32 %v2572, %v2581
    %v2599 = vadd.f32 %v2573, %v2585
    %v2600 = vadd.f32 %v2574, %v2589
    %v2601 = vadd.f32 %v2575, %v2593
    %v2606 = vcombine.low %v2598, %v2599
    %v2607 = vcombine.low %v2600, %v2601
    %v2609 = vunpack.c.l.s4 1983009808
    %v2610 = vunpack.c.0.s8 %v2609
    %v2611 = vlaneseq
    %v2612 = vshrl.u32 %v2611, 7
    %v2613 = vsub.s32 %v2610, %v2612
    %v2614 = vrot.slane %v2606, %v2613
    %v2616 = vunpack.c.l.s4 1983009808
    %v2617 = vunpack.c.0.s8 %v2616
    %v2618 = vlaneseq
    %v2619 = vshrl.u32 %v2618, 7
    %v2620 = vsub.s32 %v2617, %v2619
    %v2621 = vrot.slane %v2607, %v2620
    %v2622 = vcombine.low %v2614, %v2621
    %vm2624 = vcmask 1043458
    %vm2625 = vmor %vm2624, %vm2513
    %vm2626 = vcmask 1045508
    %vm2627 = vmor %vm2626, %vm2625
    %vm2628 = vcmask 1031174
    %vm2629 = vmor %vm2628, %vm2627
    %2630 = vst.msk [vmem:[#allocation28] sm:$0xff] %vm2629, %v2622
    // Predicated region
    $region138: #{transformer_forward.1} parent=1 // pred_check
      _
    $region139: #{transformer_forward.1} parent=1 // pred_check_branch
      %2632 = sbr.rel (0) target = $region141
    $region140: #{transformer_forward.1} parent=1 // pred_region
      %s2634 = ssub.s32 128, 128
      %2635 = vsyncadd [#allocation6], %s2634
      %s2637 = sshll.u32 [#allocation28], 4
      %s2638 = int_to_ptr.vmem [resolvable:$true] %s2637
      %2640 = dma.vmem_to_hbm [thread:$0]  %s2638, 128, %s19, [#allocation6]
    $region141: #{transformer_forward.1} parent=1 // pred_fallthru
      _
    // Predicated region
    $region142: #{transformer_forward.1} parent=1 // pred_check
      _
    $region143: #{transformer_forward.1} parent=1 // pred_check_branch
      %2642 = sbr.rel (0) target = $region145
    $region144: #{transformer_forward.1} parent=1 // pred_region
      %2643 = dma.done [#allocation6], 128
    $region145: #{transformer_forward.1} parent=1 // pred_fallthru
      _
    %2644 = vsyncpa [#allocation5], 1
    %2645 = vsyncpa [#allocation8], 1
    %2646 = vsyncpa [#allocation11], 1
    %2647 = vsyncpa [#allocation14], 1
    %2648 = vsyncpa [#allocation17], 1
    %2649 = vsyncpa [#allocation20], 1
    %2650 = vsyncpa [#allocation23], 1
    %2651 = vsyncpa [#allocation26], 1
    %2652 = vsyncpa [#allocation6], 1

</llo_original>
